<compile_context>
chip_gen: v7x
topology: tpu7x:2x2x1
jax: 0.10.0
libtpu: 0.0.40
codegen_flags: <defaults>
</compile_context>

<pallas_src>
from typing import Dict, Tuple

import numpy as np

import jax
import jax.numpy as jnp
from jax.experimental import pallas as pl
from jax.experimental.pallas import tpu as pltpu


# ----------------------------------------------------------------------------
# Tunables.
# ----------------------------------------------------------------------------
_PALLAS_MIN_BYTES = 64 * 1024           # tensors smaller than this bypass Pallas
_TARGET_CHUNK_BYTES = 4 * 1024 * 1024   # aim for >= ~4 MiB per DMA chunk
_MAX_DMA_CHUNKS = 8                     # max concurrent HBM->HBM DMAs per tensor


def _ceil_div(a: int, b: int) -> int:
    return -(-a // b)


# ----------------------------------------------------------------------------
# Pallas kernel: chunked HBM->HBM copy driven purely by the DMA engines.
# ----------------------------------------------------------------------------
def _make_hbm_copy_kernel(rows: int, chunk_rows: int, n_chunks: int):
    def kernel(x_hbm, o_hbm, sems):
        copies = []
        for c in range(n_chunks):
            r0 = c * chunk_rows
            size = min(chunk_rows, rows - r0)
            copies.append(
                pltpu.make_async_copy(
                    x_hbm.at[pl.ds(r0, size), :],
                    o_hbm.at[pl.ds(r0, size), :],
                    sems.at[c],
                )
            )
        # Issue every chunk first (overlap across DMA engines), then wait.
        for cp in copies:
            cp.start()
        for cp in copies:
            cp.wait()

    return kernel


def _pallas_hbm_copy_2d(x2d: jax.Array) -> jax.Array:
    """Materializing copy of a lane-dense 2-D slab, HBM->HBM, no VMEM staging."""
    rows, cols = x2d.shape
    row_bytes = cols * x2d.dtype.itemsize
    nbytes = rows * row_bytes

    # Chunk plan: >= ~_TARGET_CHUNK_BYTES per chunk, at most _MAX_DMA_CHUNKS,
    # chunk starts aligned to 32 rows (covers f32/bf16/int8 sublane tiling).
    n_chunks = max(1, min(_MAX_DMA_CHUNKS, _ceil_div(nbytes, _TARGET_CHUNK_BYTES)))
    chunk_rows = _ceil_div(rows, n_chunks)
    chunk_rows = min(_ceil_div(chunk_rows, 32) * 32, rows)
    n_chunks = _ceil_div(rows, chunk_rows)

    kernel = _make_hbm_copy_kernel(rows, chunk_rows, n_chunks)

    return pl.pallas_call(
        kernel,
        out_shape=jax.ShapeDtypeStruct(x2d.shape, x2d.dtype),
        in_specs=[pl.BlockSpec(memory_space=pl.ANY)],   # raw HBM ref, no auto-DMA
        out_specs=pl.BlockSpec(memory_space=pl.ANY),    # raw HBM ref, manual writeback
        scratch_shapes=[pltpu.SemaphoreType.DMA((n_chunks,))],
    )(x2d)


def _materializing_identity(x: jax.Array) -> jax.Array:
    """Identity; large lane-dense tensors are copied via the DMA-only kernel.

    Scalars / small tensors are returned as-is: routing them through a kernel
    would be pure dispatch overhead with no bandwidth to hide it behind.
    """
    x = jnp.asarray(x)
    nbytes = x.size * x.dtype.itemsize
    if x.ndim == 0 or nbytes < _PALLAS_MIN_BYTES:
        return x

    cols = next((c for c in (2048, 1024, 512, 256, 128) if x.size % c == 0), None)
    if cols is None:
        # TODO(synk): element counts not divisible by 128 keep the plain
        #             identity path (exact semantics; avoids padded layouts).
        return x

    return _pallas_hbm_copy_2d(x.reshape(-1, cols)).reshape(x.shape)


@jax.jit
def _step_impl(weights: Dict[str, jax.Array], t: jax.Array):
    new_weights = {k: _materializing_identity(v) for k, v in weights.items()}
    new_t = _materializing_identity(t)
    return new_weights, new_t


# ----------------------------------------------------------------------------
# JAX-side PolicyAPI mirroring the PyTorch abstract module.
# ----------------------------------------------------------------------------
class PolicyAPI:
    """JAX/Pallas mirror of the abstract PyTorch PolicyAPI interface."""

    def forward(self, *args, **kwargs):
        # Matches reference semantics exactly (abstract in the spec).
        raise NotImplementedError

    def __call__(self, *args, **kwargs):
        return self.forward(*args, **kwargs)

    def step(
        self, weights: Dict[str, jax.Array], t: jax.Array
    ) -> Tuple[Dict[str, jax.Array], jax.Array]:
        # Abstract in the reference; here: materializing identity pass-through.
        # One jitted program dispatches all per-tensor copies; large tensors
        # are moved by chunked HBM->HBM DMA, small tensors / scalar t bypass.
        return _step_impl(weights, t)


# ----------------------------------------------------------------------------
# Demo / self-check.
# ----------------------------------------------------------------------------
if __name__ == "__main__":
    key = jax.random.PRNGKey(0)
    k0, k1, k2, k3 = jax.random.split(key, 4)

    # Deterministic synthetic "policy weights".
    #   - w_embed (2560x512 f32 = 5 MiB) takes the Pallas HBM->HBM DMA path
    #     (2 chunks of 1280 rows each, both DMAs in flight concurrently).
    #   - w1 / b1 / w2 and the scalar t take the size-gated bypass.
    weights = {
        "w_embed": jax.random.normal(k0, (2560, 512), dtype=jnp.float32),
        "w1": jax.random.normal(k1, (8, 32), dtype=jnp.float32),
        "b1": jax.random.normal(k2, (32,), dtype=jnp.float32),
        "w2": jax.random.normal(k3, (32, 4), dtype=jnp.float32),
    }
    t = jnp.asarray(0.0, dtype=jnp.float32)

    # Host-side baselines taken before step().
    baselines = {k: np.asarray(v) for k, v in weights.items()}
    t_baseline = np.asarray(t)

    api = PolicyAPI()

    # Confirm forward is abstract (matches PyTorch semantics).
    try:
        api.forward()
        raise RuntimeError("forward() should have raised NotImplementedError")
    except NotImplementedError:
        pass

    new_weights, new_t = api.step(weights, t)
    jax.block_until_ready((new_weights, new_t))

    # Validate exact identity semantics (bit-equal, shape/dtype preserved).
    for k in baselines:
        assert new_weights[k].shape == baselines[k].shape
        assert new_weights[k].dtype == baselines[k].dtype
        assert np.array_equal(np.asarray(new_weights[k]), baselines[k])
    assert new_t.shape == t_baseline.shape and new_t.dtype == t_baseline.dtype
    assert np.array_equal(np.asarray(new_t), t_baseline)

    print("KERNEL_OK")
</pallas_src>

<mosaic_0001>
module attributes {stable_mosaic.version = 11 : i64} {
  func.func @kernel(%arg0: memref<640x2048xf32, #tpu.memory_space<any>>, %arg1: memref<640x2048xf32, #tpu.memory_space<any>>, %arg2: memref<2x!tpu.dma_semaphore, #tpu.memory_space<semaphore_mem>>) attributes {dimension_semantics = [], scalar_prefetch = 0 : i64, scratch_operands = 1 : i64, tpu.core_type = #tpu.core_type<tc>} {
    %c0_i32 = arith.constant 0 : i32
    %c0_i32_0 = arith.constant 0 : i32
    %c0_i32_1 = arith.constant 0 : i32
    %0 = tpu.memref_slice %arg0[%c0_i32_0, %c0_i32_1] : memref<640x2048xf32, #tpu.memory_space<any>> -> memref<320x2048xf32, #tpu.memory_space<any>>
    %c0_i32_2 = arith.constant 0 : i32
    %c0_i32_3 = arith.constant 0 : i32
    %1 = tpu.memref_slice %arg1[%c0_i32_2, %c0_i32_3] : memref<640x2048xf32, #tpu.memory_space<any>> -> memref<320x2048xf32, #tpu.memory_space<any>>
    %2 = tpu.memref_slice %arg2[%c0_i32] : memref<2x!tpu.dma_semaphore, #tpu.memory_space<semaphore_mem>> -> memref<1x!tpu.dma_semaphore, #tpu.memory_space<semaphore_mem>>
    %3 = tpu.memref_squeeze %2 : memref<1x!tpu.dma_semaphore, #tpu.memory_space<semaphore_mem>> -> memref<!tpu.dma_semaphore, #tpu.memory_space<semaphore_mem>>
    tpu.enqueue_dma source(%0 : memref<320x2048xf32, #tpu.memory_space<any>>) target(%1 : memref<320x2048xf32, #tpu.memory_space<any>>) target_semaphore(%3 : memref<!tpu.dma_semaphore, #tpu.memory_space<semaphore_mem>>)
    %c1_i32 = arith.constant 1 : i32
    %c320_i32 = arith.constant 320 : i32
    %c0_i32_4 = arith.constant 0 : i32
    %4 = tpu.memref_slice %arg0[%c320_i32, %c0_i32_4] : memref<640x2048xf32, #tpu.memory_space<any>> -> memref<320x2048xf32, #tpu.memory_space<any>>
    %c320_i32_5 = arith.constant 320 : i32
    %c0_i32_6 = arith.constant 0 : i32
    %5 = tpu.memref_slice %arg1[%c320_i32_5, %c0_i32_6] : memref<640x2048xf32, #tpu.memory_space<any>> -> memref<320x2048xf32, #tpu.memory_space<any>>
    %6 = tpu.memref_slice %arg2[%c1_i32] : memref<2x!tpu.dma_semaphore, #tpu.memory_space<semaphore_mem>> -> memref<1x!tpu.dma_semaphore, #tpu.memory_space<semaphore_mem>>
    %7 = tpu.memref_squeeze %6 : memref<1x!tpu.dma_semaphore, #tpu.memory_space<semaphore_mem>> -> memref<!tpu.dma_semaphore, #tpu.memory_space<semaphore_mem>>
    tpu.enqueue_dma source(%4 : memref<320x2048xf32, #tpu.memory_space<any>>) target(%5 : memref<320x2048xf32, #tpu.memory_space<any>>) target_semaphore(%7 : memref<!tpu.dma_semaphore, #tpu.memory_space<semaphore_mem>>)
    %c0_i32_7 = arith.constant 0 : i32
    %c0_i32_8 = arith.constant 0 : i32
    %c0_i32_9 = arith.constant 0 : i32
    %8 = tpu.memref_slice %arg0[%c0_i32_8, %c0_i32_9] : memref<640x2048xf32, #tpu.memory_space<any>> -> memref<320x2048xf32, #tpu.memory_space<any>>
    %c0_i32_10 = arith.constant 0 : i32
    %c0_i32_11 = arith.constant 0 : i32
    %9 = tpu.memref_slice %arg1[%c0_i32_10, %c0_i32_11] : memref<640x2048xf32, #tpu.memory_space<any>> -> memref<320x2048xf32, #tpu.memory_space<any>>
    %10 = tpu.memref_slice %arg2[%c0_i32_7] : memref<2x!tpu.dma_semaphore, #tpu.memory_space<semaphore_mem>> -> memref<1x!tpu.dma_semaphore, #tpu.memory_space<semaphore_mem>>
    %11 = tpu.memref_squeeze %10 : memref<1x!tpu.dma_semaphore, #tpu.memory_space<semaphore_mem>> -> memref<!tpu.dma_semaphore, #tpu.memory_space<semaphore_mem>>
    tpu.wait_dma2 semaphore(%11 : memref<!tpu.dma_semaphore, #tpu.memory_space<semaphore_mem>>) src(%8 : memref<320x2048xf32, #tpu.memory_space<any>>) dst(%9 : memref<320x2048xf32, #tpu.memory_space<any>>)
    %c1_i32_12 = arith.constant 1 : i32
    %c320_i32_13 = arith.constant 320 : i32
    %c0_i32_14 = arith.constant 0 : i32
    %12 = tpu.memref_slice %arg0[%c320_i32_13, %c0_i32_14] : memref<640x2048xf32, #tpu.memory_space<any>> -> memref<320x2048xf32, #tpu.memory_space<any>>
    %c320_i32_15 = arith.constant 320 : i32
    %c0_i32_16 = arith.constant 0 : i32
    %13 = tpu.memref_slice %arg1[%c320_i32_15, %c0_i32_16] : memref<640x2048xf32, #tpu.memory_space<any>> -> memref<320x2048xf32, #tpu.memory_space<any>>
    %14 = tpu.memref_slice %arg2[%c1_i32_12] : memref<2x!tpu.dma_semaphore, #tpu.memory_space<semaphore_mem>> -> memref<1x!tpu.dma_semaphore, #tpu.memory_space<semaphore_mem>>
    %15 = tpu.memref_squeeze %14 : memref<1x!tpu.dma_semaphore, #tpu.memory_space<semaphore_mem>> -> memref<!tpu.dma_semaphore, #tpu.memory_space<semaphore_mem>>
    tpu.wait_dma2 semaphore(%15 : memref<!tpu.dma_semaphore, #tpu.memory_space<semaphore_mem>>) src(%12 : memref<320x2048xf32, #tpu.memory_space<any>>) dst(%13 : memref<320x2048xf32, #tpu.memory_space<any>>)
    return
  }
}

</mosaic_0001>

<llo_original>
// kernel: _step_impl.1
$region0: #{_step_impl.1}
  #allocation0 [shape = 'u32[]', space=smem, size = 0x4, offset = 0x4, fixed_abs, tag = 'smem constant byte address 0x4 - core index']
  #allocation1 [shape = 'u32[144,128]{1,0:T(1,128)}', space=vmem, size = 0x12000, scoped, tag = 'internal scratch']
  #allocation2 [shape = 's32[2]{0}', space=sflag, size = 0x8, scoped, tag = 'scratch operand']
  #allocation3 [shape = 's32[]', space=sflag, size = 0x4, offset = 0, fixed_abs, tag = 'sflag constant byte address 0x0 - dummy sync flag']
  #allocation4 [shape = 's32[]', space=sflag, size = 0x4, offset = 0, fixed_abs, tag = 'sflag constant byte address 0x0 - dummy sync flag']
  %s0 = inlined_call_operand.vmem [shape: f32[640,2048], index: 0, kind: input, shape index: {}]
  %s1 = inlined_call_operand.vmem [shape: f32[640,2048], index: 1, kind: output, shape index: {}]
  %s2 = sld [smem:[#allocation0]]
  $region70: #{_step_impl.1} parent=0
    _
  %s4 = ssub.s32 1, %s2
  %s5 = scalar_select 0, %s4, %s2
  %p7 = scmp.lt.u32.totalorder 5120, 8
  %p8 = pneg %p7
  // Predicated region
  $region2: #{_step_impl.1} parent=0 // pred_check
    _
  $region3: #{_step_impl.1} parent=0 // pred_check_branch
    %10 = sbr.rel (%p7) target = $region5
  $region4: #{_step_impl.1} parent=0 // pred_region
    %s25 = sand.u32 5120, 7
    %p26 = scmp.eq.s32.totalorder %s25, 0
    // Predicated region
    $region17: #{_step_impl.1} parent=4 // pred_check
      %p27 = pneg %p26
    $region18: #{_step_impl.1} parent=4 // pred_check_branch
      %29 = sbr.rel (%p27) target = $region20
    $region19: #{_step_impl.1} parent=4 // pred_region
      loop: start=0, step=1, limit=1
      $region21: #{_step_impl.1} parent=19 // loop_pre_header
        _
      $region22: #{_step_impl.1} parent=19 // loop_header
        %s31 = sphi 0, %s35
        %p32 = scmp.ge.s32.totalorder %s31, 1
        %s36 = sphi %s0, %s0
        %s37 = sphi %s1, %s1
      $region23: #{_step_impl.1} parent=19 // loop_header_branch
        %34 = sbr.rel (%p32) target = $region27
      $region24: #{_step_impl.1} parent=19 // loop_body
        %v38 = vld [vmem:[%s36] sm:$0xff]
        %39 = vst [vmem:[%s37] sm:$0xff] %v38
        %v40 = vld [vmem:[%s36 + $0x8] sm:$0xff]
        %41 = vst [vmem:[%s37 + $0x8] sm:$0xff] %v40
        %v42 = vld [vmem:[%s36 + $0x10] sm:$0xff]
        %43 = vst [vmem:[%s37 + $0x10] sm:$0xff] %v42
        %v44 = vld [vmem:[%s36 + $0x18] sm:$0xff]
        %45 = vst [vmem:[%s37 + $0x18] sm:$0xff] %v44
        %v46 = vld [vmem:[%s36 + $0x20] sm:$0xff]
        %47 = vst [vmem:[%s37 + $0x20] sm:$0xff] %v46
        %v48 = vld [vmem:[%s36 + $0x28] sm:$0xff]
        %49 = vst [vmem:[%s37 + $0x28] sm:$0xff] %v48
        %v50 = vld [vmem:[%s36 + $0x30] sm:$0xff]
        %51 = vst [vmem:[%s37 + $0x30] sm:$0xff] %v50
        %v52 = vld [vmem:[%s36 + $0x38] sm:$0xff]
        %53 = vst [vmem:[%s37 + $0x38] sm:$0xff] %v52
        %v54 = vld [vmem:[%s36 + $0x40] sm:$0xff]
        %55 = vst [vmem:[%s37 + $0x40] sm:$0xff] %v54
        %v56 = vld [vmem:[%s36 + $0x48] sm:$0xff]
        %57 = vst [vmem:[%s37 + $0x48] sm:$0xff] %v56
        %v58 = vld [vmem:[%s36 + $0x50] sm:$0xff]
        %59 = vst [vmem:[%s37 + $0x50] sm:$0xff] %v58
        %v60 = vld [vmem:[%s36 + $0x58] sm:$0xff]
        %61 = vst [vmem:[%s37 + $0x58] sm:$0xff] %v60
        %v62 = vld [vmem:[%s36 + $0x60] sm:$0xff]
        %63 = vst [vmem:[%s37 + $0x60] sm:$0xff] %v62
        %v64 = vld [vmem:[%s36 + $0x68] sm:$0xff]
        %65 = vst [vmem:[%s37 + $0x68] sm:$0xff] %v64
        %v66 = vld [vmem:[%s36 + $0x70] sm:$0xff]
        %67 = vst [vmem:[%s37 + $0x70] sm:$0xff] %v66
        %v68 = vld [vmem:[%s36 + $0x78] sm:$0xff]
        %69 = vst [vmem:[%s37 + $0x78] sm:$0xff] %v68
        %v70 = vld [vmem:[%s36 + $0x80] sm:$0xff]
        %71 = vst [vmem:[%s37 + $0x80] sm:$0xff] %v70
        %v72 = vld [vmem:[%s36 + $0x88] sm:$0xff]
        %73 = vst [vmem:[%s37 + $0x88] sm:$0xff] %v72
        %v74 = vld [vmem:[%s36 + $0x90] sm:$0xff]
        %75 = vst [vmem:[%s37 + $0x90] sm:$0xff] %v74
        %v76 = vld [vmem:[%s36 + $0x98] sm:$0xff]
        %77 = vst [vmem:[%s37 + $0x98] sm:$0xff] %v76
        %v78 = vld [vmem:[%s36 + $0xa0] sm:$0xff]
        %79 = vst [vmem:[%s37 + $0xa0] sm:$0xff] %v78
        %v80 = vld [vmem:[%s36 + $0xa8] sm:$0xff]
        %81 = vst [vmem:[%s37 + $0xa8] sm:$0xff] %v80
        %v82 = vld [vmem:[%s36 + $0xb0] sm:$0xff]
        %83 = vst [vmem:[%s37 + $0xb0] sm:$0xff] %v82
        %v84 = vld [vmem:[%s36 + $0xb8] sm:$0xff]
        %85 = vst [vmem:[%s37 + $0xb8] sm:$0xff] %v84
        %v86 = vld [vmem:[%s36 + $0xc0] sm:$0xff]
        %87 = vst [vmem:[%s37 + $0xc0] sm:$0xff] %v86
        %v88 = vld [vmem:[%s36 + $0xc8] sm:$0xff]
        %89 = vst [vmem:[%s37 + $0xc8] sm:$0xff] %v88
        %v90 = vld [vmem:[%s36 + $0xd0] sm:$0xff]
        %91 = vst [vmem:[%s37 + $0xd0] sm:$0xff] %v90
        %v92 = vld [vmem:[%s36 + $0xd8] sm:$0xff]
        %93 = vst [vmem:[%s37 + $0xd8] sm:$0xff] %v92
        %v94 = vld [vmem:[%s36 + $0xe0] sm:$0xff]
        %95 = vst [vmem:[%s37 + $0xe0] sm:$0xff] %v94
        %v96 = vld [vmem:[%s36 + $0xe8] sm:$0xff]
        %97 = vst [vmem:[%s37 + $0xe8] sm:$0xff] %v96
        %v98 = vld [vmem:[%s36 + $0xf0] sm:$0xff]
        %99 = vst [vmem:[%s37 + $0xf0] sm:$0xff] %v98
        %v100 = vld [vmem:[%s36 + $0xf8] sm:$0xff]
        %101 = vst [vmem:[%s37 + $0xf8] sm:$0xff] %v100
        %v102 = vld [vmem:[%s36 + $0x100] sm:$0xff]
        %103 = vst [vmem:[%s37 + $0x100] sm:$0xff] %v102
        %v104 = vld [vmem:[%s36 + $0x108] sm:$0xff]
        %105 = vst [vmem:[%s37 + $0x108] sm:$0xff] %v104
        %v106 = vld [vmem:[%s36 + $0x110] sm:$0xff]
        %107 = vst [vmem:[%s37 + $0x110] sm:$0xff] %v106
        %v108 = vld [vmem:[%s36 + $0x118] sm:$0xff]
        %109 = vst [vmem:[%s37 + $0x118] sm:$0xff] %v108
        %v110 = vld [vmem:[%s36 + $0x120] sm:$0xff]
        %111 = vst [vmem:[%s37 + $0x120] sm:$0xff] %v110
        %v112 = vld [vmem:[%s36 + $0x128] sm:$0xff]
        %113 = vst [vmem:[%s37 + $0x128] sm:$0xff] %v112
        %v114 = vld [vmem:[%s36 + $0x130] sm:$0xff]
        %115 = vst [vmem:[%s37 + $0x130] sm:$0xff] %v114
        %v116 = vld [vmem:[%s36 + $0x138] sm:$0xff]
        %117 = vst [vmem:[%s37 + $0x138] sm:$0xff] %v116
        %v118 = vld [vmem:[%s36 + $0x140] sm:$0xff]
        %119 = vst [vmem:[%s37 + $0x140] sm:$0xff] %v118
        %v120 = vld [vmem:[%s36 + $0x148] sm:$0xff]
        %121 = vst [vmem:[%s37 + $0x148] sm:$0xff] %v120
        %v122 = vld [vmem:[%s36 + $0x150] sm:$0xff]
        %123 = vst [vmem:[%s37 + $0x150] sm:$0xff] %v122
        %v124 = vld [vmem:[%s36 + $0x158] sm:$0xff]
        %125 = vst [vmem:[%s37 + $0x158] sm:$0xff] %v124
        %v126 = vld [vmem:[%s36 + $0x160] sm:$0xff]
        %127 = vst [vmem:[%s37 + $0x160] sm:$0xff] %v126
        %v128 = vld [vmem:[%s36 + $0x168] sm:$0xff]
        %129 = vst [vmem:[%s37 + $0x168] sm:$0xff] %v128
        %v130 = vld [vmem:[%s36 + $0x170] sm:$0xff]
        %131 = vst [vmem:[%s37 + $0x170] sm:$0xff] %v130
        %v132 = vld [vmem:[%s36 + $0x178] sm:$0xff]
        %133 = vst [vmem:[%s37 + $0x178] sm:$0xff] %v132
        %v134 = vld [vmem:[%s36 + $0x180] sm:$0xff]
        %135 = vst [vmem:[%s37 + $0x180] sm:$0xff] %v134
        %v136 = vld [vmem:[%s36 + $0x188] sm:$0xff]
        %137 = vst [vmem:[%s37 + $0x188] sm:$0xff] %v136
        %v138 = vld [vmem:[%s36 + $0x190] sm:$0xff]
        %139 = vst [vmem:[%s37 + $0x190] sm:$0xff] %v138
        %v140 = vld [vmem:[%s36 + $0x198] sm:$0xff]
        %141 = vst [vmem:[%s37 + $0x198] sm:$0xff] %v140
        %v142 = vld [vmem:[%s36 + $0x1a0] sm:$0xff]
        %143 = vst [vmem:[%s37 + $0x1a0] sm:$0xff] %v142
        %v144 = vld [vmem:[%s36 + $0x1a8] sm:$0xff]
        %145 = vst [vmem:[%s37 + $0x1a8] sm:$0xff] %v144
        %v146 = vld [vmem:[%s36 + $0x1b0] sm:$0xff]
        %147 = vst [vmem:[%s37 + $0x1b0] sm:$0xff] %v146
        %v148 = vld [vmem:[%s36 + $0x1b8] sm:$0xff]
        %149 = vst [vmem:[%s37 + $0x1b8] sm:$0xff] %v148
        %v150 = vld [vmem:[%s36 + $0x1c0] sm:$0xff]
        %151 = vst [vmem:[%s37 + $0x1c0] sm:$0xff] %v150
        %v152 = vld [vmem:[%s36 + $0x1c8] sm:$0xff]
        %153 = vst [vmem:[%s37 + $0x1c8] sm:$0xff] %v152
        %v154 = vld [vmem:[%s36 + $0x1d0] sm:$0xff]
        %155 = vst [vmem:[%s37 + $0x1d0] sm:$0xff] %v154
        %v156 = vld [vmem:[%s36 + $0x1d8] sm:$0xff]
        %157 = vst [vmem:[%s37 + $0x1d8] sm:$0xff] %v156
        %v158 = vld [vmem:[%s36 + $0x1e0] sm:$0xff]
        %159 = vst [vmem:[%s37 + $0x1e0] sm:$0xff] %v158
        %v160 = vld [vmem:[%s36 + $0x1e8] sm:$0xff]
        %161 = vst [vmem:[%s37 + $0x1e8] sm:$0xff] %v160
        %v162 = vld [vmem:[%s36 + $0x1f0] sm:$0xff]
        %163 = vst [vmem:[%s37 + $0x1f0] sm:$0xff] %v162
        %v164 = vld [vmem:[%s36 + $0x1f8] sm:$0xff]
        %165 = vst [vmem:[%s37 + $0x1f8] sm:$0xff] %v164
        %v166 = vld [vmem:[%s36 + $0x200] sm:$0xff]
        %167 = vst [vmem:[%s37 + $0x200] sm:$0xff] %v166
        %v168 = vld [vmem:[%s36 + $0x208] sm:$0xff]
        %169 = vst [vmem:[%s37 + $0x208] sm:$0xff] %v168
        %v170 = vld [vmem:[%s36 + $0x210] sm:$0xff]
        %171 = vst [vmem:[%s37 + $0x210] sm:$0xff] %v170
        %v172 = vld [vmem:[%s36 + $0x218] sm:$0xff]
        %173 = vst [vmem:[%s37 + $0x218] sm:$0xff] %v172
        %v174 = vld [vmem:[%s36 + $0x220] sm:$0xff]
        %175 = vst [vmem:[%s37 + $0x220] sm:$0xff] %v174
        %v176 = vld [vmem:[%s36 + $0x228] sm:$0xff]
        %177 = vst [vmem:[%s37 + $0x228] sm:$0xff] %v176
        %v178 = vld [vmem:[%s36 + $0x230] sm:$0xff]
        %179 = vst [vmem:[%s37 + $0x230] sm:$0xff] %v178
        %v180 = vld [vmem:[%s36 + $0x238] sm:$0xff]
        %181 = vst [vmem:[%s37 + $0x238] sm:$0xff] %v180
        %v182 = vld [vmem:[%s36 + $0x240] sm:$0xff]
        %183 = vst [vmem:[%s37 + $0x240] sm:$0xff] %v182
        %v184 = vld [vmem:[%s36 + $0x248] sm:$0xff]
        %185 = vst [vmem:[%s37 + $0x248] sm:$0xff] %v184
        %v186 = vld [vmem:[%s36 + $0x250] sm:$0xff]
        %187 = vst [vmem:[%s37 + $0x250] sm:$0xff] %v186
        %v188 = vld [vmem:[%s36 + $0x258] sm:$0xff]
        %189 = vst [vmem:[%s37 + $0x258] sm:$0xff] %v188
        %v190 = vld [vmem:[%s36 + $0x260] sm:$0xff]
        %191 = vst [vmem:[%s37 + $0x260] sm:$0xff] %v190
        %v192 = vld [vmem:[%s36 + $0x268] sm:$0xff]
        %193 = vst [vmem:[%s37 + $0x268] sm:$0xff] %v192
        %v194 = vld [vmem:[%s36 + $0x270] sm:$0xff]
        %195 = vst [vmem:[%s37 + $0x270] sm:$0xff] %v194
        %v196 = vld [vmem:[%s36 + $0x278] sm:$0xff]
        %197 = vst [vmem:[%s37 + $0x278] sm:$0xff] %v196
        %v198 = vld [vmem:[%s36 + $0x280] sm:$0xff]
        %199 = vst [vmem:[%s37 + $0x280] sm:$0xff] %v198
        %v200 = vld [vmem:[%s36 + $0x288] sm:$0xff]
        %201 = vst [vmem:[%s37 + $0x288] sm:$0xff] %v200
        %v202 = vld [vmem:[%s36 + $0x290] sm:$0xff]
        %203 = vst [vmem:[%s37 + $0x290] sm:$0xff] %v202
        %v204 = vld [vmem:[%s36 + $0x298] sm:$0xff]
        %205 = vst [vmem:[%s37 + $0x298] sm:$0xff] %v204
        %v206 = vld [vmem:[%s36 + $0x2a0] sm:$0xff]
        %207 = vst [vmem:[%s37 + $0x2a0] sm:$0xff] %v206
        %v208 = vld [vmem:[%s36 + $0x2a8] sm:$0xff]
        %209 = vst [vmem:[%s37 + $0x2a8] sm:$0xff] %v208
        %v210 = vld [vmem:[%s36 + $0x2b0] sm:$0xff]
        %211 = vst [vmem:[%s37 + $0x2b0] sm:$0xff] %v210
        %v212 = vld [vmem:[%s36 + $0x2b8] sm:$0xff]
        %213 = vst [vmem:[%s37 + $0x2b8] sm:$0xff] %v212
        %v214 = vld [vmem:[%s36 + $0x2c0] sm:$0xff]
        %215 = vst [vmem:[%s37 + $0x2c0] sm:$0xff] %v214
        %v216 = vld [vmem:[%s36 + $0x2c8] sm:$0xff]
        %217 = vst [vmem:[%s37 + $0x2c8] sm:$0xff] %v216
        %v218 = vld [vmem:[%s36 + $0x2d0] sm:$0xff]
        %219 = vst [vmem:[%s37 + $0x2d0] sm:$0xff] %v218
        %v220 = vld [vmem:[%s36 + $0x2d8] sm:$0xff]
        %221 = vst [vmem:[%s37 + $0x2d8] sm:$0xff] %v220
        %v222 = vld [vmem:[%s36 + $0x2e0] sm:$0xff]
        %223 = vst [vmem:[%s37 + $0x2e0] sm:$0xff] %v222
        %v224 = vld [vmem:[%s36 + $0x2e8] sm:$0xff]
        %225 = vst [vmem:[%s37 + $0x2e8] sm:$0xff] %v224
        %v226 = vld [vmem:[%s36 + $0x2f0] sm:$0xff]
        %227 = vst [vmem:[%s37 + $0x2f0] sm:$0xff] %v226
        %v228 = vld [vmem:[%s36 + $0x2f8] sm:$0xff]
        %229 = vst [vmem:[%s37 + $0x2f8] sm:$0xff] %v228
        %v230 = vld [vmem:[%s36 + $0x300] sm:$0xff]
        %231 = vst [vmem:[%s37 + $0x300] sm:$0xff] %v230
        %v232 = vld [vmem:[%s36 + $0x308] sm:$0xff]
        %233 = vst [vmem:[%s37 + $0x308] sm:$0xff] %v232
        %v234 = vld [vmem:[%s36 + $0x310] sm:$0xff]
        %235 = vst [vmem:[%s37 + $0x310] sm:$0xff] %v234
        %v236 = vld [vmem:[%s36 + $0x318] sm:$0xff]
        %237 = vst [vmem:[%s37 + $0x318] sm:$0xff] %v236
        %v238 = vld [vmem:[%s36 + $0x320] sm:$0xff]
        %239 = vst [vmem:[%s37 + $0x320] sm:$0xff] %v238
        %v240 = vld [vmem:[%s36 + $0x328] sm:$0xff]
        %241 = vst [vmem:[%s37 + $0x328] sm:$0xff] %v240
        %v242 = vld [vmem:[%s36 + $0x330] sm:$0xff]
        %243 = vst [vmem:[%s37 + $0x330] sm:$0xff] %v242
        %v244 = vld [vmem:[%s36 + $0x338] sm:$0xff]
        %245 = vst [vmem:[%s37 + $0x338] sm:$0xff] %v244
        %v246 = vld [vmem:[%s36 + $0x340] sm:$0xff]
        %247 = vst [vmem:[%s37 + $0x340] sm:$0xff] %v246
        %v248 = vld [vmem:[%s36 + $0x348] sm:$0xff]
        %249 = vst [vmem:[%s37 + $0x348] sm:$0xff] %v248
        %v250 = vld [vmem:[%s36 + $0x350] sm:$0xff]
        %251 = vst [vmem:[%s37 + $0x350] sm:$0xff] %v250
        %v252 = vld [vmem:[%s36 + $0x358] sm:$0xff]
        %253 = vst [vmem:[%s37 + $0x358] sm:$0xff] %v252
        %v254 = vld [vmem:[%s36 + $0x360] sm:$0xff]
        %255 = vst [vmem:[%s37 + $0x360] sm:$0xff] %v254
        %v256 = vld [vmem:[%s36 + $0x368] sm:$0xff]
        %257 = vst [vmem:[%s37 + $0x368] sm:$0xff] %v256
        %v258 = vld [vmem:[%s36 + $0x370] sm:$0xff]
        %259 = vst [vmem:[%s37 + $0x370] sm:$0xff] %v258
        %v260 = vld [vmem:[%s36 + $0x378] sm:$0xff]
        %261 = vst [vmem:[%s37 + $0x378] sm:$0xff] %v260
        %v262 = vld [vmem:[%s36 + $0x380] sm:$0xff]
        %263 = vst [vmem:[%s37 + $0x380] sm:$0xff] %v262
        %v264 = vld [vmem:[%s36 + $0x388] sm:$0xff]
        %265 = vst [vmem:[%s37 + $0x388] sm:$0xff] %v264
        %v266 = vld [vmem:[%s36 + $0x390] sm:$0xff]
        %267 = vst [vmem:[%s37 + $0x390] sm:$0xff] %v266
        %v268 = vld [vmem:[%s36 + $0x398] sm:$0xff]
        %269 = vst [vmem:[%s37 + $0x398] sm:$0xff] %v268
        %v270 = vld [vmem:[%s36 + $0x3a0] sm:$0xff]
        %271 = vst [vmem:[%s37 + $0x3a0] sm:$0xff] %v270
        %v272 = vld [vmem:[%s36 + $0x3a8] sm:$0xff]
        %273 = vst [vmem:[%s37 + $0x3a8] sm:$0xff] %v272
        %v274 = vld [vmem:[%s36 + $0x3b0] sm:$0xff]
        %275 = vst [vmem:[%s37 + $0x3b0] sm:$0xff] %v274
        %v276 = vld [vmem:[%s36 + $0x3b8] sm:$0xff]
        %277 = vst [vmem:[%s37 + $0x3b8] sm:$0xff] %v276
        %v278 = vld [vmem:[%s36 + $0x3c0] sm:$0xff]
        %279 = vst [vmem:[%s37 + $0x3c0] sm:$0xff] %v278
        %v280 = vld [vmem:[%s36 + $0x3c8] sm:$0xff]
        %281 = vst [vmem:[%s37 + $0x3c8] sm:$0xff] %v280
        %v282 = vld [vmem:[%s36 + $0x3d0] sm:$0xff]
        %283 = vst [vmem:[%s37 + $0x3d0] sm:$0xff] %v282
        %v284 = vld [vmem:[%s36 + $0x3d8] sm:$0xff]
        %285 = vst [vmem:[%s37 + $0x3d8] sm:$0xff] %v284
        %v286 = vld [vmem:[%s36 + $0x3e0] sm:$0xff]
        %287 = vst [vmem:[%s37 + $0x3e0] sm:$0xff] %v286
        %v288 = vld [vmem:[%s36 + $0x3e8] sm:$0xff]
        %289 = vst [vmem:[%s37 + $0x3e8] sm:$0xff] %v288
        %v290 = vld [vmem:[%s36 + $0x3f0] sm:$0xff]
        %291 = vst [vmem:[%s37 + $0x3f0] sm:$0xff] %v290
        %v292 = vld [vmem:[%s36 + $0x3f8] sm:$0xff]
        %293 = vst [vmem:[%s37 + $0x3f8] sm:$0xff] %v292
        %v294 = vld [vmem:[%s36 + $0x400] sm:$0xff]
        %295 = vst [vmem:[%s37 + $0x400] sm:$0xff] %v294
        %v296 = vld [vmem:[%s36 + $0x408] sm:$0xff]
        %297 = vst [vmem:[%s37 + $0x408] sm:$0xff] %v296
        %v298 = vld [vmem:[%s36 + $0x410] sm:$0xff]
        %299 = vst [vmem:[%s37 + $0x410] sm:$0xff] %v298
        %v300 = vld [vmem:[%s36 + $0x418] sm:$0xff]
        %301 = vst [vmem:[%s37 + $0x418] sm:$0xff] %v300
        %v302 = vld [vmem:[%s36 + $0x420] sm:$0xff]
        %303 = vst [vmem:[%s37 + $0x420] sm:$0xff] %v302
        %v304 = vld [vmem:[%s36 + $0x428] sm:$0xff]
        %305 = vst [vmem:[%s37 + $0x428] sm:$0xff] %v304
        %v306 = vld [vmem:[%s36 + $0x430] sm:$0xff]
        %307 = vst [vmem:[%s37 + $0x430] sm:$0xff] %v306
        %v308 = vld [vmem:[%s36 + $0x438] sm:$0xff]
        %309 = vst [vmem:[%s37 + $0x438] sm:$0xff] %v308
        %v310 = vld [vmem:[%s36 + $0x440] sm:$0xff]
        %311 = vst [vmem:[%s37 + $0x440] sm:$0xff] %v310
        %v312 = vld [vmem:[%s36 + $0x448] sm:$0xff]
        %313 = vst [vmem:[%s37 + $0x448] sm:$0xff] %v312
        %v314 = vld [vmem:[%s36 + $0x450] sm:$0xff]
        %315 = vst [vmem:[%s37 + $0x450] sm:$0xff] %v314
        %v316 = vld [vmem:[%s36 + $0x458] sm:$0xff]
        %317 = vst [vmem:[%s37 + $0x458] sm:$0xff] %v316
        %v318 = vld [vmem:[%s36 + $0x460] sm:$0xff]
        %319 = vst [vmem:[%s37 + $0x460] sm:$0xff] %v318
        %v320 = vld [vmem:[%s36 + $0x468] sm:$0xff]
        %321 = vst [vmem:[%s37 + $0x468] sm:$0xff] %v320
        %v322 = vld [vmem:[%s36 + $0x470] sm:$0xff]
        %323 = vst [vmem:[%s37 + $0x470] sm:$0xff] %v322
        %v324 = vld [vmem:[%s36 + $0x478] sm:$0xff]
        %325 = vst [vmem:[%s37 + $0x478] sm:$0xff] %v324
        %v326 = vld [vmem:[%s36 + $0x480] sm:$0xff]
        %327 = vst [vmem:[%s37 + $0x480] sm:$0xff] %v326
        %v328 = vld [vmem:[%s36 + $0x488] sm:$0xff]
        %329 = vst [vmem:[%s37 + $0x488] sm:$0xff] %v328
        %v330 = vld [vmem:[%s36 + $0x490] sm:$0xff]
        %331 = vst [vmem:[%s37 + $0x490] sm:$0xff] %v330
        %v332 = vld [vmem:[%s36 + $0x498] sm:$0xff]
        %333 = vst [vmem:[%s37 + $0x498] sm:$0xff] %v332
        %v334 = vld [vmem:[%s36 + $0x4a0] sm:$0xff]
        %335 = vst [vmem:[%s37 + $0x4a0] sm:$0xff] %v334
        %v336 = vld [vmem:[%s36 + $0x4a8] sm:$0xff]
        %337 = vst [vmem:[%s37 + $0x4a8] sm:$0xff] %v336
        %v338 = vld [vmem:[%s36 + $0x4b0] sm:$0xff]
        %339 = vst [vmem:[%s37 + $0x4b0] sm:$0xff] %v338
        %v340 = vld [vmem:[%s36 + $0x4b8] sm:$0xff]
        %341 = vst [vmem:[%s37 + $0x4b8] sm:$0xff] %v340
        %v342 = vld [vmem:[%s36 + $0x4c0] sm:$0xff]
        %343 = vst [vmem:[%s37 + $0x4c0] sm:$0xff] %v342
        %v344 = vld [vmem:[%s36 + $0x4c8] sm:$0xff]
        %345 = vst [vmem:[%s37 + $0x4c8] sm:$0xff] %v344
        %v346 = vld [vmem:[%s36 + $0x4d0] sm:$0xff]
        %347 = vst [vmem:[%s37 + $0x4d0] sm:$0xff] %v346
        %v348 = vld [vmem:[%s36 + $0x4d8] sm:$0xff]
        %349 = vst [vmem:[%s37 + $0x4d8] sm:$0xff] %v348
        %v350 = vld [vmem:[%s36 + $0x4e0] sm:$0xff]
        %351 = vst [vmem:[%s37 + $0x4e0] sm:$0xff] %v350
        %v352 = vld [vmem:[%s36 + $0x4e8] sm:$0xff]
        %353 = vst [vmem:[%s37 + $0x4e8] sm:$0xff] %v352
        %v354 = vld [vmem:[%s36 + $0x4f0] sm:$0xff]
        %355 = vst [vmem:[%s37 + $0x4f0] sm:$0xff] %v354
        %v356 = vld [vmem:[%s36 + $0x4f8] sm:$0xff]
        %357 = vst [vmem:[%s37 + $0x4f8] sm:$0xff] %v356
        %v358 = vld [vmem:[%s36 + $0x500] sm:$0xff]
        %359 = vst [vmem:[%s37 + $0x500] sm:$0xff] %v358
        %v360 = vld [vmem:[%s36 + $0x508] sm:$0xff]
        %361 = vst [vmem:[%s37 + $0x508] sm:$0xff] %v360
        %v362 = vld [vmem:[%s36 + $0x510] sm:$0xff]
        %363 = vst [vmem:[%s37 + $0x510] sm:$0xff] %v362
        %v364 = vld [vmem:[%s36 + $0x518] sm:$0xff]
        %365 = vst [vmem:[%s37 + $0x518] sm:$0xff] %v364
        %v366 = vld [vmem:[%s36 + $0x520] sm:$0xff]
        %367 = vst [vmem:[%s37 + $0x520] sm:$0xff] %v366
        %v368 = vld [vmem:[%s36 + $0x528] sm:$0xff]
        %369 = vst [vmem:[%s37 + $0x528] sm:$0xff] %v368
        %v370 = vld [vmem:[%s36 + $0x530] sm:$0xff]
        %371 = vst [vmem:[%s37 + $0x530] sm:$0xff] %v370
        %v372 = vld [vmem:[%s36 + $0x538] sm:$0xff]
        %373 = vst [vmem:[%s37 + $0x538] sm:$0xff] %v372
        %v374 = vld [vmem:[%s36 + $0x540] sm:$0xff]
        %375 = vst [vmem:[%s37 + $0x540] sm:$0xff] %v374
        %v376 = vld [vmem:[%s36 + $0x548] sm:$0xff]
        %377 = vst [vmem:[%s37 + $0x548] sm:$0xff] %v376
        %v378 = vld [vmem:[%s36 + $0x550] sm:$0xff]
        %379 = vst [vmem:[%s37 + $0x550] sm:$0xff] %v378
        %v380 = vld [vmem:[%s36 + $0x558] sm:$0xff]
        %381 = vst [vmem:[%s37 + $0x558] sm:$0xff] %v380
        %v382 = vld [vmem:[%s36 + $0x560] sm:$0xff]
        %383 = vst [vmem:[%s37 + $0x560] sm:$0xff] %v382
        %v384 = vld [vmem:[%s36 + $0x568] sm:$0xff]
        %385 = vst [vmem:[%s37 + $0x568] sm:$0xff] %v384
        %v386 = vld [vmem:[%s36 + $0x570] sm:$0xff]
        %387 = vst [vmem:[%s37 + $0x570] sm:$0xff] %v386
        %v388 = vld [vmem:[%s36 + $0x578] sm:$0xff]
        %389 = vst [vmem:[%s37 + $0x578] sm:$0xff] %v388
        %v390 = vld [vmem:[%s36 + $0x580] sm:$0xff]
        %391 = vst [vmem:[%s37 + $0x580] sm:$0xff] %v390
        %v392 = vld [vmem:[%s36 + $0x588] sm:$0xff]
        %393 = vst [vmem:[%s37 + $0x588] sm:$0xff] %v392
        %v394 = vld [vmem:[%s36 + $0x590] sm:$0xff]
        %395 = vst [vmem:[%s37 + $0x590] sm:$0xff] %v394
        %v396 = vld [vmem:[%s36 + $0x598] sm:$0xff]
        %397 = vst [vmem:[%s37 + $0x598] sm:$0xff] %v396
        %v398 = vld [vmem:[%s36 + $0x5a0] sm:$0xff]
        %399 = vst [vmem:[%s37 + $0x5a0] sm:$0xff] %v398
        %v400 = vld [vmem:[%s36 + $0x5a8] sm:$0xff]
        %401 = vst [vmem:[%s37 + $0x5a8] sm:$0xff] %v400
        %v402 = vld [vmem:[%s36 + $0x5b0] sm:$0xff]
        %403 = vst [vmem:[%s37 + $0x5b0] sm:$0xff] %v402
        %v404 = vld [vmem:[%s36 + $0x5b8] sm:$0xff]
        %405 = vst [vmem:[%s37 + $0x5b8] sm:$0xff] %v404
        %v406 = vld [vmem:[%s36 + $0x5c0] sm:$0xff]
        %407 = vst [vmem:[%s37 + $0x5c0] sm:$0xff] %v406
        %v408 = vld [vmem:[%s36 + $0x5c8] sm:$0xff]
        %409 = vst [vmem:[%s37 + $0x5c8] sm:$0xff] %v408
        %v410 = vld [vmem:[%s36 + $0x5d0] sm:$0xff]
        %411 = vst [vmem:[%s37 + $0x5d0] sm:$0xff] %v410
        %v412 = vld [vmem:[%s36 + $0x5d8] sm:$0xff]
        %413 = vst [vmem:[%s37 + $0x5d8] sm:$0xff] %v412
        %v414 = vld [vmem:[%s36 + $0x5e0] sm:$0xff]
        %415 = vst [vmem:[%s37 + $0x5e0] sm:$0xff] %v414
        %v416 = vld [vmem:[%s36 + $0x5e8] sm:$0xff]
        %417 = vst [vmem:[%s37 + $0x5e8] sm:$0xff] %v416
        %v418 = vld [vmem:[%s36 + $0x5f0] sm:$0xff]
        %419 = vst [vmem:[%s37 + $0x5f0] sm:$0xff] %v418
        %v420 = vld [vmem:[%s36 + $0x5f8] sm:$0xff]
        %421 = vst [vmem:[%s37 + $0x5f8] sm:$0xff] %v420
        %v422 = vld [vmem:[%s36 + $0x600] sm:$0xff]
        %423 = vst [vmem:[%s37 + $0x600] sm:$0xff] %v422
        %v424 = vld [vmem:[%s36 + $0x608] sm:$0xff]
        %425 = vst [vmem:[%s37 + $0x608] sm:$0xff] %v424
        %v426 = vld [vmem:[%s36 + $0x610] sm:$0xff]
        %427 = vst [vmem:[%s37 + $0x610] sm:$0xff] %v426
        %v428 = vld [vmem:[%s36 + $0x618] sm:$0xff]
        %429 = vst [vmem:[%s37 + $0x618] sm:$0xff] %v428
        %v430 = vld [vmem:[%s36 + $0x620] sm:$0xff]
        %431 = vst [vmem:[%s37 + $0x620] sm:$0xff] %v430
        %v432 = vld [vmem:[%s36 + $0x628] sm:$0xff]
        %433 = vst [vmem:[%s37 + $0x628] sm:$0xff] %v432
        %v434 = vld [vmem:[%s36 + $0x630] sm:$0xff]
        %435 = vst [vmem:[%s37 + $0x630] sm:$0xff] %v434
        %v436 = vld [vmem:[%s36 + $0x638] sm:$0xff]
        %437 = vst [vmem:[%s37 + $0x638] sm:$0xff] %v436
        %v438 = vld [vmem:[%s36 + $0x640] sm:$0xff]
        %439 = vst [vmem:[%s37 + $0x640] sm:$0xff] %v438
        %v440 = vld [vmem:[%s36 + $0x648] sm:$0xff]
        %441 = vst [vmem:[%s37 + $0x648] sm:$0xff] %v440
        %v442 = vld [vmem:[%s36 + $0x650] sm:$0xff]
        %443 = vst [vmem:[%s37 + $0x650] sm:$0xff] %v442
        %v444 = vld [vmem:[%s36 + $0x658] sm:$0xff]
        %445 = vst [vmem:[%s37 + $0x658] sm:$0xff] %v444
        %v446 = vld [vmem:[%s36 + $0x660] sm:$0xff]
        %447 = vst [vmem:[%s37 + $0x660] sm:$0xff] %v446
        %v448 = vld [vmem:[%s36 + $0x668] sm:$0xff]
        %449 = vst [vmem:[%s37 + $0x668] sm:$0xff] %v448
        %v450 = vld [vmem:[%s36 + $0x670] sm:$0xff]
        %451 = vst [vmem:[%s37 + $0x670] sm:$0xff] %v450
        %v452 = vld [vmem:[%s36 + $0x678] sm:$0xff]
        %453 = vst [vmem:[%s37 + $0x678] sm:$0xff] %v452
        %v454 = vld [vmem:[%s36 + $0x680] sm:$0xff]
        %455 = vst [vmem:[%s37 + $0x680] sm:$0xff] %v454
        %v456 = vld [vmem:[%s36 + $0x688] sm:$0xff]
        %457 = vst [vmem:[%s37 + $0x688] sm:$0xff] %v456
        %v458 = vld [vmem:[%s36 + $0x690] sm:$0xff]
        %459 = vst [vmem:[%s37 + $0x690] sm:$0xff] %v458
        %v460 = vld [vmem:[%s36 + $0x698] sm:$0xff]
        %461 = vst [vmem:[%s37 + $0x698] sm:$0xff] %v460
        %v462 = vld [vmem:[%s36 + $0x6a0] sm:$0xff]
        %463 = vst [vmem:[%s37 + $0x6a0] sm:$0xff] %v462
        %v464 = vld [vmem:[%s36 + $0x6a8] sm:$0xff]
        %465 = vst [vmem:[%s37 + $0x6a8] sm:$0xff] %v464
        %v466 = vld [vmem:[%s36 + $0x6b0] sm:$0xff]
        %467 = vst [vmem:[%s37 + $0x6b0] sm:$0xff] %v466
        %v468 = vld [vmem:[%s36 + $0x6b8] sm:$0xff]
        %469 = vst [vmem:[%s37 + $0x6b8] sm:$0xff] %v468
        %v470 = vld [vmem:[%s36 + $0x6c0] sm:$0xff]
        %471 = vst [vmem:[%s37 + $0x6c0] sm:$0xff] %v470
        %v472 = vld [vmem:[%s36 + $0x6c8] sm:$0xff]
        %473 = vst [vmem:[%s37 + $0x6c8] sm:$0xff] %v472
        %v474 = vld [vmem:[%s36 + $0x6d0] sm:$0xff]
        %475 = vst [vmem:[%s37 + $0x6d0] sm:$0xff] %v474
        %v476 = vld [vmem:[%s36 + $0x6d8] sm:$0xff]
        %477 = vst [vmem:[%s37 + $0x6d8] sm:$0xff] %v476
        %v478 = vld [vmem:[%s36 + $0x6e0] sm:$0xff]
        %479 = vst [vmem:[%s37 + $0x6e0] sm:$0xff] %v478
        %v480 = vld [vmem:[%s36 + $0x6e8] sm:$0xff]
        %481 = vst [vmem:[%s37 + $0x6e8] sm:$0xff] %v480
        %v482 = vld [vmem:[%s36 + $0x6f0] sm:$0xff]
        %483 = vst [vmem:[%s37 + $0x6f0] sm:$0xff] %v482
        %v484 = vld [vmem:[%s36 + $0x6f8] sm:$0xff]
        %485 = vst [vmem:[%s37 + $0x6f8] sm:$0xff] %v484
        %v486 = vld [vmem:[%s36 + $0x700] sm:$0xff]
        %487 = vst [vmem:[%s37 + $0x700] sm:$0xff] %v486
        %v488 = vld [vmem:[%s36 + $0x708] sm:$0xff]
        %489 = vst [vmem:[%s37 + $0x708] sm:$0xff] %v488
        %v490 = vld [vmem:[%s36 + $0x710] sm:$0xff]
        %491 = vst [vmem:[%s37 + $0x710] sm:$0xff] %v490
        %v492 = vld [vmem:[%s36 + $0x718] sm:$0xff]
        %493 = vst [vmem:[%s37 + $0x718] sm:$0xff] %v492
        %v494 = vld [vmem:[%s36 + $0x720] sm:$0xff]
        %495 = vst [vmem:[%s37 + $0x720] sm:$0xff] %v494
        %v496 = vld [vmem:[%s36 + $0x728] sm:$0xff]
        %497 = vst [vmem:[%s37 + $0x728] sm:$0xff] %v496
        %v498 = vld [vmem:[%s36 + $0x730] sm:$0xff]
        %499 = vst [vmem:[%s37 + $0x730] sm:$0xff] %v498
        %v500 = vld [vmem:[%s36 + $0x738] sm:$0xff]
        %501 = vst [vmem:[%s37 + $0x738] sm:$0xff] %v500
        %v502 = vld [vmem:[%s36 + $0x740] sm:$0xff]
        %503 = vst [vmem:[%s37 + $0x740] sm:$0xff] %v502
        %v504 = vld [vmem:[%s36 + $0x748] sm:$0xff]
        %505 = vst [vmem:[%s37 + $0x748] sm:$0xff] %v504
        %v506 = vld [vmem:[%s36 + $0x750] sm:$0xff]
        %507 = vst [vmem:[%s37 + $0x750] sm:$0xff] %v506
        %v508 = vld [vmem:[%s36 + $0x758] sm:$0xff]
        %509 = vst [vmem:[%s37 + $0x758] sm:$0xff] %v508
        %v510 = vld [vmem:[%s36 + $0x760] sm:$0xff]
        %511 = vst [vmem:[%s37 + $0x760] sm:$0xff] %v510
        %v512 = vld [vmem:[%s36 + $0x768] sm:$0xff]
        %513 = vst [vmem:[%s37 + $0x768] sm:$0xff] %v512
        %v514 = vld [vmem:[%s36 + $0x770] sm:$0xff]
        %515 = vst [vmem:[%s37 + $0x770] sm:$0xff] %v514
        %v516 = vld [vmem:[%s36 + $0x778] sm:$0xff]
        %517 = vst [vmem:[%s37 + $0x778] sm:$0xff] %v516
        %v518 = vld [vmem:[%s36 + $0x780] sm:$0xff]
        %519 = vst [vmem:[%s37 + $0x780] sm:$0xff] %v518
        %v520 = vld [vmem:[%s36 + $0x788] sm:$0xff]
        %521 = vst [vmem:[%s37 + $0x788] sm:$0xff] %v520
        %v522 = vld [vmem:[%s36 + $0x790] sm:$0xff]
        %523 = vst [vmem:[%s37 + $0x790] sm:$0xff] %v522
        %v524 = vld [vmem:[%s36 + $0x798] sm:$0xff]
        %525 = vst [vmem:[%s37 + $0x798] sm:$0xff] %v524
        %v526 = vld [vmem:[%s36 + $0x7a0] sm:$0xff]
        %527 = vst [vmem:[%s37 + $0x7a0] sm:$0xff] %v526
        %v528 = vld [vmem:[%s36 + $0x7a8] sm:$0xff]
        %529 = vst [vmem:[%s37 + $0x7a8] sm:$0xff] %v528
        %v530 = vld [vmem:[%s36 + $0x7b0] sm:$0xff]
        %531 = vst [vmem:[%s37 + $0x7b0] sm:$0xff] %v530
        %v532 = vld [vmem:[%s36 + $0x7b8] sm:$0xff]
        %533 = vst [vmem:[%s37 + $0x7b8] sm:$0xff] %v532
        %v534 = vld [vmem:[%s36 + $0x7c0] sm:$0xff]
        %535 = vst [vmem:[%s37 + $0x7c0] sm:$0xff] %v534
        %v536 = vld [vmem:[%s36 + $0x7c8] sm:$0xff]
        %537 = vst [vmem:[%s37 + $0x7c8] sm:$0xff] %v536
        %v538 = vld [vmem:[%s36 + $0x7d0] sm:$0xff]
        %539 = vst [vmem:[%s37 + $0x7d0] sm:$0xff] %v538
        %v540 = vld [vmem:[%s36 + $0x7d8] sm:$0xff]
        %541 = vst [vmem:[%s37 + $0x7d8] sm:$0xff] %v540
        %v542 = vld [vmem:[%s36 + $0x7e0] sm:$0xff]
        %543 = vst [vmem:[%s37 + $0x7e0] sm:$0xff] %v542
        %v544 = vld [vmem:[%s36 + $0x7e8] sm:$0xff]
        %545 = vst [vmem:[%s37 + $0x7e8] sm:$0xff] %v544
        %v546 = vld [vmem:[%s36 + $0x7f0] sm:$0xff]
        %547 = vst [vmem:[%s37 + $0x7f0] sm:$0xff] %v546
        %v548 = vld [vmem:[%s36 + $0x7f8] sm:$0xff]
        %549 = vst [vmem:[%s37 + $0x7f8] sm:$0xff] %v548
        %v550 = vld [vmem:[%s36 + $0x800] sm:$0xff]
        %551 = vst [vmem:[%s37 + $0x800] sm:$0xff] %v550
        %v552 = vld [vmem:[%s36 + $0x808] sm:$0xff]
        %553 = vst [vmem:[%s37 + $0x808] sm:$0xff] %v552
        %v554 = vld [vmem:[%s36 + $0x810] sm:$0xff]
        %555 = vst [vmem:[%s37 + $0x810] sm:$0xff] %v554
        %v556 = vld [vmem:[%s36 + $0x818] sm:$0xff]
        %557 = vst [vmem:[%s37 + $0x818] sm:$0xff] %v556
        %v558 = vld [vmem:[%s36 + $0x820] sm:$0xff]
        %559 = vst [vmem:[%s37 + $0x820] sm:$0xff] %v558
        %v560 = vld [vmem:[%s36 + $0x828] sm:$0xff]
        %561 = vst [vmem:[%s37 + $0x828] sm:$0xff] %v560
        %v562 = vld [vmem:[%s36 + $0x830] sm:$0xff]
        %563 = vst [vmem:[%s37 + $0x830] sm:$0xff] %v562
        %v564 = vld [vmem:[%s36 + $0x838] sm:$0xff]
        %565 = vst [vmem:[%s37 + $0x838] sm:$0xff] %v564
        %v566 = vld [vmem:[%s36 + $0x840] sm:$0xff]
        %567 = vst [vmem:[%s37 + $0x840] sm:$0xff] %v566
        %v568 = vld [vmem:[%s36 + $0x848] sm:$0xff]
        %569 = vst [vmem:[%s37 + $0x848] sm:$0xff] %v568
        %v570 = vld [vmem:[%s36 + $0x850] sm:$0xff]
        %571 = vst [vmem:[%s37 + $0x850] sm:$0xff] %v570
        %v572 = vld [vmem:[%s36 + $0x858] sm:$0xff]
        %573 = vst [vmem:[%s37 + $0x858] sm:$0xff] %v572
        %v574 = vld [vmem:[%s36 + $0x860] sm:$0xff]
        %575 = vst [vmem:[%s37 + $0x860] sm:$0xff] %v574
        %v576 = vld [vmem:[%s36 + $0x868] sm:$0xff]
        %577 = vst [vmem:[%s37 + $0x868] sm:$0xff] %v576
        %v578 = vld [vmem:[%s36 + $0x870] sm:$0xff]
        %579 = vst [vmem:[%s37 + $0x870] sm:$0xff] %v578
        %v580 = vld [vmem:[%s36 + $0x878] sm:$0xff]
        %581 = vst [vmem:[%s37 + $0x878] sm:$0xff] %v580
        %v582 = vld [vmem:[%s36 + $0x880] sm:$0xff]
        %583 = vst [vmem:[%s37 + $0x880] sm:$0xff] %v582
        %v584 = vld [vmem:[%s36 + $0x888] sm:$0xff]
        %585 = vst [vmem:[%s37 + $0x888] sm:$0xff] %v584
        %v586 = vld [vmem:[%s36 + $0x890] sm:$0xff]
        %587 = vst [vmem:[%s37 + $0x890] sm:$0xff] %v586
        %v588 = vld [vmem:[%s36 + $0x898] sm:$0xff]
        %589 = vst [vmem:[%s37 + $0x898] sm:$0xff] %v588
        %v590 = vld [vmem:[%s36 + $0x8a0] sm:$0xff]
        %591 = vst [vmem:[%s37 + $0x8a0] sm:$0xff] %v590
        %v592 = vld [vmem:[%s36 + $0x8a8] sm:$0xff]
        %593 = vst [vmem:[%s37 + $0x8a8] sm:$0xff] %v592
        %v594 = vld [vmem:[%s36 + $0x8b0] sm:$0xff]
        %595 = vst [vmem:[%s37 + $0x8b0] sm:$0xff] %v594
        %v596 = vld [vmem:[%s36 + $0x8b8] sm:$0xff]
        %597 = vst [vmem:[%s37 + $0x8b8] sm:$0xff] %v596
        %v598 = vld [vmem:[%s36 + $0x8c0] sm:$0xff]
        %599 = vst [vmem:[%s37 + $0x8c0] sm:$0xff] %v598
        %v600 = vld [vmem:[%s36 + $0x8c8] sm:$0xff]
        %601 = vst [vmem:[%s37 + $0x8c8] sm:$0xff] %v600
        %v602 = vld [vmem:[%s36 + $0x8d0] sm:$0xff]
        %603 = vst [vmem:[%s37 + $0x8d0] sm:$0xff] %v602
        %v604 = vld [vmem:[%s36 + $0x8d8] sm:$0xff]
        %605 = vst [vmem:[%s37 + $0x8d8] sm:$0xff] %v604
        %v606 = vld [vmem:[%s36 + $0x8e0] sm:$0xff]
        %607 = vst [vmem:[%s37 + $0x8e0] sm:$0xff] %v606
        %v608 = vld [vmem:[%s36 + $0x8e8] sm:$0xff]
        %609 = vst [vmem:[%s37 + $0x8e8] sm:$0xff] %v608
        %v610 = vld [vmem:[%s36 + $0x8f0] sm:$0xff]
        %611 = vst [vmem:[%s37 + $0x8f0] sm:$0xff] %v610
        %v612 = vld [vmem:[%s36 + $0x8f8] sm:$0xff]
        %613 = vst [vmem:[%s37 + $0x8f8] sm:$0xff] %v612
        %v614 = vld [vmem:[%s36 + $0x900] sm:$0xff]
        %615 = vst [vmem:[%s37 + $0x900] sm:$0xff] %v614
        %v616 = vld [vmem:[%s36 + $0x908] sm:$0xff]
        %617 = vst [vmem:[%s37 + $0x908] sm:$0xff] %v616
        %v618 = vld [vmem:[%s36 + $0x910] sm:$0xff]
        %619 = vst [vmem:[%s37 + $0x910] sm:$0xff] %v618
        %v620 = vld [vmem:[%s36 + $0x918] sm:$0xff]
        %621 = vst [vmem:[%s37 + $0x918] sm:$0xff] %v620
        %v622 = vld [vmem:[%s36 + $0x920] sm:$0xff]
        %623 = vst [vmem:[%s37 + $0x920] sm:$0xff] %v622
        %v624 = vld [vmem:[%s36 + $0x928] sm:$0xff]
        %625 = vst [vmem:[%s37 + $0x928] sm:$0xff] %v624
        %v626 = vld [vmem:[%s36 + $0x930] sm:$0xff]
        %627 = vst [vmem:[%s37 + $0x930] sm:$0xff] %v626
        %v628 = vld [vmem:[%s36 + $0x938] sm:$0xff]
        %629 = vst [vmem:[%s37 + $0x938] sm:$0xff] %v628
        %v630 = vld [vmem:[%s36 + $0x940] sm:$0xff]
        %631 = vst [vmem:[%s37 + $0x940] sm:$0xff] %v630
        %v632 = vld [vmem:[%s36 + $0x948] sm:$0xff]
        %633 = vst [vmem:[%s37 + $0x948] sm:$0xff] %v632
        %v634 = vld [vmem:[%s36 + $0x950] sm:$0xff]
        %635 = vst [vmem:[%s37 + $0x950] sm:$0xff] %v634
        %v636 = vld [vmem:[%s36 + $0x958] sm:$0xff]
        %637 = vst [vmem:[%s37 + $0x958] sm:$0xff] %v636
        %v638 = vld [vmem:[%s36 + $0x960] sm:$0xff]
        %639 = vst [vmem:[%s37 + $0x960] sm:$0xff] %v638
        %v640 = vld [vmem:[%s36 + $0x968] sm:$0xff]
        %641 = vst [vmem:[%s37 + $0x968] sm:$0xff] %v640
        %v642 = vld [vmem:[%s36 + $0x970] sm:$0xff]
        %643 = vst [vmem:[%s37 + $0x970] sm:$0xff] %v642
        %v644 = vld [vmem:[%s36 + $0x978] sm:$0xff]
        %645 = vst [vmem:[%s37 + $0x978] sm:$0xff] %v644
        %v646 = vld [vmem:[%s36 + $0x980] sm:$0xff]
        %647 = vst [vmem:[%s37 + $0x980] sm:$0xff] %v646
        %v648 = vld [vmem:[%s36 + $0x988] sm:$0xff]
        %649 = vst [vmem:[%s37 + $0x988] sm:$0xff] %v648
        %v650 = vld [vmem:[%s36 + $0x990] sm:$0xff]
        %651 = vst [vmem:[%s37 + $0x990] sm:$0xff] %v650
        %v652 = vld [vmem:[%s36 + $0x998] sm:$0xff]
        %653 = vst [vmem:[%s37 + $0x998] sm:$0xff] %v652
        %v654 = vld [vmem:[%s36 + $0x9a0] sm:$0xff]
        %655 = vst [vmem:[%s37 + $0x9a0] sm:$0xff] %v654
        %v656 = vld [vmem:[%s36 + $0x9a8] sm:$0xff]
        %657 = vst [vmem:[%s37 + $0x9a8] sm:$0xff] %v656
        %v658 = vld [vmem:[%s36 + $0x9b0] sm:$0xff]
        %659 = vst [vmem:[%s37 + $0x9b0] sm:$0xff] %v658
        %v660 = vld [vmem:[%s36 + $0x9b8] sm:$0xff]
        %661 = vst [vmem:[%s37 + $0x9b8] sm:$0xff] %v660
        %v662 = vld [vmem:[%s36 + $0x9c0] sm:$0xff]
        %663 = vst [vmem:[%s37 + $0x9c0] sm:$0xff] %v662
        %v664 = vld [vmem:[%s36 + $0x9c8] sm:$0xff]
        %665 = vst [vmem:[%s37 + $0x9c8] sm:$0xff] %v664
        %v666 = vld [vmem:[%s36 + $0x9d0] sm:$0xff]
        %667 = vst [vmem:[%s37 + $0x9d0] sm:$0xff] %v666
        %v668 = vld [vmem:[%s36 + $0x9d8] sm:$0xff]
        %669 = vst [vmem:[%s37 + $0x9d8] sm:$0xff] %v668
        %v670 = vld [vmem:[%s36 + $0x9e0] sm:$0xff]
        %671 = vst [vmem:[%s37 + $0x9e0] sm:$0xff] %v670
        %v672 = vld [vmem:[%s36 + $0x9e8] sm:$0xff]
        %673 = vst [vmem:[%s37 + $0x9e8] sm:$0xff] %v672
        %v674 = vld [vmem:[%s36 + $0x9f0] sm:$0xff]
        %675 = vst [vmem:[%s37 + $0x9f0] sm:$0xff] %v674
        %v676 = vld [vmem:[%s36 + $0x9f8] sm:$0xff]
        %677 = vst [vmem:[%s37 + $0x9f8] sm:$0xff] %v676
        %v678 = vld [vmem:[%s36 + $0xa00] sm:$0xff]
        %679 = vst [vmem:[%s37 + $0xa00] sm:$0xff] %v678
        %v680 = vld [vmem:[%s36 + $0xa08] sm:$0xff]
        %681 = vst [vmem:[%s37 + $0xa08] sm:$0xff] %v680
        %v682 = vld [vmem:[%s36 + $0xa10] sm:$0xff]
        %683 = vst [vmem:[%s37 + $0xa10] sm:$0xff] %v682
        %v684 = vld [vmem:[%s36 + $0xa18] sm:$0xff]
        %685 = vst [vmem:[%s37 + $0xa18] sm:$0xff] %v684
        %v686 = vld [vmem:[%s36 + $0xa20] sm:$0xff]
        %687 = vst [vmem:[%s37 + $0xa20] sm:$0xff] %v686
        %v688 = vld [vmem:[%s36 + $0xa28] sm:$0xff]
        %689 = vst [vmem:[%s37 + $0xa28] sm:$0xff] %v688
        %v690 = vld [vmem:[%s36 + $0xa30] sm:$0xff]
        %691 = vst [vmem:[%s37 + $0xa30] sm:$0xff] %v690
        %v692 = vld [vmem:[%s36 + $0xa38] sm:$0xff]
        %693 = vst [vmem:[%s37 + $0xa38] sm:$0xff] %v692
        %v694 = vld [vmem:[%s36 + $0xa40] sm:$0xff]
        %695 = vst [vmem:[%s37 + $0xa40] sm:$0xff] %v694
        %v696 = vld [vmem:[%s36 + $0xa48] sm:$0xff]
        %697 = vst [vmem:[%s37 + $0xa48] sm:$0xff] %v696
        %v698 = vld [vmem:[%s36 + $0xa50] sm:$0xff]
        %699 = vst [vmem:[%s37 + $0xa50] sm:$0xff] %v698
        %v700 = vld [vmem:[%s36 + $0xa58] sm:$0xff]
        %701 = vst [vmem:[%s37 + $0xa58] sm:$0xff] %v700
        %v702 = vld [vmem:[%s36 + $0xa60] sm:$0xff]
        %703 = vst [vmem:[%s37 + $0xa60] sm:$0xff] %v702
        %v704 = vld [vmem:[%s36 + $0xa68] sm:$0xff]
        %705 = vst [vmem:[%s37 + $0xa68] sm:$0xff] %v704
        %v706 = vld [vmem:[%s36 + $0xa70] sm:$0xff]
        %707 = vst [vmem:[%s37 + $0xa70] sm:$0xff] %v706
        %v708 = vld [vmem:[%s36 + $0xa78] sm:$0xff]
        %709 = vst [vmem:[%s37 + $0xa78] sm:$0xff] %v708
        %v710 = vld [vmem:[%s36 + $0xa80] sm:$0xff]
        %711 = vst [vmem:[%s37 + $0xa80] sm:$0xff] %v710
        %v712 = vld [vmem:[%s36 + $0xa88] sm:$0xff]
        %713 = vst [vmem:[%s37 + $0xa88] sm:$0xff] %v712
        %v714 = vld [vmem:[%s36 + $0xa90] sm:$0xff]
        %715 = vst [vmem:[%s37 + $0xa90] sm:$0xff] %v714
        %v716 = vld [vmem:[%s36 + $0xa98] sm:$0xff]
        %717 = vst [vmem:[%s37 + $0xa98] sm:$0xff] %v716
        %v718 = vld [vmem:[%s36 + $0xaa0] sm:$0xff]
        %719 = vst [vmem:[%s37 + $0xaa0] sm:$0xff] %v718
        %v720 = vld [vmem:[%s36 + $0xaa8] sm:$0xff]
        %721 = vst [vmem:[%s37 + $0xaa8] sm:$0xff] %v720
        %v722 = vld [vmem:[%s36 + $0xab0] sm:$0xff]
        %723 = vst [vmem:[%s37 + $0xab0] sm:$0xff] %v722
        %v724 = vld [vmem:[%s36 + $0xab8] sm:$0xff]
        %725 = vst [vmem:[%s37 + $0xab8] sm:$0xff] %v724
        %v726 = vld [vmem:[%s36 + $0xac0] sm:$0xff]
        %727 = vst [vmem:[%s37 + $0xac0] sm:$0xff] %v726
        %v728 = vld [vmem:[%s36 + $0xac8] sm:$0xff]
        %729 = vst [vmem:[%s37 + $0xac8] sm:$0xff] %v728
        %v730 = vld [vmem:[%s36 + $0xad0] sm:$0xff]
        %731 = vst [vmem:[%s37 + $0xad0] sm:$0xff] %v730
        %v732 = vld [vmem:[%s36 + $0xad8] sm:$0xff]
        %733 = vst [vmem:[%s37 + $0xad8] sm:$0xff] %v732
        %v734 = vld [vmem:[%s36 + $0xae0] sm:$0xff]
        %735 = vst [vmem:[%s37 + $0xae0] sm:$0xff] %v734
        %v736 = vld [vmem:[%s36 + $0xae8] sm:$0xff]
        %737 = vst [vmem:[%s37 + $0xae8] sm:$0xff] %v736
        %v738 = vld [vmem:[%s36 + $0xaf0] sm:$0xff]
        %739 = vst [vmem:[%s37 + $0xaf0] sm:$0xff] %v738
        %v740 = vld [vmem:[%s36 + $0xaf8] sm:$0xff]
        %741 = vst [vmem:[%s37 + $0xaf8] sm:$0xff] %v740
        %v742 = vld [vmem:[%s36 + $0xb00] sm:$0xff]
        %743 = vst [vmem:[%s37 + $0xb00] sm:$0xff] %v742
        %v744 = vld [vmem:[%s36 + $0xb08] sm:$0xff]
        %745 = vst [vmem:[%s37 + $0xb08] sm:$0xff] %v744
        %v746 = vld [vmem:[%s36 + $0xb10] sm:$0xff]
        %747 = vst [vmem:[%s37 + $0xb10] sm:$0xff] %v746
        %v748 = vld [vmem:[%s36 + $0xb18] sm:$0xff]
        %749 = vst [vmem:[%s37 + $0xb18] sm:$0xff] %v748
        %v750 = vld [vmem:[%s36 + $0xb20] sm:$0xff]
        %751 = vst [vmem:[%s37 + $0xb20] sm:$0xff] %v750
        %v752 = vld [vmem:[%s36 + $0xb28] sm:$0xff]
        %753 = vst [vmem:[%s37 + $0xb28] sm:$0xff] %v752
        %v754 = vld [vmem:[%s36 + $0xb30] sm:$0xff]
        %755 = vst [vmem:[%s37 + $0xb30] sm:$0xff] %v754
        %v756 = vld [vmem:[%s36 + $0xb38] sm:$0xff]
        %757 = vst [vmem:[%s37 + $0xb38] sm:$0xff] %v756
        %v758 = vld [vmem:[%s36 + $0xb40] sm:$0xff]
        %759 = vst [vmem:[%s37 + $0xb40] sm:$0xff] %v758
        %v760 = vld [vmem:[%s36 + $0xb48] sm:$0xff]
        %761 = vst [vmem:[%s37 + $0xb48] sm:$0xff] %v760
        %v762 = vld [vmem:[%s36 + $0xb50] sm:$0xff]
        %763 = vst [vmem:[%s37 + $0xb50] sm:$0xff] %v762
        %v764 = vld [vmem:[%s36 + $0xb58] sm:$0xff]
        %765 = vst [vmem:[%s37 + $0xb58] sm:$0xff] %v764
        %v766 = vld [vmem:[%s36 + $0xb60] sm:$0xff]
        %767 = vst [vmem:[%s37 + $0xb60] sm:$0xff] %v766
        %v768 = vld [vmem:[%s36 + $0xb68] sm:$0xff]
        %769 = vst [vmem:[%s37 + $0xb68] sm:$0xff] %v768
        %v770 = vld [vmem:[%s36 + $0xb70] sm:$0xff]
        %771 = vst [vmem:[%s37 + $0xb70] sm:$0xff] %v770
        %v772 = vld [vmem:[%s36 + $0xb78] sm:$0xff]
        %773 = vst [vmem:[%s37 + $0xb78] sm:$0xff] %v772
        %v774 = vld [vmem:[%s36 + $0xb80] sm:$0xff]
        %775 = vst [vmem:[%s37 + $0xb80] sm:$0xff] %v774
        %v776 = vld [vmem:[%s36 + $0xb88] sm:$0xff]
        %777 = vst [vmem:[%s37 + $0xb88] sm:$0xff] %v776
        %v778 = vld [vmem:[%s36 + $0xb90] sm:$0xff]
        %779 = vst [vmem:[%s37 + $0xb90] sm:$0xff] %v778
        %v780 = vld [vmem:[%s36 + $0xb98] sm:$0xff]
        %781 = vst [vmem:[%s37 + $0xb98] sm:$0xff] %v780
        %v782 = vld [vmem:[%s36 + $0xba0] sm:$0xff]
        %783 = vst [vmem:[%s37 + $0xba0] sm:$0xff] %v782
        %v784 = vld [vmem:[%s36 + $0xba8] sm:$0xff]
        %785 = vst [vmem:[%s37 + $0xba8] sm:$0xff] %v784
        %v786 = vld [vmem:[%s36 + $0xbb0] sm:$0xff]
        %787 = vst [vmem:[%s37 + $0xbb0] sm:$0xff] %v786
        %v788 = vld [vmem:[%s36 + $0xbb8] sm:$0xff]
        %789 = vst [vmem:[%s37 + $0xbb8] sm:$0xff] %v788
        %v790 = vld [vmem:[%s36 + $0xbc0] sm:$0xff]
        %791 = vst [vmem:[%s37 + $0xbc0] sm:$0xff] %v790
        %v792 = vld [vmem:[%s36 + $0xbc8] sm:$0xff]
        %793 = vst [vmem:[%s37 + $0xbc8] sm:$0xff] %v792
        %v794 = vld [vmem:[%s36 + $0xbd0] sm:$0xff]
        %795 = vst [vmem:[%s37 + $0xbd0] sm:$0xff] %v794
        %v796 = vld [vmem:[%s36 + $0xbd8] sm:$0xff]
        %797 = vst [vmem:[%s37 + $0xbd8] sm:$0xff] %v796
        %v798 = vld [vmem:[%s36 + $0xbe0] sm:$0xff]
        %799 = vst [vmem:[%s37 + $0xbe0] sm:$0xff] %v798
        %v800 = vld [vmem:[%s36 + $0xbe8] sm:$0xff]
        %801 = vst [vmem:[%s37 + $0xbe8] sm:$0xff] %v800
        %v802 = vld [vmem:[%s36 + $0xbf0] sm:$0xff]
        %803 = vst [vmem:[%s37 + $0xbf0] sm:$0xff] %v802
        %v804 = vld [vmem:[%s36 + $0xbf8] sm:$0xff]
        %805 = vst [vmem:[%s37 + $0xbf8] sm:$0xff] %v804
        %v806 = vld [vmem:[%s36 + $0xc00] sm:$0xff]
        %807 = vst [vmem:[%s37 + $0xc00] sm:$0xff] %v806
        %v808 = vld [vmem:[%s36 + $0xc08] sm:$0xff]
        %809 = vst [vmem:[%s37 + $0xc08] sm:$0xff] %v808
        %v810 = vld [vmem:[%s36 + $0xc10] sm:$0xff]
        %811 = vst [vmem:[%s37 + $0xc10] sm:$0xff] %v810
        %v812 = vld [vmem:[%s36 + $0xc18] sm:$0xff]
        %813 = vst [vmem:[%s37 + $0xc18] sm:$0xff] %v812
        %v814 = vld [vmem:[%s36 + $0xc20] sm:$0xff]
        %815 = vst [vmem:[%s37 + $0xc20] sm:$0xff] %v814
        %v816 = vld [vmem:[%s36 + $0xc28] sm:$0xff]
        %817 = vst [vmem:[%s37 + $0xc28] sm:$0xff] %v816
        %v818 = vld [vmem:[%s36 + $0xc30] sm:$0xff]
        %819 = vst [vmem:[%s37 + $0xc30] sm:$0xff] %v818
        %v820 = vld [vmem:[%s36 + $0xc38] sm:$0xff]
        %821 = vst [vmem:[%s37 + $0xc38] sm:$0xff] %v820
        %v822 = vld [vmem:[%s36 + $0xc40] sm:$0xff]
        %823 = vst [vmem:[%s37 + $0xc40] sm:$0xff] %v822
        %v824 = vld [vmem:[%s36 + $0xc48] sm:$0xff]
        %825 = vst [vmem:[%s37 + $0xc48] sm:$0xff] %v824
        %v826 = vld [vmem:[%s36 + $0xc50] sm:$0xff]
        %827 = vst [vmem:[%s37 + $0xc50] sm:$0xff] %v826
        %v828 = vld [vmem:[%s36 + $0xc58] sm:$0xff]
        %829 = vst [vmem:[%s37 + $0xc58] sm:$0xff] %v828
        %v830 = vld [vmem:[%s36 + $0xc60] sm:$0xff]
        %831 = vst [vmem:[%s37 + $0xc60] sm:$0xff] %v830
        %v832 = vld [vmem:[%s36 + $0xc68] sm:$0xff]
        %833 = vst [vmem:[%s37 + $0xc68] sm:$0xff] %v832
        %v834 = vld [vmem:[%s36 + $0xc70] sm:$0xff]
        %835 = vst [vmem:[%s37 + $0xc70] sm:$0xff] %v834
        %v836 = vld [vmem:[%s36 + $0xc78] sm:$0xff]
        %837 = vst [vmem:[%s37 + $0xc78] sm:$0xff] %v836
        %v838 = vld [vmem:[%s36 + $0xc80] sm:$0xff]
        %839 = vst [vmem:[%s37 + $0xc80] sm:$0xff] %v838
        %v840 = vld [vmem:[%s36 + $0xc88] sm:$0xff]
        %841 = vst [vmem:[%s37 + $0xc88] sm:$0xff] %v840
        %v842 = vld [vmem:[%s36 + $0xc90] sm:$0xff]
        %843 = vst [vmem:[%s37 + $0xc90] sm:$0xff] %v842
        %v844 = vld [vmem:[%s36 + $0xc98] sm:$0xff]
        %845 = vst [vmem:[%s37 + $0xc98] sm:$0xff] %v844
        %v846 = vld [vmem:[%s36 + $0xca0] sm:$0xff]
        %847 = vst [vmem:[%s37 + $0xca0] sm:$0xff] %v846
        %v848 = vld [vmem:[%s36 + $0xca8] sm:$0xff]
        %849 = vst [vmem:[%s37 + $0xca8] sm:$0xff] %v848
        %v850 = vld [vmem:[%s36 + $0xcb0] sm:$0xff]
        %851 = vst [vmem:[%s37 + $0xcb0] sm:$0xff] %v850
        %v852 = vld [vmem:[%s36 + $0xcb8] sm:$0xff]
        %853 = vst [vmem:[%s37 + $0xcb8] sm:$0xff] %v852
        %v854 = vld [vmem:[%s36 + $0xcc0] sm:$0xff]
        %855 = vst [vmem:[%s37 + $0xcc0] sm:$0xff] %v854
        %v856 = vld [vmem:[%s36 + $0xcc8] sm:$0xff]
        %857 = vst [vmem:[%s37 + $0xcc8] sm:$0xff] %v856
        %v858 = vld [vmem:[%s36 + $0xcd0] sm:$0xff]
        %859 = vst [vmem:[%s37 + $0xcd0] sm:$0xff] %v858
        %v860 = vld [vmem:[%s36 + $0xcd8] sm:$0xff]
        %861 = vst [vmem:[%s37 + $0xcd8] sm:$0xff] %v860
        %v862 = vld [vmem:[%s36 + $0xce0] sm:$0xff]
        %863 = vst [vmem:[%s37 + $0xce0] sm:$0xff] %v862
        %v864 = vld [vmem:[%s36 + $0xce8] sm:$0xff]
        %865 = vst [vmem:[%s37 + $0xce8] sm:$0xff] %v864
        %v866 = vld [vmem:[%s36 + $0xcf0] sm:$0xff]
        %867 = vst [vmem:[%s37 + $0xcf0] sm:$0xff] %v866
        %v868 = vld [vmem:[%s36 + $0xcf8] sm:$0xff]
        %869 = vst [vmem:[%s37 + $0xcf8] sm:$0xff] %v868
        %v870 = vld [vmem:[%s36 + $0xd00] sm:$0xff]
        %871 = vst [vmem:[%s37 + $0xd00] sm:$0xff] %v870
        %v872 = vld [vmem:[%s36 + $0xd08] sm:$0xff]
        %873 = vst [vmem:[%s37 + $0xd08] sm:$0xff] %v872
        %v874 = vld [vmem:[%s36 + $0xd10] sm:$0xff]
        %875 = vst [vmem:[%s37 + $0xd10] sm:$0xff] %v874
        %v876 = vld [vmem:[%s36 + $0xd18] sm:$0xff]
        %877 = vst [vmem:[%s37 + $0xd18] sm:$0xff] %v876
        %v878 = vld [vmem:[%s36 + $0xd20] sm:$0xff]
        %879 = vst [vmem:[%s37 + $0xd20] sm:$0xff] %v878
        %v880 = vld [vmem:[%s36 + $0xd28] sm:$0xff]
        %881 = vst [vmem:[%s37 + $0xd28] sm:$0xff] %v880
        %v882 = vld [vmem:[%s36 + $0xd30] sm:$0xff]
        %883 = vst [vmem:[%s37 + $0xd30] sm:$0xff] %v882
        %v884 = vld [vmem:[%s36 + $0xd38] sm:$0xff]
        %885 = vst [vmem:[%s37 + $0xd38] sm:$0xff] %v884
        %v886 = vld [vmem:[%s36 + $0xd40] sm:$0xff]
        %887 = vst [vmem:[%s37 + $0xd40] sm:$0xff] %v886
        %v888 = vld [vmem:[%s36 + $0xd48] sm:$0xff]
        %889 = vst [vmem:[%s37 + $0xd48] sm:$0xff] %v888
        %v890 = vld [vmem:[%s36 + $0xd50] sm:$0xff]
        %891 = vst [vmem:[%s37 + $0xd50] sm:$0xff] %v890
        %v892 = vld [vmem:[%s36 + $0xd58] sm:$0xff]
        %893 = vst [vmem:[%s37 + $0xd58] sm:$0xff] %v892
        %v894 = vld [vmem:[%s36 + $0xd60] sm:$0xff]
        %895 = vst [vmem:[%s37 + $0xd60] sm:$0xff] %v894
        %v896 = vld [vmem:[%s36 + $0xd68] sm:$0xff]
        %897 = vst [vmem:[%s37 + $0xd68] sm:$0xff] %v896
        %v898 = vld [vmem:[%s36 + $0xd70] sm:$0xff]
        %899 = vst [vmem:[%s37 + $0xd70] sm:$0xff] %v898
        %v900 = vld [vmem:[%s36 + $0xd78] sm:$0xff]
        %901 = vst [vmem:[%s37 + $0xd78] sm:$0xff] %v900
        %v902 = vld [vmem:[%s36 + $0xd80] sm:$0xff]
        %903 = vst [vmem:[%s37 + $0xd80] sm:$0xff] %v902
        %v904 = vld [vmem:[%s36 + $0xd88] sm:$0xff]
        %905 = vst [vmem:[%s37 + $0xd88] sm:$0xff] %v904
        %v906 = vld [vmem:[%s36 + $0xd90] sm:$0xff]
        %907 = vst [vmem:[%s37 + $0xd90] sm:$0xff] %v906
        %v908 = vld [vmem:[%s36 + $0xd98] sm:$0xff]
        %909 = vst [vmem:[%s37 + $0xd98] sm:$0xff] %v908
        %v910 = vld [vmem:[%s36 + $0xda0] sm:$0xff]
        %911 = vst [vmem:[%s37 + $0xda0] sm:$0xff] %v910
        %v912 = vld [vmem:[%s36 + $0xda8] sm:$0xff]
        %913 = vst [vmem:[%s37 + $0xda8] sm:$0xff] %v912
        %v914 = vld [vmem:[%s36 + $0xdb0] sm:$0xff]
        %915 = vst [vmem:[%s37 + $0xdb0] sm:$0xff] %v914
        %v916 = vld [vmem:[%s36 + $0xdb8] sm:$0xff]
        %917 = vst [vmem:[%s37 + $0xdb8] sm:$0xff] %v916
        %v918 = vld [vmem:[%s36 + $0xdc0] sm:$0xff]
        %919 = vst [vmem:[%s37 + $0xdc0] sm:$0xff] %v918
        %v920 = vld [vmem:[%s36 + $0xdc8] sm:$0xff]
        %921 = vst [vmem:[%s37 + $0xdc8] sm:$0xff] %v920
        %v922 = vld [vmem:[%s36 + $0xdd0] sm:$0xff]
        %923 = vst [vmem:[%s37 + $0xdd0] sm:$0xff] %v922
        %v924 = vld [vmem:[%s36 + $0xdd8] sm:$0xff]
        %925 = vst [vmem:[%s37 + $0xdd8] sm:$0xff] %v924
        %v926 = vld [vmem:[%s36 + $0xde0] sm:$0xff]
        %927 = vst [vmem:[%s37 + $0xde0] sm:$0xff] %v926
        %v928 = vld [vmem:[%s36 + $0xde8] sm:$0xff]
        %929 = vst [vmem:[%s37 + $0xde8] sm:$0xff] %v928
        %v930 = vld [vmem:[%s36 + $0xdf0] sm:$0xff]
        %931 = vst [vmem:[%s37 + $0xdf0] sm:$0xff] %v930
        %v932 = vld [vmem:[%s36 + $0xdf8] sm:$0xff]
        %933 = vst [vmem:[%s37 + $0xdf8] sm:$0xff] %v932
        %v934 = vld [vmem:[%s36 + $0xe00] sm:$0xff]
        %935 = vst [vmem:[%s37 + $0xe00] sm:$0xff] %v934
        %v936 = vld [vmem:[%s36 + $0xe08] sm:$0xff]
        %937 = vst [vmem:[%s37 + $0xe08] sm:$0xff] %v936
        %v938 = vld [vmem:[%s36 + $0xe10] sm:$0xff]
        %939 = vst [vmem:[%s37 + $0xe10] sm:$0xff] %v938
        %v940 = vld [vmem:[%s36 + $0xe18] sm:$0xff]
        %941 = vst [vmem:[%s37 + $0xe18] sm:$0xff] %v940
        %v942 = vld [vmem:[%s36 + $0xe20] sm:$0xff]
        %943 = vst [vmem:[%s37 + $0xe20] sm:$0xff] %v942
        %v944 = vld [vmem:[%s36 + $0xe28] sm:$0xff]
        %945 = vst [vmem:[%s37 + $0xe28] sm:$0xff] %v944
        %v946 = vld [vmem:[%s36 + $0xe30] sm:$0xff]
        %947 = vst [vmem:[%s37 + $0xe30] sm:$0xff] %v946
        %v948 = vld [vmem:[%s36 + $0xe38] sm:$0xff]
        %949 = vst [vmem:[%s37 + $0xe38] sm:$0xff] %v948
        %v950 = vld [vmem:[%s36 + $0xe40] sm:$0xff]
        %951 = vst [vmem:[%s37 + $0xe40] sm:$0xff] %v950
        %v952 = vld [vmem:[%s36 + $0xe48] sm:$0xff]
        %953 = vst [vmem:[%s37 + $0xe48] sm:$0xff] %v952
        %v954 = vld [vmem:[%s36 + $0xe50] sm:$0xff]
        %955 = vst [vmem:[%s37 + $0xe50] sm:$0xff] %v954
        %v956 = vld [vmem:[%s36 + $0xe58] sm:$0xff]
        %957 = vst [vmem:[%s37 + $0xe58] sm:$0xff] %v956
        %v958 = vld [vmem:[%s36 + $0xe60] sm:$0xff]
        %959 = vst [vmem:[%s37 + $0xe60] sm:$0xff] %v958
        %v960 = vld [vmem:[%s36 + $0xe68] sm:$0xff]
        %961 = vst [vmem:[%s37 + $0xe68] sm:$0xff] %v960
        %v962 = vld [vmem:[%s36 + $0xe70] sm:$0xff]
        %963 = vst [vmem:[%s37 + $0xe70] sm:$0xff] %v962
        %v964 = vld [vmem:[%s36 + $0xe78] sm:$0xff]
        %965 = vst [vmem:[%s37 + $0xe78] sm:$0xff] %v964
        %v966 = vld [vmem:[%s36 + $0xe80] sm:$0xff]
        %967 = vst [vmem:[%s37 + $0xe80] sm:$0xff] %v966
        %v968 = vld [vmem:[%s36 + $0xe88] sm:$0xff]
        %969 = vst [vmem:[%s37 + $0xe88] sm:$0xff] %v968
        %v970 = vld [vmem:[%s36 + $0xe90] sm:$0xff]
        %971 = vst [vmem:[%s37 + $0xe90] sm:$0xff] %v970
        %v972 = vld [vmem:[%s36 + $0xe98] sm:$0xff]
        %973 = vst [vmem:[%s37 + $0xe98] sm:$0xff] %v972
        %v974 = vld [vmem:[%s36 + $0xea0] sm:$0xff]
        %975 = vst [vmem:[%s37 + $0xea0] sm:$0xff] %v974
        %v976 = vld [vmem:[%s36 + $0xea8] sm:$0xff]
        %977 = vst [vmem:[%s37 + $0xea8] sm:$0xff] %v976
        %v978 = vld [vmem:[%s36 + $0xeb0] sm:$0xff]
        %979 = vst [vmem:[%s37 + $0xeb0] sm:$0xff] %v978
        %v980 = vld [vmem:[%s36 + $0xeb8] sm:$0xff]
        %981 = vst [vmem:[%s37 + $0xeb8] sm:$0xff] %v980
        %v982 = vld [vmem:[%s36 + $0xec0] sm:$0xff]
        %983 = vst [vmem:[%s37 + $0xec0] sm:$0xff] %v982
        %v984 = vld [vmem:[%s36 + $0xec8] sm:$0xff]
        %985 = vst [vmem:[%s37 + $0xec8] sm:$0xff] %v984
        %v986 = vld [vmem:[%s36 + $0xed0] sm:$0xff]
        %987 = vst [vmem:[%s37 + $0xed0] sm:$0xff] %v986
        %v988 = vld [vmem:[%s36 + $0xed8] sm:$0xff]
        %989 = vst [vmem:[%s37 + $0xed8] sm:$0xff] %v988
        %v990 = vld [vmem:[%s36 + $0xee0] sm:$0xff]
        %991 = vst [vmem:[%s37 + $0xee0] sm:$0xff] %v990
        %v992 = vld [vmem:[%s36 + $0xee8] sm:$0xff]
        %993 = vst [vmem:[%s37 + $0xee8] sm:$0xff] %v992
        %v994 = vld [vmem:[%s36 + $0xef0] sm:$0xff]
        %995 = vst [vmem:[%s37 + $0xef0] sm:$0xff] %v994
        %v996 = vld [vmem:[%s36 + $0xef8] sm:$0xff]
        %997 = vst [vmem:[%s37 + $0xef8] sm:$0xff] %v996
        %v998 = vld [vmem:[%s36 + $0xf00] sm:$0xff]
        %999 = vst [vmem:[%s37 + $0xf00] sm:$0xff] %v998
        %v1000 = vld [vmem:[%s36 + $0xf08] sm:$0xff]
        %1001 = vst [vmem:[%s37 + $0xf08] sm:$0xff] %v1000
        %v1002 = vld [vmem:[%s36 + $0xf10] sm:$0xff]
        %1003 = vst [vmem:[%s37 + $0xf10] sm:$0xff] %v1002
        %v1004 = vld [vmem:[%s36 + $0xf18] sm:$0xff]
        %1005 = vst [vmem:[%s37 + $0xf18] sm:$0xff] %v1004
        %v1006 = vld [vmem:[%s36 + $0xf20] sm:$0xff]
        %1007 = vst [vmem:[%s37 + $0xf20] sm:$0xff] %v1006
        %v1008 = vld [vmem:[%s36 + $0xf28] sm:$0xff]
        %1009 = vst [vmem:[%s37 + $0xf28] sm:$0xff] %v1008
        %v1010 = vld [vmem:[%s36 + $0xf30] sm:$0xff]
        %1011 = vst [vmem:[%s37 + $0xf30] sm:$0xff] %v1010
        %v1012 = vld [vmem:[%s36 + $0xf38] sm:$0xff]
        %1013 = vst [vmem:[%s37 + $0xf38] sm:$0xff] %v1012
        %v1014 = vld [vmem:[%s36 + $0xf40] sm:$0xff]
        %1015 = vst [vmem:[%s37 + $0xf40] sm:$0xff] %v1014
        %v1016 = vld [vmem:[%s36 + $0xf48] sm:$0xff]
        %1017 = vst [vmem:[%s37 + $0xf48] sm:$0xff] %v1016
        %v1018 = vld [vmem:[%s36 + $0xf50] sm:$0xff]
        %1019 = vst [vmem:[%s37 + $0xf50] sm:$0xff] %v1018
        %v1020 = vld [vmem:[%s36 + $0xf58] sm:$0xff]
        %1021 = vst [vmem:[%s37 + $0xf58] sm:$0xff] %v1020
        %v1022 = vld [vmem:[%s36 + $0xf60] sm:$0xff]
        %1023 = vst [vmem:[%s37 + $0xf60] sm:$0xff] %v1022
        %v1024 = vld [vmem:[%s36 + $0xf68] sm:$0xff]
        %1025 = vst [vmem:[%s37 + $0xf68] sm:$0xff] %v1024
        %v1026 = vld [vmem:[%s36 + $0xf70] sm:$0xff]
        %1027 = vst [vmem:[%s37 + $0xf70] sm:$0xff] %v1026
        %v1028 = vld [vmem:[%s36 + $0xf78] sm:$0xff]
        %1029 = vst [vmem:[%s37 + $0xf78] sm:$0xff] %v1028
        %v1030 = vld [vmem:[%s36 + $0xf80] sm:$0xff]
        %1031 = vst [vmem:[%s37 + $0xf80] sm:$0xff] %v1030
        %v1032 = vld [vmem:[%s36 + $0xf88] sm:$0xff]
        %1033 = vst [vmem:[%s37 + $0xf88] sm:$0xff] %v1032
        %v1034 = vld [vmem:[%s36 + $0xf90] sm:$0xff]
        %1035 = vst [vmem:[%s37 + $0xf90] sm:$0xff] %v1034
        %v1036 = vld [vmem:[%s36 + $0xf98] sm:$0xff]
        %1037 = vst [vmem:[%s37 + $0xf98] sm:$0xff] %v1036
        %v1038 = vld [vmem:[%s36 + $0xfa0] sm:$0xff]
        %1039 = vst [vmem:[%s37 + $0xfa0] sm:$0xff] %v1038
        %v1040 = vld [vmem:[%s36 + $0xfa8] sm:$0xff]
        %1041 = vst [vmem:[%s37 + $0xfa8] sm:$0xff] %v1040
        %v1042 = vld [vmem:[%s36 + $0xfb0] sm:$0xff]
        %1043 = vst [vmem:[%s37 + $0xfb0] sm:$0xff] %v1042
        %v1044 = vld [vmem:[%s36 + $0xfb8] sm:$0xff]
        %1045 = vst [vmem:[%s37 + $0xfb8] sm:$0xff] %v1044
        %v1046 = vld [vmem:[%s36 + $0xfc0] sm:$0xff]
        %1047 = vst [vmem:[%s37 + $0xfc0] sm:$0xff] %v1046
        %v1048 = vld [vmem:[%s36 + $0xfc8] sm:$0xff]
        %1049 = vst [vmem:[%s37 + $0xfc8] sm:$0xff] %v1048
        %v1050 = vld [vmem:[%s36 + $0xfd0] sm:$0xff]
        %1051 = vst [vmem:[%s37 + $0xfd0] sm:$0xff] %v1050
        %v1052 = vld [vmem:[%s36 + $0xfd8] sm:$0xff]
        %1053 = vst [vmem:[%s37 + $0xfd8] sm:$0xff] %v1052
        %v1054 = vld [vmem:[%s36 + $0xfe0] sm:$0xff]
        %1055 = vst [vmem:[%s37 + $0xfe0] sm:$0xff] %v1054
        %v1056 = vld [vmem:[%s36 + $0xfe8] sm:$0xff]
        %1057 = vst [vmem:[%s37 + $0xfe8] sm:$0xff] %v1056
        %v1058 = vld [vmem:[%s36 + $0xff0] sm:$0xff]
        %1059 = vst [vmem:[%s37 + $0xff0] sm:$0xff] %v1058
        %v1060 = vld [vmem:[%s36 + $0xff8] sm:$0xff]
        %1061 = vst [vmem:[%s37 + $0xff8] sm:$0xff] %v1060
        %v1062 = vld [vmem:[%s36 + $0x1000] sm:$0xff]
        %1063 = vst [vmem:[%s37 + $0x1000] sm:$0xff] %v1062
        %v1064 = vld [vmem:[%s36 + $0x1008] sm:$0xff]
        %1065 = vst [vmem:[%s37 + $0x1008] sm:$0xff] %v1064
        %v1066 = vld [vmem:[%s36 + $0x1010] sm:$0xff]
        %1067 = vst [vmem:[%s37 + $0x1010] sm:$0xff] %v1066
        %v1068 = vld [vmem:[%s36 + $0x1018] sm:$0xff]
        %1069 = vst [vmem:[%s37 + $0x1018] sm:$0xff] %v1068
        %v1070 = vld [vmem:[%s36 + $0x1020] sm:$0xff]
        %1071 = vst [vmem:[%s37 + $0x1020] sm:$0xff] %v1070
        %v1072 = vld [vmem:[%s36 + $0x1028] sm:$0xff]
        %1073 = vst [vmem:[%s37 + $0x1028] sm:$0xff] %v1072
        %v1074 = vld [vmem:[%s36 + $0x1030] sm:$0xff]
        %1075 = vst [vmem:[%s37 + $0x1030] sm:$0xff] %v1074
        %v1076 = vld [vmem:[%s36 + $0x1038] sm:$0xff]
        %1077 = vst [vmem:[%s37 + $0x1038] sm:$0xff] %v1076
        %v1078 = vld [vmem:[%s36 + $0x1040] sm:$0xff]
        %1079 = vst [vmem:[%s37 + $0x1040] sm:$0xff] %v1078
        %v1080 = vld [vmem:[%s36 + $0x1048] sm:$0xff]
        %1081 = vst [vmem:[%s37 + $0x1048] sm:$0xff] %v1080
        %v1082 = vld [vmem:[%s36 + $0x1050] sm:$0xff]
        %1083 = vst [vmem:[%s37 + $0x1050] sm:$0xff] %v1082
        %v1084 = vld [vmem:[%s36 + $0x1058] sm:$0xff]
        %1085 = vst [vmem:[%s37 + $0x1058] sm:$0xff] %v1084
        %v1086 = vld [vmem:[%s36 + $0x1060] sm:$0xff]
        %1087 = vst [vmem:[%s37 + $0x1060] sm:$0xff] %v1086
        %v1088 = vld [vmem:[%s36 + $0x1068] sm:$0xff]
        %1089 = vst [vmem:[%s37 + $0x1068] sm:$0xff] %v1088
        %v1090 = vld [vmem:[%s36 + $0x1070] sm:$0xff]
        %1091 = vst [vmem:[%s37 + $0x1070] sm:$0xff] %v1090
        %v1092 = vld [vmem:[%s36 + $0x1078] sm:$0xff]
        %1093 = vst [vmem:[%s37 + $0x1078] sm:$0xff] %v1092
        %v1094 = vld [vmem:[%s36 + $0x1080] sm:$0xff]
        %1095 = vst [vmem:[%s37 + $0x1080] sm:$0xff] %v1094
        %v1096 = vld [vmem:[%s36 + $0x1088] sm:$0xff]
        %1097 = vst [vmem:[%s37 + $0x1088] sm:$0xff] %v1096
        %v1098 = vld [vmem:[%s36 + $0x1090] sm:$0xff]
        %1099 = vst [vmem:[%s37 + $0x1090] sm:$0xff] %v1098
        %v1100 = vld [vmem:[%s36 + $0x1098] sm:$0xff]
        %1101 = vst [vmem:[%s37 + $0x1098] sm:$0xff] %v1100
        %v1102 = vld [vmem:[%s36 + $0x10a0] sm:$0xff]
        %1103 = vst [vmem:[%s37 + $0x10a0] sm:$0xff] %v1102
        %v1104 = vld [vmem:[%s36 + $0x10a8] sm:$0xff]
        %1105 = vst [vmem:[%s37 + $0x10a8] sm:$0xff] %v1104
        %v1106 = vld [vmem:[%s36 + $0x10b0] sm:$0xff]
        %1107 = vst [vmem:[%s37 + $0x10b0] sm:$0xff] %v1106
        %v1108 = vld [vmem:[%s36 + $0x10b8] sm:$0xff]
        %1109 = vst [vmem:[%s37 + $0x10b8] sm:$0xff] %v1108
        %v1110 = vld [vmem:[%s36 + $0x10c0] sm:$0xff]
        %1111 = vst [vmem:[%s37 + $0x10c0] sm:$0xff] %v1110
        %v1112 = vld [vmem:[%s36 + $0x10c8] sm:$0xff]
        %1113 = vst [vmem:[%s37 + $0x10c8] sm:$0xff] %v1112
        %v1114 = vld [vmem:[%s36 + $0x10d0] sm:$0xff]
        %1115 = vst [vmem:[%s37 + $0x10d0] sm:$0xff] %v1114
        %v1116 = vld [vmem:[%s36 + $0x10d8] sm:$0xff]
        %1117 = vst [vmem:[%s37 + $0x10d8] sm:$0xff] %v1116
        %v1118 = vld [vmem:[%s36 + $0x10e0] sm:$0xff]
        %1119 = vst [vmem:[%s37 + $0x10e0] sm:$0xff] %v1118
        %v1120 = vld [vmem:[%s36 + $0x10e8] sm:$0xff]
        %1121 = vst [vmem:[%s37 + $0x10e8] sm:$0xff] %v1120
        %v1122 = vld [vmem:[%s36 + $0x10f0] sm:$0xff]
        %1123 = vst [vmem:[%s37 + $0x10f0] sm:$0xff] %v1122
        %v1124 = vld [vmem:[%s36 + $0x10f8] sm:$0xff]
        %1125 = vst [vmem:[%s37 + $0x10f8] sm:$0xff] %v1124
        %v1126 = vld [vmem:[%s36 + $0x1100] sm:$0xff]
        %1127 = vst [vmem:[%s37 + $0x1100] sm:$0xff] %v1126
        %v1128 = vld [vmem:[%s36 + $0x1108] sm:$0xff]
        %1129 = vst [vmem:[%s37 + $0x1108] sm:$0xff] %v1128
        %v1130 = vld [vmem:[%s36 + $0x1110] sm:$0xff]
        %1131 = vst [vmem:[%s37 + $0x1110] sm:$0xff] %v1130
        %v1132 = vld [vmem:[%s36 + $0x1118] sm:$0xff]
        %1133 = vst [vmem:[%s37 + $0x1118] sm:$0xff] %v1132
        %v1134 = vld [vmem:[%s36 + $0x1120] sm:$0xff]
        %1135 = vst [vmem:[%s37 + $0x1120] sm:$0xff] %v1134
        %v1136 = vld [vmem:[%s36 + $0x1128] sm:$0xff]
        %1137 = vst [vmem:[%s37 + $0x1128] sm:$0xff] %v1136
        %v1138 = vld [vmem:[%s36 + $0x1130] sm:$0xff]
        %1139 = vst [vmem:[%s37 + $0x1130] sm:$0xff] %v1138
        %v1140 = vld [vmem:[%s36 + $0x1138] sm:$0xff]
        %1141 = vst [vmem:[%s37 + $0x1138] sm:$0xff] %v1140
        %v1142 = vld [vmem:[%s36 + $0x1140] sm:$0xff]
        %1143 = vst [vmem:[%s37 + $0x1140] sm:$0xff] %v1142
        %v1144 = vld [vmem:[%s36 + $0x1148] sm:$0xff]
        %1145 = vst [vmem:[%s37 + $0x1148] sm:$0xff] %v1144
        %v1146 = vld [vmem:[%s36 + $0x1150] sm:$0xff]
        %1147 = vst [vmem:[%s37 + $0x1150] sm:$0xff] %v1146
        %v1148 = vld [vmem:[%s36 + $0x1158] sm:$0xff]
        %1149 = vst [vmem:[%s37 + $0x1158] sm:$0xff] %v1148
        %v1150 = vld [vmem:[%s36 + $0x1160] sm:$0xff]
        %1151 = vst [vmem:[%s37 + $0x1160] sm:$0xff] %v1150
        %v1152 = vld [vmem:[%s36 + $0x1168] sm:$0xff]
        %1153 = vst [vmem:[%s37 + $0x1168] sm:$0xff] %v1152
        %v1154 = vld [vmem:[%s36 + $0x1170] sm:$0xff]
        %1155 = vst [vmem:[%s37 + $0x1170] sm:$0xff] %v1154
        %v1156 = vld [vmem:[%s36 + $0x1178] sm:$0xff]
        %1157 = vst [vmem:[%s37 + $0x1178] sm:$0xff] %v1156
        %v1158 = vld [vmem:[%s36 + $0x1180] sm:$0xff]
        %1159 = vst [vmem:[%s37 + $0x1180] sm:$0xff] %v1158
        %v1160 = vld [vmem:[%s36 + $0x1188] sm:$0xff]
        %1161 = vst [vmem:[%s37 + $0x1188] sm:$0xff] %v1160
        %v1162 = vld [vmem:[%s36 + $0x1190] sm:$0xff]
        %1163 = vst [vmem:[%s37 + $0x1190] sm:$0xff] %v1162
        %v1164 = vld [vmem:[%s36 + $0x1198] sm:$0xff]
        %1165 = vst [vmem:[%s37 + $0x1198] sm:$0xff] %v1164
        %v1166 = vld [vmem:[%s36 + $0x11a0] sm:$0xff]
        %1167 = vst [vmem:[%s37 + $0x11a0] sm:$0xff] %v1166
        %v1168 = vld [vmem:[%s36 + $0x11a8] sm:$0xff]
        %1169 = vst [vmem:[%s37 + $0x11a8] sm:$0xff] %v1168
        %v1170 = vld [vmem:[%s36 + $0x11b0] sm:$0xff]
        %1171 = vst [vmem:[%s37 + $0x11b0] sm:$0xff] %v1170
        %v1172 = vld [vmem:[%s36 + $0x11b8] sm:$0xff]
        %1173 = vst [vmem:[%s37 + $0x11b8] sm:$0xff] %v1172
        %v1174 = vld [vmem:[%s36 + $0x11c0] sm:$0xff]
        %1175 = vst [vmem:[%s37 + $0x11c0] sm:$0xff] %v1174
        %v1176 = vld [vmem:[%s36 + $0x11c8] sm:$0xff]
        %1177 = vst [vmem:[%s37 + $0x11c8] sm:$0xff] %v1176
        %v1178 = vld [vmem:[%s36 + $0x11d0] sm:$0xff]
        %1179 = vst [vmem:[%s37 + $0x11d0] sm:$0xff] %v1178
        %v1180 = vld [vmem:[%s36 + $0x11d8] sm:$0xff]
        %1181 = vst [vmem:[%s37 + $0x11d8] sm:$0xff] %v1180
        %v1182 = vld [vmem:[%s36 + $0x11e0] sm:$0xff]
        %1183 = vst [vmem:[%s37 + $0x11e0] sm:$0xff] %v1182
        %v1184 = vld [vmem:[%s36 + $0x11e8] sm:$0xff]
        %1185 = vst [vmem:[%s37 + $0x11e8] sm:$0xff] %v1184
        %v1186 = vld [vmem:[%s36 + $0x11f0] sm:$0xff]
        %1187 = vst [vmem:[%s37 + $0x11f0] sm:$0xff] %v1186
        %v1188 = vld [vmem:[%s36 + $0x11f8] sm:$0xff]
        %1189 = vst [vmem:[%s37 + $0x11f8] sm:$0xff] %v1188
        %v1190 = vld [vmem:[%s36 + $0x1200] sm:$0xff]
        %1191 = vst [vmem:[%s37 + $0x1200] sm:$0xff] %v1190
        %v1192 = vld [vmem:[%s36 + $0x1208] sm:$0xff]
        %1193 = vst [vmem:[%s37 + $0x1208] sm:$0xff] %v1192
        %v1194 = vld [vmem:[%s36 + $0x1210] sm:$0xff]
        %1195 = vst [vmem:[%s37 + $0x1210] sm:$0xff] %v1194
        %v1196 = vld [vmem:[%s36 + $0x1218] sm:$0xff]
        %1197 = vst [vmem:[%s37 + $0x1218] sm:$0xff] %v1196
        %v1198 = vld [vmem:[%s36 + $0x1220] sm:$0xff]
        %1199 = vst [vmem:[%s37 + $0x1220] sm:$0xff] %v1198
        %v1200 = vld [vmem:[%s36 + $0x1228] sm:$0xff]
        %1201 = vst [vmem:[%s37 + $0x1228] sm:$0xff] %v1200
        %v1202 = vld [vmem:[%s36 + $0x1230] sm:$0xff]
        %1203 = vst [vmem:[%s37 + $0x1230] sm:$0xff] %v1202
        %v1204 = vld [vmem:[%s36 + $0x1238] sm:$0xff]
        %1205 = vst [vmem:[%s37 + $0x1238] sm:$0xff] %v1204
        %v1206 = vld [vmem:[%s36 + $0x1240] sm:$0xff]
        %1207 = vst [vmem:[%s37 + $0x1240] sm:$0xff] %v1206
        %v1208 = vld [vmem:[%s36 + $0x1248] sm:$0xff]
        %1209 = vst [vmem:[%s37 + $0x1248] sm:$0xff] %v1208
        %v1210 = vld [vmem:[%s36 + $0x1250] sm:$0xff]
        %1211 = vst [vmem:[%s37 + $0x1250] sm:$0xff] %v1210
        %v1212 = vld [vmem:[%s36 + $0x1258] sm:$0xff]
        %1213 = vst [vmem:[%s37 + $0x1258] sm:$0xff] %v1212
        %v1214 = vld [vmem:[%s36 + $0x1260] sm:$0xff]
        %1215 = vst [vmem:[%s37 + $0x1260] sm:$0xff] %v1214
        %v1216 = vld [vmem:[%s36 + $0x1268] sm:$0xff]
        %1217 = vst [vmem:[%s37 + $0x1268] sm:$0xff] %v1216
        %v1218 = vld [vmem:[%s36 + $0x1270] sm:$0xff]
        %1219 = vst [vmem:[%s37 + $0x1270] sm:$0xff] %v1218
        %v1220 = vld [vmem:[%s36 + $0x1278] sm:$0xff]
        %1221 = vst [vmem:[%s37 + $0x1278] sm:$0xff] %v1220
        %v1222 = vld [vmem:[%s36 + $0x1280] sm:$0xff]
        %1223 = vst [vmem:[%s37 + $0x1280] sm:$0xff] %v1222
        %v1224 = vld [vmem:[%s36 + $0x1288] sm:$0xff]
        %1225 = vst [vmem:[%s37 + $0x1288] sm:$0xff] %v1224
        %v1226 = vld [vmem:[%s36 + $0x1290] sm:$0xff]
        %1227 = vst [vmem:[%s37 + $0x1290] sm:$0xff] %v1226
        %v1228 = vld [vmem:[%s36 + $0x1298] sm:$0xff]
        %1229 = vst [vmem:[%s37 + $0x1298] sm:$0xff] %v1228
        %v1230 = vld [vmem:[%s36 + $0x12a0] sm:$0xff]
        %1231 = vst [vmem:[%s37 + $0x12a0] sm:$0xff] %v1230
        %v1232 = vld [vmem:[%s36 + $0x12a8] sm:$0xff]
        %1233 = vst [vmem:[%s37 + $0x12a8] sm:$0xff] %v1232
        %v1234 = vld [vmem:[%s36 + $0x12b0] sm:$0xff]
        %1235 = vst [vmem:[%s37 + $0x12b0] sm:$0xff] %v1234
        %v1236 = vld [vmem:[%s36 + $0x12b8] sm:$0xff]
        %1237 = vst [vmem:[%s37 + $0x12b8] sm:$0xff] %v1236
        %v1238 = vld [vmem:[%s36 + $0x12c0] sm:$0xff]
        %1239 = vst [vmem:[%s37 + $0x12c0] sm:$0xff] %v1238
        %v1240 = vld [vmem:[%s36 + $0x12c8] sm:$0xff]
        %1241 = vst [vmem:[%s37 + $0x12c8] sm:$0xff] %v1240
        %v1242 = vld [vmem:[%s36 + $0x12d0] sm:$0xff]
        %1243 = vst [vmem:[%s37 + $0x12d0] sm:$0xff] %v1242
        %v1244 = vld [vmem:[%s36 + $0x12d8] sm:$0xff]
        %1245 = vst [vmem:[%s37 + $0x12d8] sm:$0xff] %v1244
        %v1246 = vld [vmem:[%s36 + $0x12e0] sm:$0xff]
        %1247 = vst [vmem:[%s37 + $0x12e0] sm:$0xff] %v1246
        %v1248 = vld [vmem:[%s36 + $0x12e8] sm:$0xff]
        %1249 = vst [vmem:[%s37 + $0x12e8] sm:$0xff] %v1248
        %v1250 = vld [vmem:[%s36 + $0x12f0] sm:$0xff]
        %1251 = vst [vmem:[%s37 + $0x12f0] sm:$0xff] %v1250
        %v1252 = vld [vmem:[%s36 + $0x12f8] sm:$0xff]
        %1253 = vst [vmem:[%s37 + $0x12f8] sm:$0xff] %v1252
        %v1254 = vld [vmem:[%s36 + $0x1300] sm:$0xff]
        %1255 = vst [vmem:[%s37 + $0x1300] sm:$0xff] %v1254
        %v1256 = vld [vmem:[%s36 + $0x1308] sm:$0xff]
        %1257 = vst [vmem:[%s37 + $0x1308] sm:$0xff] %v1256
        %v1258 = vld [vmem:[%s36 + $0x1310] sm:$0xff]
        %1259 = vst [vmem:[%s37 + $0x1310] sm:$0xff] %v1258
        %v1260 = vld [vmem:[%s36 + $0x1318] sm:$0xff]
        %1261 = vst [vmem:[%s37 + $0x1318] sm:$0xff] %v1260
        %v1262 = vld [vmem:[%s36 + $0x1320] sm:$0xff]
        %1263 = vst [vmem:[%s37 + $0x1320] sm:$0xff] %v1262
        %v1264 = vld [vmem:[%s36 + $0x1328] sm:$0xff]
        %1265 = vst [vmem:[%s37 + $0x1328] sm:$0xff] %v1264
        %v1266 = vld [vmem:[%s36 + $0x1330] sm:$0xff]
        %1267 = vst [vmem:[%s37 + $0x1330] sm:$0xff] %v1266
        %v1268 = vld [vmem:[%s36 + $0x1338] sm:$0xff]
        %1269 = vst [vmem:[%s37 + $0x1338] sm:$0xff] %v1268
        %v1270 = vld [vmem:[%s36 + $0x1340] sm:$0xff]
        %1271 = vst [vmem:[%s37 + $0x1340] sm:$0xff] %v1270
        %v1272 = vld [vmem:[%s36 + $0x1348] sm:$0xff]
        %1273 = vst [vmem:[%s37 + $0x1348] sm:$0xff] %v1272
        %v1274 = vld [vmem:[%s36 + $0x1350] sm:$0xff]
        %1275 = vst [vmem:[%s37 + $0x1350] sm:$0xff] %v1274
        %v1276 = vld [vmem:[%s36 + $0x1358] sm:$0xff]
        %1277 = vst [vmem:[%s37 + $0x1358] sm:$0xff] %v1276
        %v1278 = vld [vmem:[%s36 + $0x1360] sm:$0xff]
        %1279 = vst [vmem:[%s37 + $0x1360] sm:$0xff] %v1278
        %v1280 = vld [vmem:[%s36 + $0x1368] sm:$0xff]
        %1281 = vst [vmem:[%s37 + $0x1368] sm:$0xff] %v1280
        %v1282 = vld [vmem:[%s36 + $0x1370] sm:$0xff]
        %1283 = vst [vmem:[%s37 + $0x1370] sm:$0xff] %v1282
        %v1284 = vld [vmem:[%s36 + $0x1378] sm:$0xff]
        %1285 = vst [vmem:[%s37 + $0x1378] sm:$0xff] %v1284
        %v1286 = vld [vmem:[%s36 + $0x1380] sm:$0xff]
        %1287 = vst [vmem:[%s37 + $0x1380] sm:$0xff] %v1286
        %v1288 = vld [vmem:[%s36 + $0x1388] sm:$0xff]
        %1289 = vst [vmem:[%s37 + $0x1388] sm:$0xff] %v1288
        %v1290 = vld [vmem:[%s36 + $0x1390] sm:$0xff]
        %1291 = vst [vmem:[%s37 + $0x1390] sm:$0xff] %v1290
        %v1292 = vld [vmem:[%s36 + $0x1398] sm:$0xff]
        %1293 = vst [vmem:[%s37 + $0x1398] sm:$0xff] %v1292
        %v1294 = vld [vmem:[%s36 + $0x13a0] sm:$0xff]
        %1295 = vst [vmem:[%s37 + $0x13a0] sm:$0xff] %v1294
        %v1296 = vld [vmem:[%s36 + $0x13a8] sm:$0xff]
        %1297 = vst [vmem:[%s37 + $0x13a8] sm:$0xff] %v1296
        %v1298 = vld [vmem:[%s36 + $0x13b0] sm:$0xff]
        %1299 = vst [vmem:[%s37 + $0x13b0] sm:$0xff] %v1298
        %v1300 = vld [vmem:[%s36 + $0x13b8] sm:$0xff]
        %1301 = vst [vmem:[%s37 + $0x13b8] sm:$0xff] %v1300
        %v1302 = vld [vmem:[%s36 + $0x13c0] sm:$0xff]
        %1303 = vst [vmem:[%s37 + $0x13c0] sm:$0xff] %v1302
        %v1304 = vld [vmem:[%s36 + $0x13c8] sm:$0xff]
        %1305 = vst [vmem:[%s37 + $0x13c8] sm:$0xff] %v1304
        %v1306 = vld [vmem:[%s36 + $0x13d0] sm:$0xff]
        %1307 = vst [vmem:[%s37 + $0x13d0] sm:$0xff] %v1306
        %v1308 = vld [vmem:[%s36 + $0x13d8] sm:$0xff]
        %1309 = vst [vmem:[%s37 + $0x13d8] sm:$0xff] %v1308
        %v1310 = vld [vmem:[%s36 + $0x13e0] sm:$0xff]
        %1311 = vst [vmem:[%s37 + $0x13e0] sm:$0xff] %v1310
        %v1312 = vld [vmem:[%s36 + $0x13e8] sm:$0xff]
        %1313 = vst [vmem:[%s37 + $0x13e8] sm:$0xff] %v1312
        %v1314 = vld [vmem:[%s36 + $0x13f0] sm:$0xff]
        %1315 = vst [vmem:[%s37 + $0x13f0] sm:$0xff] %v1314
        %v1316 = vld [vmem:[%s36 + $0x13f8] sm:$0xff]
        %1317 = vst [vmem:[%s37 + $0x13f8] sm:$0xff] %v1316
      $region25: #{_step_impl.1} parent=19 // loop_footer
        %s35 = sadd.s32 1, %s31
      $region26: #{_step_impl.1} parent=19 // loop_footer_branch
        %30 = sbr.rel target = $region22
      $region27: #{_step_impl.1} parent=19 // loop_exit
        _
    $region20: #{_step_impl.1} parent=4 // pred_fallthru
      _
    %p1318 = pneg %p26
    // Predicated region
    $region28: #{_step_impl.1} parent=4 // pred_check
      _
    $region29: #{_step_impl.1} parent=4 // pred_check_branch
      %1320 = sbr.rel (%p26) target = $region31
    $region30: #{_step_impl.1} parent=4 // pred_region
      %s1321 = sand.u32 5120, 7
    $region31: #{_step_impl.1} parent=4 // pred_fallthru
      _
  $region5: #{_step_impl.1} parent=0 // pred_fallthru
    _
  // Predicated region
  $region6: #{_step_impl.1} parent=0 // pred_check
    %p11 = pneg %p7
  $region7: #{_step_impl.1} parent=0 // pred_check_branch
    %13 = sbr.rel (%p11) target = $region9
  $region8: #{_step_impl.1} parent=0 // pred_region
    %s14 = sshllo.u32 0, 5120
    loop: start=0, step=1, limit=1
    $region10: #{_step_impl.1} parent=8 // loop_pre_header
      _
    $region11: #{_step_impl.1} parent=8 // loop_header
      %s16 = sphi 0, %s20
      %p17 = scmp.ge.s32.totalorder %s16, 1
      %s21 = sphi %s0, %s0
      %s22 = sphi %s1, %s1
    $region12: #{_step_impl.1} parent=8 // loop_header_branch
      %19 = sbr.rel (%p17) target = $region16
    $region13: #{_step_impl.1} parent=8 // loop_body
      %v23 = vld [vmem:[%s21] sm:%s14]
      %24 = vst [vmem:[%s22] sm:%s14] %v23
    $region14: #{_step_impl.1} parent=8 // loop_footer
      %s20 = sadd.s32 1, %s16
    $region15: #{_step_impl.1} parent=8 // loop_footer_branch
      %15 = sbr.rel target = $region11
    $region16: #{_step_impl.1} parent=8 // loop_exit
      _
  $region9: #{_step_impl.1} parent=0 // pred_fallthru
    _
  // Predicated region
  $region32: #{_step_impl.1} parent=0 // pred_check
    _
  $region33: #{_step_impl.1} parent=0 // pred_check_branch
    %1324 = sbr.rel (0) target = $region35
  $region34: #{_step_impl.1} parent=0 // pred_region
    %1325 = vsyncadd [#allocation2], 81920
  $region35: #{_step_impl.1} parent=0 // pred_fallthru
    _
  %s1326 = scalar_lea.vmem %s0, 5120
  %s1327 = scalar_lea.vmem %s1, 5120
  %s1328 = scalar_lea.sflag [#allocation2], 1
  %p1330 = scmp.lt.u32.totalorder 5120, 8
  %p1331 = pneg %p1330
  // Predicated region
  $region36: #{_step_impl.1} parent=0 // pred_check
    _
  $region37: #{_step_impl.1} parent=0 // pred_check_branch
    %1333 = sbr.rel (%p1330) target = $region39
  $region38: #{_step_impl.1} parent=0 // pred_region
    %s1348 = sand.u32 5120, 7
    %p1349 = scmp.eq.s32.totalorder %s1348, 0
    // Predicated region
    $region51: #{_step_impl.1} parent=38 // pred_check
      %p1350 = pneg %p1349
    $region52: #{_step_impl.1} parent=38 // pred_check_branch
      %1352 = sbr.rel (%p1350) target = $region54
    $region53: #{_step_impl.1} parent=38 // pred_region
      loop: start=0, step=1, limit=1
      $region55: #{_step_impl.1} parent=53 // loop_pre_header
        _
      $region56: #{_step_impl.1} parent=53 // loop_header
        %s1354 = sphi 0, %s1358
        %p1355 = scmp.ge.s32.totalorder %s1354, 1
        %s1359 = sphi %s1326, %s1326
        %s1360 = sphi %s1327, %s1327
      $region57: #{_step_impl.1} parent=53 // loop_header_branch
        %1357 = sbr.rel (%p1355) target = $region61
      $region58: #{_step_impl.1} parent=53 // loop_body
        %v1361 = vld [vmem:[%s1359] sm:$0xff]
        %1362 = vst [vmem:[%s1360] sm:$0xff] %v1361
        %v1363 = vld [vmem:[%s1359 + $0x8] sm:$0xff]
        %1364 = vst [vmem:[%s1360 + $0x8] sm:$0xff] %v1363
        %v1365 = vld [vmem:[%s1359 + $0x10] sm:$0xff]
        %1366 = vst [vmem:[%s1360 + $0x10] sm:$0xff] %v1365
        %v1367 = vld [vmem:[%s1359 + $0x18] sm:$0xff]
        %1368 = vst [vmem:[%s1360 + $0x18] sm:$0xff] %v1367
        %v1369 = vld [vmem:[%s1359 + $0x20] sm:$0xff]
        %1370 = vst [vmem:[%s1360 + $0x20] sm:$0xff] %v1369
        %v1371 = vld [vmem:[%s1359 + $0x28] sm:$0xff]
        %1372 = vst [vmem:[%s1360 + $0x28] sm:$0xff] %v1371
        %v1373 = vld [vmem:[%s1359 + $0x30] sm:$0xff]
        %1374 = vst [vmem:[%s1360 + $0x30] sm:$0xff] %v1373
        %v1375 = vld [vmem:[%s1359 + $0x38] sm:$0xff]
        %1376 = vst [vmem:[%s1360 + $0x38] sm:$0xff] %v1375
        %v1377 = vld [vmem:[%s1359 + $0x40] sm:$0xff]
        %1378 = vst [vmem:[%s1360 + $0x40] sm:$0xff] %v1377
        %v1379 = vld [vmem:[%s1359 + $0x48] sm:$0xff]
        %1380 = vst [vmem:[%s1360 + $0x48] sm:$0xff] %v1379
        %v1381 = vld [vmem:[%s1359 + $0x50] sm:$0xff]
        %1382 = vst [vmem:[%s1360 + $0x50] sm:$0xff] %v1381
        %v1383 = vld [vmem:[%s1359 + $0x58] sm:$0xff]
        %1384 = vst [vmem:[%s1360 + $0x58] sm:$0xff] %v1383
        %v1385 = vld [vmem:[%s1359 + $0x60] sm:$0xff]
        %1386 = vst [vmem:[%s1360 + $0x60] sm:$0xff] %v1385
        %v1387 = vld [vmem:[%s1359 + $0x68] sm:$0xff]
        %1388 = vst [vmem:[%s1360 + $0x68] sm:$0xff] %v1387
        %v1389 = vld [vmem:[%s1359 + $0x70] sm:$0xff]
        %1390 = vst [vmem:[%s1360 + $0x70] sm:$0xff] %v1389
        %v1391 = vld [vmem:[%s1359 + $0x78] sm:$0xff]
        %1392 = vst [vmem:[%s1360 + $0x78] sm:$0xff] %v1391
        %v1393 = vld [vmem:[%s1359 + $0x80] sm:$0xff]
        %1394 = vst [vmem:[%s1360 + $0x80] sm:$0xff] %v1393
        %v1395 = vld [vmem:[%s1359 + $0x88] sm:$0xff]
        %1396 = vst [vmem:[%s1360 + $0x88] sm:$0xff] %v1395
        %v1397 = vld [vmem:[%s1359 + $0x90] sm:$0xff]
        %1398 = vst [vmem:[%s1360 + $0x90] sm:$0xff] %v1397
        %v1399 = vld [vmem:[%s1359 + $0x98] sm:$0xff]
        %1400 = vst [vmem:[%s1360 + $0x98] sm:$0xff] %v1399
        %v1401 = vld [vmem:[%s1359 + $0xa0] sm:$0xff]
        %1402 = vst [vmem:[%s1360 + $0xa0] sm:$0xff] %v1401
        %v1403 = vld [vmem:[%s1359 + $0xa8] sm:$0xff]
        %1404 = vst [vmem:[%s1360 + $0xa8] sm:$0xff] %v1403
        %v1405 = vld [vmem:[%s1359 + $0xb0] sm:$0xff]
        %1406 = vst [vmem:[%s1360 + $0xb0] sm:$0xff] %v1405
        %v1407 = vld [vmem:[%s1359 + $0xb8] sm:$0xff]
        %1408 = vst [vmem:[%s1360 + $0xb8] sm:$0xff] %v1407
        %v1409 = vld [vmem:[%s1359 + $0xc0] sm:$0xff]
        %1410 = vst [vmem:[%s1360 + $0xc0] sm:$0xff] %v1409
        %v1411 = vld [vmem:[%s1359 + $0xc8] sm:$0xff]
        %1412 = vst [vmem:[%s1360 + $0xc8] sm:$0xff] %v1411
        %v1413 = vld [vmem:[%s1359 + $0xd0] sm:$0xff]
        %1414 = vst [vmem:[%s1360 + $0xd0] sm:$0xff] %v1413
        %v1415 = vld [vmem:[%s1359 + $0xd8] sm:$0xff]
        %1416 = vst [vmem:[%s1360 + $0xd8] sm:$0xff] %v1415
        %v1417 = vld [vmem:[%s1359 + $0xe0] sm:$0xff]
        %1418 = vst [vmem:[%s1360 + $0xe0] sm:$0xff] %v1417
        %v1419 = vld [vmem:[%s1359 + $0xe8] sm:$0xff]
        %1420 = vst [vmem:[%s1360 + $0xe8] sm:$0xff] %v1419
        %v1421 = vld [vmem:[%s1359 + $0xf0] sm:$0xff]
        %1422 = vst [vmem:[%s1360 + $0xf0] sm:$0xff] %v1421
        %v1423 = vld [vmem:[%s1359 + $0xf8] sm:$0xff]
        %1424 = vst [vmem:[%s1360 + $0xf8] sm:$0xff] %v1423
        %v1425 = vld [vmem:[%s1359 + $0x100] sm:$0xff]
        %1426 = vst [vmem:[%s1360 + $0x100] sm:$0xff] %v1425
        %v1427 = vld [vmem:[%s1359 + $0x108] sm:$0xff]
        %1428 = vst [vmem:[%s1360 + $0x108] sm:$0xff] %v1427
        %v1429 = vld [vmem:[%s1359 + $0x110] sm:$0xff]
        %1430 = vst [vmem:[%s1360 + $0x110] sm:$0xff] %v1429
        %v1431 = vld [vmem:[%s1359 + $0x118] sm:$0xff]
        %1432 = vst [vmem:[%s1360 + $0x118] sm:$0xff] %v1431
        %v1433 = vld [vmem:[%s1359 + $0x120] sm:$0xff]
        %1434 = vst [vmem:[%s1360 + $0x120] sm:$0xff] %v1433
        %v1435 = vld [vmem:[%s1359 + $0x128] sm:$0xff]
        %1436 = vst [vmem:[%s1360 + $0x128] sm:$0xff] %v1435
        %v1437 = vld [vmem:[%s1359 + $0x130] sm:$0xff]
        %1438 = vst [vmem:[%s1360 + $0x130] sm:$0xff] %v1437
        %v1439 = vld [vmem:[%s1359 + $0x138] sm:$0xff]
        %1440 = vst [vmem:[%s1360 + $0x138] sm:$0xff] %v1439
        %v1441 = vld [vmem:[%s1359 + $0x140] sm:$0xff]
        %1442 = vst [vmem:[%s1360 + $0x140] sm:$0xff] %v1441
        %v1443 = vld [vmem:[%s1359 + $0x148] sm:$0xff]
        %1444 = vst [vmem:[%s1360 + $0x148] sm:$0xff] %v1443
        %v1445 = vld [vmem:[%s1359 + $0x150] sm:$0xff]
        %1446 = vst [vmem:[%s1360 + $0x150] sm:$0xff] %v1445
        %v1447 = vld [vmem:[%s1359 + $0x158] sm:$0xff]
        %1448 = vst [vmem:[%s1360 + $0x158] sm:$0xff] %v1447
        %v1449 = vld [vmem:[%s1359 + $0x160] sm:$0xff]
        %1450 = vst [vmem:[%s1360 + $0x160] sm:$0xff] %v1449
        %v1451 = vld [vmem:[%s1359 + $0x168] sm:$0xff]
        %1452 = vst [vmem:[%s1360 + $0x168] sm:$0xff] %v1451
        %v1453 = vld [vmem:[%s1359 + $0x170] sm:$0xff]
        %1454 = vst [vmem:[%s1360 + $0x170] sm:$0xff] %v1453
        %v1455 = vld [vmem:[%s1359 + $0x178] sm:$0xff]
        %1456 = vst [vmem:[%s1360 + $0x178] sm:$0xff] %v1455
        %v1457 = vld [vmem:[%s1359 + $0x180] sm:$0xff]
        %1458 = vst [vmem:[%s1360 + $0x180] sm:$0xff] %v1457
        %v1459 = vld [vmem:[%s1359 + $0x188] sm:$0xff]
        %1460 = vst [vmem:[%s1360 + $0x188] sm:$0xff] %v1459
        %v1461 = vld [vmem:[%s1359 + $0x190] sm:$0xff]
        %1462 = vst [vmem:[%s1360 + $0x190] sm:$0xff] %v1461
        %v1463 = vld [vmem:[%s1359 + $0x198] sm:$0xff]
        %1464 = vst [vmem:[%s1360 + $0x198] sm:$0xff] %v1463
        %v1465 = vld [vmem:[%s1359 + $0x1a0] sm:$0xff]
        %1466 = vst [vmem:[%s1360 + $0x1a0] sm:$0xff] %v1465
        %v1467 = vld [vmem:[%s1359 + $0x1a8] sm:$0xff]
        %1468 = vst [vmem:[%s1360 + $0x1a8] sm:$0xff] %v1467
        %v1469 = vld [vmem:[%s1359 + $0x1b0] sm:$0xff]
        %1470 = vst [vmem:[%s1360 + $0x1b0] sm:$0xff] %v1469
        %v1471 = vld [vmem:[%s1359 + $0x1b8] sm:$0xff]
        %1472 = vst [vmem:[%s1360 + $0x1b8] sm:$0xff] %v1471
        %v1473 = vld [vmem:[%s1359 + $0x1c0] sm:$0xff]
        %1474 = vst [vmem:[%s1360 + $0x1c0] sm:$0xff] %v1473
        %v1475 = vld [vmem:[%s1359 + $0x1c8] sm:$0xff]
        %1476 = vst [vmem:[%s1360 + $0x1c8] sm:$0xff] %v1475
        %v1477 = vld [vmem:[%s1359 + $0x1d0] sm:$0xff]
        %1478 = vst [vmem:[%s1360 + $0x1d0] sm:$0xff] %v1477
        %v1479 = vld [vmem:[%s1359 + $0x1d8] sm:$0xff]
        %1480 = vst [vmem:[%s1360 + $0x1d8] sm:$0xff] %v1479
        %v1481 = vld [vmem:[%s1359 + $0x1e0] sm:$0xff]
        %1482 = vst [vmem:[%s1360 + $0x1e0] sm:$0xff] %v1481
        %v1483 = vld [vmem:[%s1359 + $0x1e8] sm:$0xff]
        %1484 = vst [vmem:[%s1360 + $0x1e8] sm:$0xff] %v1483
        %v1485 = vld [vmem:[%s1359 + $0x1f0] sm:$0xff]
        %1486 = vst [vmem:[%s1360 + $0x1f0] sm:$0xff] %v1485
        %v1487 = vld [vmem:[%s1359 + $0x1f8] sm:$0xff]
        %1488 = vst [vmem:[%s1360 + $0x1f8] sm:$0xff] %v1487
        %v1489 = vld [vmem:[%s1359 + $0x200] sm:$0xff]
        %1490 = vst [vmem:[%s1360 + $0x200] sm:$0xff] %v1489
        %v1491 = vld [vmem:[%s1359 + $0x208] sm:$0xff]
        %1492 = vst [vmem:[%s1360 + $0x208] sm:$0xff] %v1491
        %v1493 = vld [vmem:[%s1359 + $0x210] sm:$0xff]
        %1494 = vst [vmem:[%s1360 + $0x210] sm:$0xff] %v1493
        %v1495 = vld [vmem:[%s1359 + $0x218] sm:$0xff]
        %1496 = vst [vmem:[%s1360 + $0x218] sm:$0xff] %v1495
        %v1497 = vld [vmem:[%s1359 + $0x220] sm:$0xff]
        %1498 = vst [vmem:[%s1360 + $0x220] sm:$0xff] %v1497
        %v1499 = vld [vmem:[%s1359 + $0x228] sm:$0xff]
        %1500 = vst [vmem:[%s1360 + $0x228] sm:$0xff] %v1499
        %v1501 = vld [vmem:[%s1359 + $0x230] sm:$0xff]
        %1502 = vst [vmem:[%s1360 + $0x230] sm:$0xff] %v1501
        %v1503 = vld [vmem:[%s1359 + $0x238] sm:$0xff]
        %1504 = vst [vmem:[%s1360 + $0x238] sm:$0xff] %v1503
        %v1505 = vld [vmem:[%s1359 + $0x240] sm:$0xff]
        %1506 = vst [vmem:[%s1360 + $0x240] sm:$0xff] %v1505
        %v1507 = vld [vmem:[%s1359 + $0x248] sm:$0xff]
        %1508 = vst [vmem:[%s1360 + $0x248] sm:$0xff] %v1507
        %v1509 = vld [vmem:[%s1359 + $0x250] sm:$0xff]
        %1510 = vst [vmem:[%s1360 + $0x250] sm:$0xff] %v1509
        %v1511 = vld [vmem:[%s1359 + $0x258] sm:$0xff]
        %1512 = vst [vmem:[%s1360 + $0x258] sm:$0xff] %v1511
        %v1513 = vld [vmem:[%s1359 + $0x260] sm:$0xff]
        %1514 = vst [vmem:[%s1360 + $0x260] sm:$0xff] %v1513
        %v1515 = vld [vmem:[%s1359 + $0x268] sm:$0xff]
        %1516 = vst [vmem:[%s1360 + $0x268] sm:$0xff] %v1515
        %v1517 = vld [vmem:[%s1359 + $0x270] sm:$0xff]
        %1518 = vst [vmem:[%s1360 + $0x270] sm:$0xff] %v1517
        %v1519 = vld [vmem:[%s1359 + $0x278] sm:$0xff]
        %1520 = vst [vmem:[%s1360 + $0x278] sm:$0xff] %v1519
        %v1521 = vld [vmem:[%s1359 + $0x280] sm:$0xff]
        %1522 = vst [vmem:[%s1360 + $0x280] sm:$0xff] %v1521
        %v1523 = vld [vmem:[%s1359 + $0x288] sm:$0xff]
        %1524 = vst [vmem:[%s1360 + $0x288] sm:$0xff] %v1523
        %v1525 = vld [vmem:[%s1359 + $0x290] sm:$0xff]
        %1526 = vst [vmem:[%s1360 + $0x290] sm:$0xff] %v1525
        %v1527 = vld [vmem:[%s1359 + $0x298] sm:$0xff]
        %1528 = vst [vmem:[%s1360 + $0x298] sm:$0xff] %v1527
        %v1529 = vld [vmem:[%s1359 + $0x2a0] sm:$0xff]
        %1530 = vst [vmem:[%s1360 + $0x2a0] sm:$0xff] %v1529
        %v1531 = vld [vmem:[%s1359 + $0x2a8] sm:$0xff]
        %1532 = vst [vmem:[%s1360 + $0x2a8] sm:$0xff] %v1531
        %v1533 = vld [vmem:[%s1359 + $0x2b0] sm:$0xff]
        %1534 = vst [vmem:[%s1360 + $0x2b0] sm:$0xff] %v1533
        %v1535 = vld [vmem:[%s1359 + $0x2b8] sm:$0xff]
        %1536 = vst [vmem:[%s1360 + $0x2b8] sm:$0xff] %v1535
        %v1537 = vld [vmem:[%s1359 + $0x2c0] sm:$0xff]
        %1538 = vst [vmem:[%s1360 + $0x2c0] sm:$0xff] %v1537
        %v1539 = vld [vmem:[%s1359 + $0x2c8] sm:$0xff]
        %1540 = vst [vmem:[%s1360 + $0x2c8] sm:$0xff] %v1539
        %v1541 = vld [vmem:[%s1359 + $0x2d0] sm:$0xff]
        %1542 = vst [vmem:[%s1360 + $0x2d0] sm:$0xff] %v1541
        %v1543 = vld [vmem:[%s1359 + $0x2d8] sm:$0xff]
        %1544 = vst [vmem:[%s1360 + $0x2d8] sm:$0xff] %v1543
        %v1545 = vld [vmem:[%s1359 + $0x2e0] sm:$0xff]
        %1546 = vst [vmem:[%s1360 + $0x2e0] sm:$0xff] %v1545
        %v1547 = vld [vmem:[%s1359 + $0x2e8] sm:$0xff]
        %1548 = vst [vmem:[%s1360 + $0x2e8] sm:$0xff] %v1547
        %v1549 = vld [vmem:[%s1359 + $0x2f0] sm:$0xff]
        %1550 = vst [vmem:[%s1360 + $0x2f0] sm:$0xff] %v1549
        %v1551 = vld [vmem:[%s1359 + $0x2f8] sm:$0xff]
        %1552 = vst [vmem:[%s1360 + $0x2f8] sm:$0xff] %v1551
        %v1553 = vld [vmem:[%s1359 + $0x300] sm:$0xff]
        %1554 = vst [vmem:[%s1360 + $0x300] sm:$0xff] %v1553
        %v1555 = vld [vmem:[%s1359 + $0x308] sm:$0xff]
        %1556 = vst [vmem:[%s1360 + $0x308] sm:$0xff] %v1555
        %v1557 = vld [vmem:[%s1359 + $0x310] sm:$0xff]
        %1558 = vst [vmem:[%s1360 + $0x310] sm:$0xff] %v1557
        %v1559 = vld [vmem:[%s1359 + $0x318] sm:$0xff]
        %1560 = vst [vmem:[%s1360 + $0x318] sm:$0xff] %v1559
        %v1561 = vld [vmem:[%s1359 + $0x320] sm:$0xff]
        %1562 = vst [vmem:[%s1360 + $0x320] sm:$0xff] %v1561
        %v1563 = vld [vmem:[%s1359 + $0x328] sm:$0xff]
        %1564 = vst [vmem:[%s1360 + $0x328] sm:$0xff] %v1563
        %v1565 = vld [vmem:[%s1359 + $0x330] sm:$0xff]
        %1566 = vst [vmem:[%s1360 + $0x330] sm:$0xff] %v1565
        %v1567 = vld [vmem:[%s1359 + $0x338] sm:$0xff]
        %1568 = vst [vmem:[%s1360 + $0x338] sm:$0xff] %v1567
        %v1569 = vld [vmem:[%s1359 + $0x340] sm:$0xff]
        %1570 = vst [vmem:[%s1360 + $0x340] sm:$0xff] %v1569
        %v1571 = vld [vmem:[%s1359 + $0x348] sm:$0xff]
        %1572 = vst [vmem:[%s1360 + $0x348] sm:$0xff] %v1571
        %v1573 = vld [vmem:[%s1359 + $0x350] sm:$0xff]
        %1574 = vst [vmem:[%s1360 + $0x350] sm:$0xff] %v1573
        %v1575 = vld [vmem:[%s1359 + $0x358] sm:$0xff]
        %1576 = vst [vmem:[%s1360 + $0x358] sm:$0xff] %v1575
        %v1577 = vld [vmem:[%s1359 + $0x360] sm:$0xff]
        %1578 = vst [vmem:[%s1360 + $0x360] sm:$0xff] %v1577
        %v1579 = vld [vmem:[%s1359 + $0x368] sm:$0xff]
        %1580 = vst [vmem:[%s1360 + $0x368] sm:$0xff] %v1579
        %v1581 = vld [vmem:[%s1359 + $0x370] sm:$0xff]
        %1582 = vst [vmem:[%s1360 + $0x370] sm:$0xff] %v1581
        %v1583 = vld [vmem:[%s1359 + $0x378] sm:$0xff]
        %1584 = vst [vmem:[%s1360 + $0x378] sm:$0xff] %v1583
        %v1585 = vld [vmem:[%s1359 + $0x380] sm:$0xff]
        %1586 = vst [vmem:[%s1360 + $0x380] sm:$0xff] %v1585
        %v1587 = vld [vmem:[%s1359 + $0x388] sm:$0xff]
        %1588 = vst [vmem:[%s1360 + $0x388] sm:$0xff] %v1587
        %v1589 = vld [vmem:[%s1359 + $0x390] sm:$0xff]
        %1590 = vst [vmem:[%s1360 + $0x390] sm:$0xff] %v1589
        %v1591 = vld [vmem:[%s1359 + $0x398] sm:$0xff]
        %1592 = vst [vmem:[%s1360 + $0x398] sm:$0xff] %v1591
        %v1593 = vld [vmem:[%s1359 + $0x3a0] sm:$0xff]
        %1594 = vst [vmem:[%s1360 + $0x3a0] sm:$0xff] %v1593
        %v1595 = vld [vmem:[%s1359 + $0x3a8] sm:$0xff]
        %1596 = vst [vmem:[%s1360 + $0x3a8] sm:$0xff] %v1595
        %v1597 = vld [vmem:[%s1359 + $0x3b0] sm:$0xff]
        %1598 = vst [vmem:[%s1360 + $0x3b0] sm:$0xff] %v1597
        %v1599 = vld [vmem:[%s1359 + $0x3b8] sm:$0xff]
        %1600 = vst [vmem:[%s1360 + $0x3b8] sm:$0xff] %v1599
        %v1601 = vld [vmem:[%s1359 + $0x3c0] sm:$0xff]
        %1602 = vst [vmem:[%s1360 + $0x3c0] sm:$0xff] %v1601
        %v1603 = vld [vmem:[%s1359 + $0x3c8] sm:$0xff]
        %1604 = vst [vmem:[%s1360 + $0x3c8] sm:$0xff] %v1603
        %v1605 = vld [vmem:[%s1359 + $0x3d0] sm:$0xff]
        %1606 = vst [vmem:[%s1360 + $0x3d0] sm:$0xff] %v1605
        %v1607 = vld [vmem:[%s1359 + $0x3d8] sm:$0xff]
        %1608 = vst [vmem:[%s1360 + $0x3d8] sm:$0xff] %v1607
        %v1609 = vld [vmem:[%s1359 + $0x3e0] sm:$0xff]
        %1610 = vst [vmem:[%s1360 + $0x3e0] sm:$0xff] %v1609
        %v1611 = vld [vmem:[%s1359 + $0x3e8] sm:$0xff]
        %1612 = vst [vmem:[%s1360 + $0x3e8] sm:$0xff] %v1611
        %v1613 = vld [vmem:[%s1359 + $0x3f0] sm:$0xff]
        %1614 = vst [vmem:[%s1360 + $0x3f0] sm:$0xff] %v1613
        %v1615 = vld [vmem:[%s1359 + $0x3f8] sm:$0xff]
        %1616 = vst [vmem:[%s1360 + $0x3f8] sm:$0xff] %v1615
        %v1617 = vld [vmem:[%s1359 + $0x400] sm:$0xff]
        %1618 = vst [vmem:[%s1360 + $0x400] sm:$0xff] %v1617
        %v1619 = vld [vmem:[%s1359 + $0x408] sm:$0xff]
        %1620 = vst [vmem:[%s1360 + $0x408] sm:$0xff] %v1619
        %v1621 = vld [vmem:[%s1359 + $0x410] sm:$0xff]
        %1622 = vst [vmem:[%s1360 + $0x410] sm:$0xff] %v1621
        %v1623 = vld [vmem:[%s1359 + $0x418] sm:$0xff]
        %1624 = vst [vmem:[%s1360 + $0x418] sm:$0xff] %v1623
        %v1625 = vld [vmem:[%s1359 + $0x420] sm:$0xff]
        %1626 = vst [vmem:[%s1360 + $0x420] sm:$0xff] %v1625
        %v1627 = vld [vmem:[%s1359 + $0x428] sm:$0xff]
        %1628 = vst [vmem:[%s1360 + $0x428] sm:$0xff] %v1627
        %v1629 = vld [vmem:[%s1359 + $0x430] sm:$0xff]
        %1630 = vst [vmem:[%s1360 + $0x430] sm:$0xff] %v1629
        %v1631 = vld [vmem:[%s1359 + $0x438] sm:$0xff]
        %1632 = vst [vmem:[%s1360 + $0x438] sm:$0xff] %v1631
        %v1633 = vld [vmem:[%s1359 + $0x440] sm:$0xff]
        %1634 = vst [vmem:[%s1360 + $0x440] sm:$0xff] %v1633
        %v1635 = vld [vmem:[%s1359 + $0x448] sm:$0xff]
        %1636 = vst [vmem:[%s1360 + $0x448] sm:$0xff] %v1635
        %v1637 = vld [vmem:[%s1359 + $0x450] sm:$0xff]
        %1638 = vst [vmem:[%s1360 + $0x450] sm:$0xff] %v1637
        %v1639 = vld [vmem:[%s1359 + $0x458] sm:$0xff]
        %1640 = vst [vmem:[%s1360 + $0x458] sm:$0xff] %v1639
        %v1641 = vld [vmem:[%s1359 + $0x460] sm:$0xff]
        %1642 = vst [vmem:[%s1360 + $0x460] sm:$0xff] %v1641
        %v1643 = vld [vmem:[%s1359 + $0x468] sm:$0xff]
        %1644 = vst [vmem:[%s1360 + $0x468] sm:$0xff] %v1643
        %v1645 = vld [vmem:[%s1359 + $0x470] sm:$0xff]
        %1646 = vst [vmem:[%s1360 + $0x470] sm:$0xff] %v1645
        %v1647 = vld [vmem:[%s1359 + $0x478] sm:$0xff]
        %1648 = vst [vmem:[%s1360 + $0x478] sm:$0xff] %v1647
        %v1649 = vld [vmem:[%s1359 + $0x480] sm:$0xff]
        %1650 = vst [vmem:[%s1360 + $0x480] sm:$0xff] %v1649
        %v1651 = vld [vmem:[%s1359 + $0x488] sm:$0xff]
        %1652 = vst [vmem:[%s1360 + $0x488] sm:$0xff] %v1651
        %v1653 = vld [vmem:[%s1359 + $0x490] sm:$0xff]
        %1654 = vst [vmem:[%s1360 + $0x490] sm:$0xff] %v1653
        %v1655 = vld [vmem:[%s1359 + $0x498] sm:$0xff]
        %1656 = vst [vmem:[%s1360 + $0x498] sm:$0xff] %v1655
        %v1657 = vld [vmem:[%s1359 + $0x4a0] sm:$0xff]
        %1658 = vst [vmem:[%s1360 + $0x4a0] sm:$0xff] %v1657
        %v1659 = vld [vmem:[%s1359 + $0x4a8] sm:$0xff]
        %1660 = vst [vmem:[%s1360 + $0x4a8] sm:$0xff] %v1659
        %v1661 = vld [vmem:[%s1359 + $0x4b0] sm:$0xff]
        %1662 = vst [vmem:[%s1360 + $0x4b0] sm:$0xff] %v1661
        %v1663 = vld [vmem:[%s1359 + $0x4b8] sm:$0xff]
        %1664 = vst [vmem:[%s1360 + $0x4b8] sm:$0xff] %v1663
        %v1665 = vld [vmem:[%s1359 + $0x4c0] sm:$0xff]
        %1666 = vst [vmem:[%s1360 + $0x4c0] sm:$0xff] %v1665
        %v1667 = vld [vmem:[%s1359 + $0x4c8] sm:$0xff]
        %1668 = vst [vmem:[%s1360 + $0x4c8] sm:$0xff] %v1667
        %v1669 = vld [vmem:[%s1359 + $0x4d0] sm:$0xff]
        %1670 = vst [vmem:[%s1360 + $0x4d0] sm:$0xff] %v1669
        %v1671 = vld [vmem:[%s1359 + $0x4d8] sm:$0xff]
        %1672 = vst [vmem:[%s1360 + $0x4d8] sm:$0xff] %v1671
        %v1673 = vld [vmem:[%s1359 + $0x4e0] sm:$0xff]
        %1674 = vst [vmem:[%s1360 + $0x4e0] sm:$0xff] %v1673
        %v1675 = vld [vmem:[%s1359 + $0x4e8] sm:$0xff]
        %1676 = vst [vmem:[%s1360 + $0x4e8] sm:$0xff] %v1675
        %v1677 = vld [vmem:[%s1359 + $0x4f0] sm:$0xff]
        %1678 = vst [vmem:[%s1360 + $0x4f0] sm:$0xff] %v1677
        %v1679 = vld [vmem:[%s1359 + $0x4f8] sm:$0xff]
        %1680 = vst [vmem:[%s1360 + $0x4f8] sm:$0xff] %v1679
        %v1681 = vld [vmem:[%s1359 + $0x500] sm:$0xff]
        %1682 = vst [vmem:[%s1360 + $0x500] sm:$0xff] %v1681
        %v1683 = vld [vmem:[%s1359 + $0x508] sm:$0xff]
        %1684 = vst [vmem:[%s1360 + $0x508] sm:$0xff] %v1683
        %v1685 = vld [vmem:[%s1359 + $0x510] sm:$0xff]
        %1686 = vst [vmem:[%s1360 + $0x510] sm:$0xff] %v1685
        %v1687 = vld [vmem:[%s1359 + $0x518] sm:$0xff]
        %1688 = vst [vmem:[%s1360 + $0x518] sm:$0xff] %v1687
        %v1689 = vld [vmem:[%s1359 + $0x520] sm:$0xff]
        %1690 = vst [vmem:[%s1360 + $0x520] sm:$0xff] %v1689
        %v1691 = vld [vmem:[%s1359 + $0x528] sm:$0xff]
        %1692 = vst [vmem:[%s1360 + $0x528] sm:$0xff] %v1691
        %v1693 = vld [vmem:[%s1359 + $0x530] sm:$0xff]
        %1694 = vst [vmem:[%s1360 + $0x530] sm:$0xff] %v1693
        %v1695 = vld [vmem:[%s1359 + $0x538] sm:$0xff]
        %1696 = vst [vmem:[%s1360 + $0x538] sm:$0xff] %v1695
        %v1697 = vld [vmem:[%s1359 + $0x540] sm:$0xff]
        %1698 = vst [vmem:[%s1360 + $0x540] sm:$0xff] %v1697
        %v1699 = vld [vmem:[%s1359 + $0x548] sm:$0xff]
        %1700 = vst [vmem:[%s1360 + $0x548] sm:$0xff] %v1699
        %v1701 = vld [vmem:[%s1359 + $0x550] sm:$0xff]
        %1702 = vst [vmem:[%s1360 + $0x550] sm:$0xff] %v1701
        %v1703 = vld [vmem:[%s1359 + $0x558] sm:$0xff]
        %1704 = vst [vmem:[%s1360 + $0x558] sm:$0xff] %v1703
        %v1705 = vld [vmem:[%s1359 + $0x560] sm:$0xff]
        %1706 = vst [vmem:[%s1360 + $0x560] sm:$0xff] %v1705
        %v1707 = vld [vmem:[%s1359 + $0x568] sm:$0xff]
        %1708 = vst [vmem:[%s1360 + $0x568] sm:$0xff] %v1707
        %v1709 = vld [vmem:[%s1359 + $0x570] sm:$0xff]
        %1710 = vst [vmem:[%s1360 + $0x570] sm:$0xff] %v1709
        %v1711 = vld [vmem:[%s1359 + $0x578] sm:$0xff]
        %1712 = vst [vmem:[%s1360 + $0x578] sm:$0xff] %v1711
        %v1713 = vld [vmem:[%s1359 + $0x580] sm:$0xff]
        %1714 = vst [vmem:[%s1360 + $0x580] sm:$0xff] %v1713
        %v1715 = vld [vmem:[%s1359 + $0x588] sm:$0xff]
        %1716 = vst [vmem:[%s1360 + $0x588] sm:$0xff] %v1715
        %v1717 = vld [vmem:[%s1359 + $0x590] sm:$0xff]
        %1718 = vst [vmem:[%s1360 + $0x590] sm:$0xff] %v1717
        %v1719 = vld [vmem:[%s1359 + $0x598] sm:$0xff]
        %1720 = vst [vmem:[%s1360 + $0x598] sm:$0xff] %v1719
        %v1721 = vld [vmem:[%s1359 + $0x5a0] sm:$0xff]
        %1722 = vst [vmem:[%s1360 + $0x5a0] sm:$0xff] %v1721
        %v1723 = vld [vmem:[%s1359 + $0x5a8] sm:$0xff]
        %1724 = vst [vmem:[%s1360 + $0x5a8] sm:$0xff] %v1723
        %v1725 = vld [vmem:[%s1359 + $0x5b0] sm:$0xff]
        %1726 = vst [vmem:[%s1360 + $0x5b0] sm:$0xff] %v1725
        %v1727 = vld [vmem:[%s1359 + $0x5b8] sm:$0xff]
        %1728 = vst [vmem:[%s1360 + $0x5b8] sm:$0xff] %v1727
        %v1729 = vld [vmem:[%s1359 + $0x5c0] sm:$0xff]
        %1730 = vst [vmem:[%s1360 + $0x5c0] sm:$0xff] %v1729
        %v1731 = vld [vmem:[%s1359 + $0x5c8] sm:$0xff]
        %1732 = vst [vmem:[%s1360 + $0x5c8] sm:$0xff] %v1731
        %v1733 = vld [vmem:[%s1359 + $0x5d0] sm:$0xff]
        %1734 = vst [vmem:[%s1360 + $0x5d0] sm:$0xff] %v1733
        %v1735 = vld [vmem:[%s1359 + $0x5d8] sm:$0xff]
        %1736 = vst [vmem:[%s1360 + $0x5d8] sm:$0xff] %v1735
        %v1737 = vld [vmem:[%s1359 + $0x5e0] sm:$0xff]
        %1738 = vst [vmem:[%s1360 + $0x5e0] sm:$0xff] %v1737
        %v1739 = vld [vmem:[%s1359 + $0x5e8] sm:$0xff]
        %1740 = vst [vmem:[%s1360 + $0x5e8] sm:$0xff] %v1739
        %v1741 = vld [vmem:[%s1359 + $0x5f0] sm:$0xff]
        %1742 = vst [vmem:[%s1360 + $0x5f0] sm:$0xff] %v1741
        %v1743 = vld [vmem:[%s1359 + $0x5f8] sm:$0xff]
        %1744 = vst [vmem:[%s1360 + $0x5f8] sm:$0xff] %v1743
        %v1745 = vld [vmem:[%s1359 + $0x600] sm:$0xff]
        %1746 = vst [vmem:[%s1360 + $0x600] sm:$0xff] %v1745
        %v1747 = vld [vmem:[%s1359 + $0x608] sm:$0xff]
        %1748 = vst [vmem:[%s1360 + $0x608] sm:$0xff] %v1747
        %v1749 = vld [vmem:[%s1359 + $0x610] sm:$0xff]
        %1750 = vst [vmem:[%s1360 + $0x610] sm:$0xff] %v1749
        %v1751 = vld [vmem:[%s1359 + $0x618] sm:$0xff]
        %1752 = vst [vmem:[%s1360 + $0x618] sm:$0xff] %v1751
        %v1753 = vld [vmem:[%s1359 + $0x620] sm:$0xff]
        %1754 = vst [vmem:[%s1360 + $0x620] sm:$0xff] %v1753
        %v1755 = vld [vmem:[%s1359 + $0x628] sm:$0xff]
        %1756 = vst [vmem:[%s1360 + $0x628] sm:$0xff] %v1755
        %v1757 = vld [vmem:[%s1359 + $0x630] sm:$0xff]
        %1758 = vst [vmem:[%s1360 + $0x630] sm:$0xff] %v1757
        %v1759 = vld [vmem:[%s1359 + $0x638] sm:$0xff]
        %1760 = vst [vmem:[%s1360 + $0x638] sm:$0xff] %v1759
        %v1761 = vld [vmem:[%s1359 + $0x640] sm:$0xff]
        %1762 = vst [vmem:[%s1360 + $0x640] sm:$0xff] %v1761
        %v1763 = vld [vmem:[%s1359 + $0x648] sm:$0xff]
        %1764 = vst [vmem:[%s1360 + $0x648] sm:$0xff] %v1763
        %v1765 = vld [vmem:[%s1359 + $0x650] sm:$0xff]
        %1766 = vst [vmem:[%s1360 + $0x650] sm:$0xff] %v1765
        %v1767 = vld [vmem:[%s1359 + $0x658] sm:$0xff]
        %1768 = vst [vmem:[%s1360 + $0x658] sm:$0xff] %v1767
        %v1769 = vld [vmem:[%s1359 + $0x660] sm:$0xff]
        %1770 = vst [vmem:[%s1360 + $0x660] sm:$0xff] %v1769
        %v1771 = vld [vmem:[%s1359 + $0x668] sm:$0xff]
        %1772 = vst [vmem:[%s1360 + $0x668] sm:$0xff] %v1771
        %v1773 = vld [vmem:[%s1359 + $0x670] sm:$0xff]
        %1774 = vst [vmem:[%s1360 + $0x670] sm:$0xff] %v1773
        %v1775 = vld [vmem:[%s1359 + $0x678] sm:$0xff]
        %1776 = vst [vmem:[%s1360 + $0x678] sm:$0xff] %v1775
        %v1777 = vld [vmem:[%s1359 + $0x680] sm:$0xff]
        %1778 = vst [vmem:[%s1360 + $0x680] sm:$0xff] %v1777
        %v1779 = vld [vmem:[%s1359 + $0x688] sm:$0xff]
        %1780 = vst [vmem:[%s1360 + $0x688] sm:$0xff] %v1779
        %v1781 = vld [vmem:[%s1359 + $0x690] sm:$0xff]
        %1782 = vst [vmem:[%s1360 + $0x690] sm:$0xff] %v1781
        %v1783 = vld [vmem:[%s1359 + $0x698] sm:$0xff]
        %1784 = vst [vmem:[%s1360 + $0x698] sm:$0xff] %v1783
        %v1785 = vld [vmem:[%s1359 + $0x6a0] sm:$0xff]
        %1786 = vst [vmem:[%s1360 + $0x6a0] sm:$0xff] %v1785
        %v1787 = vld [vmem:[%s1359 + $0x6a8] sm:$0xff]
        %1788 = vst [vmem:[%s1360 + $0x6a8] sm:$0xff] %v1787
        %v1789 = vld [vmem:[%s1359 + $0x6b0] sm:$0xff]
        %1790 = vst [vmem:[%s1360 + $0x6b0] sm:$0xff] %v1789
        %v1791 = vld [vmem:[%s1359 + $0x6b8] sm:$0xff]
        %1792 = vst [vmem:[%s1360 + $0x6b8] sm:$0xff] %v1791
        %v1793 = vld [vmem:[%s1359 + $0x6c0] sm:$0xff]
        %1794 = vst [vmem:[%s1360 + $0x6c0] sm:$0xff] %v1793
        %v1795 = vld [vmem:[%s1359 + $0x6c8] sm:$0xff]
        %1796 = vst [vmem:[%s1360 + $0x6c8] sm:$0xff] %v1795
        %v1797 = vld [vmem:[%s1359 + $0x6d0] sm:$0xff]
        %1798 = vst [vmem:[%s1360 + $0x6d0] sm:$0xff] %v1797
        %v1799 = vld [vmem:[%s1359 + $0x6d8] sm:$0xff]
        %1800 = vst [vmem:[%s1360 + $0x6d8] sm:$0xff] %v1799
        %v1801 = vld [vmem:[%s1359 + $0x6e0] sm:$0xff]
        %1802 = vst [vmem:[%s1360 + $0x6e0] sm:$0xff] %v1801
        %v1803 = vld [vmem:[%s1359 + $0x6e8] sm:$0xff]
        %1804 = vst [vmem:[%s1360 + $0x6e8] sm:$0xff] %v1803
        %v1805 = vld [vmem:[%s1359 + $0x6f0] sm:$0xff]
        %1806 = vst [vmem:[%s1360 + $0x6f0] sm:$0xff] %v1805
        %v1807 = vld [vmem:[%s1359 + $0x6f8] sm:$0xff]
        %1808 = vst [vmem:[%s1360 + $0x6f8] sm:$0xff] %v1807
        %v1809 = vld [vmem:[%s1359 + $0x700] sm:$0xff]
        %1810 = vst [vmem:[%s1360 + $0x700] sm:$0xff] %v1809
        %v1811 = vld [vmem:[%s1359 + $0x708] sm:$0xff]
        %1812 = vst [vmem:[%s1360 + $0x708] sm:$0xff] %v1811
        %v1813 = vld [vmem:[%s1359 + $0x710] sm:$0xff]
        %1814 = vst [vmem:[%s1360 + $0x710] sm:$0xff] %v1813
        %v1815 = vld [vmem:[%s1359 + $0x718] sm:$0xff]
        %1816 = vst [vmem:[%s1360 + $0x718] sm:$0xff] %v1815
        %v1817 = vld [vmem:[%s1359 + $0x720] sm:$0xff]
        %1818 = vst [vmem:[%s1360 + $0x720] sm:$0xff] %v1817
        %v1819 = vld [vmem:[%s1359 + $0x728] sm:$0xff]
        %1820 = vst [vmem:[%s1360 + $0x728] sm:$0xff] %v1819
        %v1821 = vld [vmem:[%s1359 + $0x730] sm:$0xff]
        %1822 = vst [vmem:[%s1360 + $0x730] sm:$0xff] %v1821
        %v1823 = vld [vmem:[%s1359 + $0x738] sm:$0xff]
        %1824 = vst [vmem:[%s1360 + $0x738] sm:$0xff] %v1823
        %v1825 = vld [vmem:[%s1359 + $0x740] sm:$0xff]
        %1826 = vst [vmem:[%s1360 + $0x740] sm:$0xff] %v1825
        %v1827 = vld [vmem:[%s1359 + $0x748] sm:$0xff]
        %1828 = vst [vmem:[%s1360 + $0x748] sm:$0xff] %v1827
        %v1829 = vld [vmem:[%s1359 + $0x750] sm:$0xff]
        %1830 = vst [vmem:[%s1360 + $0x750] sm:$0xff] %v1829
        %v1831 = vld [vmem:[%s1359 + $0x758] sm:$0xff]
        %1832 = vst [vmem:[%s1360 + $0x758] sm:$0xff] %v1831
        %v1833 = vld [vmem:[%s1359 + $0x760] sm:$0xff]
        %1834 = vst [vmem:[%s1360 + $0x760] sm:$0xff] %v1833
        %v1835 = vld [vmem:[%s1359 + $0x768] sm:$0xff]
        %1836 = vst [vmem:[%s1360 + $0x768] sm:$0xff] %v1835
        %v1837 = vld [vmem:[%s1359 + $0x770] sm:$0xff]
        %1838 = vst [vmem:[%s1360 + $0x770] sm:$0xff] %v1837
        %v1839 = vld [vmem:[%s1359 + $0x778] sm:$0xff]
        %1840 = vst [vmem:[%s1360 + $0x778] sm:$0xff] %v1839
        %v1841 = vld [vmem:[%s1359 + $0x780] sm:$0xff]
        %1842 = vst [vmem:[%s1360 + $0x780] sm:$0xff] %v1841
        %v1843 = vld [vmem:[%s1359 + $0x788] sm:$0xff]
        %1844 = vst [vmem:[%s1360 + $0x788] sm:$0xff] %v1843
        %v1845 = vld [vmem:[%s1359 + $0x790] sm:$0xff]
        %1846 = vst [vmem:[%s1360 + $0x790] sm:$0xff] %v1845
        %v1847 = vld [vmem:[%s1359 + $0x798] sm:$0xff]
        %1848 = vst [vmem:[%s1360 + $0x798] sm:$0xff] %v1847
        %v1849 = vld [vmem:[%s1359 + $0x7a0] sm:$0xff]
        %1850 = vst [vmem:[%s1360 + $0x7a0] sm:$0xff] %v1849
        %v1851 = vld [vmem:[%s1359 + $0x7a8] sm:$0xff]
        %1852 = vst [vmem:[%s1360 + $0x7a8] sm:$0xff] %v1851
        %v1853 = vld [vmem:[%s1359 + $0x7b0] sm:$0xff]
        %1854 = vst [vmem:[%s1360 + $0x7b0] sm:$0xff] %v1853
        %v1855 = vld [vmem:[%s1359 + $0x7b8] sm:$0xff]
        %1856 = vst [vmem:[%s1360 + $0x7b8] sm:$0xff] %v1855
        %v1857 = vld [vmem:[%s1359 + $0x7c0] sm:$0xff]
        %1858 = vst [vmem:[%s1360 + $0x7c0] sm:$0xff] %v1857
        %v1859 = vld [vmem:[%s1359 + $0x7c8] sm:$0xff]
        %1860 = vst [vmem:[%s1360 + $0x7c8] sm:$0xff] %v1859
        %v1861 = vld [vmem:[%s1359 + $0x7d0] sm:$0xff]
        %1862 = vst [vmem:[%s1360 + $0x7d0] sm:$0xff] %v1861
        %v1863 = vld [vmem:[%s1359 + $0x7d8] sm:$0xff]
        %1864 = vst [vmem:[%s1360 + $0x7d8] sm:$0xff] %v1863
        %v1865 = vld [vmem:[%s1359 + $0x7e0] sm:$0xff]
        %1866 = vst [vmem:[%s1360 + $0x7e0] sm:$0xff] %v1865
        %v1867 = vld [vmem:[%s1359 + $0x7e8] sm:$0xff]
        %1868 = vst [vmem:[%s1360 + $0x7e8] sm:$0xff] %v1867
        %v1869 = vld [vmem:[%s1359 + $0x7f0] sm:$0xff]
        %1870 = vst [vmem:[%s1360 + $0x7f0] sm:$0xff] %v1869
        %v1871 = vld [vmem:[%s1359 + $0x7f8] sm:$0xff]
        %1872 = vst [vmem:[%s1360 + $0x7f8] sm:$0xff] %v1871
        %v1873 = vld [vmem:[%s1359 + $0x800] sm:$0xff]
        %1874 = vst [vmem:[%s1360 + $0x800] sm:$0xff] %v1873
        %v1875 = vld [vmem:[%s1359 + $0x808] sm:$0xff]
        %1876 = vst [vmem:[%s1360 + $0x808] sm:$0xff] %v1875
        %v1877 = vld [vmem:[%s1359 + $0x810] sm:$0xff]
        %1878 = vst [vmem:[%s1360 + $0x810] sm:$0xff] %v1877
        %v1879 = vld [vmem:[%s1359 + $0x818] sm:$0xff]
        %1880 = vst [vmem:[%s1360 + $0x818] sm:$0xff] %v1879
        %v1881 = vld [vmem:[%s1359 + $0x820] sm:$0xff]
        %1882 = vst [vmem:[%s1360 + $0x820] sm:$0xff] %v1881
        %v1883 = vld [vmem:[%s1359 + $0x828] sm:$0xff]
        %1884 = vst [vmem:[%s1360 + $0x828] sm:$0xff] %v1883
        %v1885 = vld [vmem:[%s1359 + $0x830] sm:$0xff]
        %1886 = vst [vmem:[%s1360 + $0x830] sm:$0xff] %v1885
        %v1887 = vld [vmem:[%s1359 + $0x838] sm:$0xff]
        %1888 = vst [vmem:[%s1360 + $0x838] sm:$0xff] %v1887
        %v1889 = vld [vmem:[%s1359 + $0x840] sm:$0xff]
        %1890 = vst [vmem:[%s1360 + $0x840] sm:$0xff] %v1889
        %v1891 = vld [vmem:[%s1359 + $0x848] sm:$0xff]
        %1892 = vst [vmem:[%s1360 + $0x848] sm:$0xff] %v1891
        %v1893 = vld [vmem:[%s1359 + $0x850] sm:$0xff]
        %1894 = vst [vmem:[%s1360 + $0x850] sm:$0xff] %v1893
        %v1895 = vld [vmem:[%s1359 + $0x858] sm:$0xff]
        %1896 = vst [vmem:[%s1360 + $0x858] sm:$0xff] %v1895
        %v1897 = vld [vmem:[%s1359 + $0x860] sm:$0xff]
        %1898 = vst [vmem:[%s1360 + $0x860] sm:$0xff] %v1897
        %v1899 = vld [vmem:[%s1359 + $0x868] sm:$0xff]
        %1900 = vst [vmem:[%s1360 + $0x868] sm:$0xff] %v1899
        %v1901 = vld [vmem:[%s1359 + $0x870] sm:$0xff]
        %1902 = vst [vmem:[%s1360 + $0x870] sm:$0xff] %v1901
        %v1903 = vld [vmem:[%s1359 + $0x878] sm:$0xff]
        %1904 = vst [vmem:[%s1360 + $0x878] sm:$0xff] %v1903
        %v1905 = vld [vmem:[%s1359 + $0x880] sm:$0xff]
        %1906 = vst [vmem:[%s1360 + $0x880] sm:$0xff] %v1905
        %v1907 = vld [vmem:[%s1359 + $0x888] sm:$0xff]
        %1908 = vst [vmem:[%s1360 + $0x888] sm:$0xff] %v1907
        %v1909 = vld [vmem:[%s1359 + $0x890] sm:$0xff]
        %1910 = vst [vmem:[%s1360 + $0x890] sm:$0xff] %v1909
        %v1911 = vld [vmem:[%s1359 + $0x898] sm:$0xff]
        %1912 = vst [vmem:[%s1360 + $0x898] sm:$0xff] %v1911
        %v1913 = vld [vmem:[%s1359 + $0x8a0] sm:$0xff]
        %1914 = vst [vmem:[%s1360 + $0x8a0] sm:$0xff] %v1913
        %v1915 = vld [vmem:[%s1359 + $0x8a8] sm:$0xff]
        %1916 = vst [vmem:[%s1360 + $0x8a8] sm:$0xff] %v1915
        %v1917 = vld [vmem:[%s1359 + $0x8b0] sm:$0xff]
        %1918 = vst [vmem:[%s1360 + $0x8b0] sm:$0xff] %v1917
        %v1919 = vld [vmem:[%s1359 + $0x8b8] sm:$0xff]
        %1920 = vst [vmem:[%s1360 + $0x8b8] sm:$0xff] %v1919
        %v1921 = vld [vmem:[%s1359 + $0x8c0] sm:$0xff]
        %1922 = vst [vmem:[%s1360 + $0x8c0] sm:$0xff] %v1921
        %v1923 = vld [vmem:[%s1359 + $0x8c8] sm:$0xff]
        %1924 = vst [vmem:[%s1360 + $0x8c8] sm:$0xff] %v1923
        %v1925 = vld [vmem:[%s1359 + $0x8d0] sm:$0xff]
        %1926 = vst [vmem:[%s1360 + $0x8d0] sm:$0xff] %v1925
        %v1927 = vld [vmem:[%s1359 + $0x8d8] sm:$0xff]
        %1928 = vst [vmem:[%s1360 + $0x8d8] sm:$0xff] %v1927
        %v1929 = vld [vmem:[%s1359 + $0x8e0] sm:$0xff]
        %1930 = vst [vmem:[%s1360 + $0x8e0] sm:$0xff] %v1929
        %v1931 = vld [vmem:[%s1359 + $0x8e8] sm:$0xff]
        %1932 = vst [vmem:[%s1360 + $0x8e8] sm:$0xff] %v1931
        %v1933 = vld [vmem:[%s1359 + $0x8f0] sm:$0xff]
        %1934 = vst [vmem:[%s1360 + $0x8f0] sm:$0xff] %v1933
        %v1935 = vld [vmem:[%s1359 + $0x8f8] sm:$0xff]
        %1936 = vst [vmem:[%s1360 + $0x8f8] sm:$0xff] %v1935
        %v1937 = vld [vmem:[%s1359 + $0x900] sm:$0xff]
        %1938 = vst [vmem:[%s1360 + $0x900] sm:$0xff] %v1937
        %v1939 = vld [vmem:[%s1359 + $0x908] sm:$0xff]
        %1940 = vst [vmem:[%s1360 + $0x908] sm:$0xff] %v1939
        %v1941 = vld [vmem:[%s1359 + $0x910] sm:$0xff]
        %1942 = vst [vmem:[%s1360 + $0x910] sm:$0xff] %v1941
        %v1943 = vld [vmem:[%s1359 + $0x918] sm:$0xff]
        %1944 = vst [vmem:[%s1360 + $0x918] sm:$0xff] %v1943
        %v1945 = vld [vmem:[%s1359 + $0x920] sm:$0xff]
        %1946 = vst [vmem:[%s1360 + $0x920] sm:$0xff] %v1945
        %v1947 = vld [vmem:[%s1359 + $0x928] sm:$0xff]
        %1948 = vst [vmem:[%s1360 + $0x928] sm:$0xff] %v1947
        %v1949 = vld [vmem:[%s1359 + $0x930] sm:$0xff]
        %1950 = vst [vmem:[%s1360 + $0x930] sm:$0xff] %v1949
        %v1951 = vld [vmem:[%s1359 + $0x938] sm:$0xff]
        %1952 = vst [vmem:[%s1360 + $0x938] sm:$0xff] %v1951
        %v1953 = vld [vmem:[%s1359 + $0x940] sm:$0xff]
        %1954 = vst [vmem:[%s1360 + $0x940] sm:$0xff] %v1953
        %v1955 = vld [vmem:[%s1359 + $0x948] sm:$0xff]
        %1956 = vst [vmem:[%s1360 + $0x948] sm:$0xff] %v1955
        %v1957 = vld [vmem:[%s1359 + $0x950] sm:$0xff]
        %1958 = vst [vmem:[%s1360 + $0x950] sm:$0xff] %v1957
        %v1959 = vld [vmem:[%s1359 + $0x958] sm:$0xff]
        %1960 = vst [vmem:[%s1360 + $0x958] sm:$0xff] %v1959
        %v1961 = vld [vmem:[%s1359 + $0x960] sm:$0xff]
        %1962 = vst [vmem:[%s1360 + $0x960] sm:$0xff] %v1961
        %v1963 = vld [vmem:[%s1359 + $0x968] sm:$0xff]
        %1964 = vst [vmem:[%s1360 + $0x968] sm:$0xff] %v1963
        %v1965 = vld [vmem:[%s1359 + $0x970] sm:$0xff]
        %1966 = vst [vmem:[%s1360 + $0x970] sm:$0xff] %v1965
        %v1967 = vld [vmem:[%s1359 + $0x978] sm:$0xff]
        %1968 = vst [vmem:[%s1360 + $0x978] sm:$0xff] %v1967
        %v1969 = vld [vmem:[%s1359 + $0x980] sm:$0xff]
        %1970 = vst [vmem:[%s1360 + $0x980] sm:$0xff] %v1969
        %v1971 = vld [vmem:[%s1359 + $0x988] sm:$0xff]
        %1972 = vst [vmem:[%s1360 + $0x988] sm:$0xff] %v1971
        %v1973 = vld [vmem:[%s1359 + $0x990] sm:$0xff]
        %1974 = vst [vmem:[%s1360 + $0x990] sm:$0xff] %v1973
        %v1975 = vld [vmem:[%s1359 + $0x998] sm:$0xff]
        %1976 = vst [vmem:[%s1360 + $0x998] sm:$0xff] %v1975
        %v1977 = vld [vmem:[%s1359 + $0x9a0] sm:$0xff]
        %1978 = vst [vmem:[%s1360 + $0x9a0] sm:$0xff] %v1977
        %v1979 = vld [vmem:[%s1359 + $0x9a8] sm:$0xff]
        %1980 = vst [vmem:[%s1360 + $0x9a8] sm:$0xff] %v1979
        %v1981 = vld [vmem:[%s1359 + $0x9b0] sm:$0xff]
        %1982 = vst [vmem:[%s1360 + $0x9b0] sm:$0xff] %v1981
        %v1983 = vld [vmem:[%s1359 + $0x9b8] sm:$0xff]
        %1984 = vst [vmem:[%s1360 + $0x9b8] sm:$0xff] %v1983
        %v1985 = vld [vmem:[%s1359 + $0x9c0] sm:$0xff]
        %1986 = vst [vmem:[%s1360 + $0x9c0] sm:$0xff] %v1985
        %v1987 = vld [vmem:[%s1359 + $0x9c8] sm:$0xff]
        %1988 = vst [vmem:[%s1360 + $0x9c8] sm:$0xff] %v1987
        %v1989 = vld [vmem:[%s1359 + $0x9d0] sm:$0xff]
        %1990 = vst [vmem:[%s1360 + $0x9d0] sm:$0xff] %v1989
        %v1991 = vld [vmem:[%s1359 + $0x9d8] sm:$0xff]
        %1992 = vst [vmem:[%s1360 + $0x9d8] sm:$0xff] %v1991
        %v1993 = vld [vmem:[%s1359 + $0x9e0] sm:$0xff]
        %1994 = vst [vmem:[%s1360 + $0x9e0] sm:$0xff] %v1993
        %v1995 = vld [vmem:[%s1359 + $0x9e8] sm:$0xff]
        %1996 = vst [vmem:[%s1360 + $0x9e8] sm:$0xff] %v1995
        %v1997 = vld [vmem:[%s1359 + $0x9f0] sm:$0xff]
        %1998 = vst [vmem:[%s1360 + $0x9f0] sm:$0xff] %v1997
        %v1999 = vld [vmem:[%s1359 + $0x9f8] sm:$0xff]
        %2000 = vst [vmem:[%s1360 + $0x9f8] sm:$0xff] %v1999
        %v2001 = vld [vmem:[%s1359 + $0xa00] sm:$0xff]
        %2002 = vst [vmem:[%s1360 + $0xa00] sm:$0xff] %v2001
        %v2003 = vld [vmem:[%s1359 + $0xa08] sm:$0xff]
        %2004 = vst [vmem:[%s1360 + $0xa08] sm:$0xff] %v2003
        %v2005 = vld [vmem:[%s1359 + $0xa10] sm:$0xff]
        %2006 = vst [vmem:[%s1360 + $0xa10] sm:$0xff] %v2005
        %v2007 = vld [vmem:[%s1359 + $0xa18] sm:$0xff]
        %2008 = vst [vmem:[%s1360 + $0xa18] sm:$0xff] %v2007
        %v2009 = vld [vmem:[%s1359 + $0xa20] sm:$0xff]
        %2010 = vst [vmem:[%s1360 + $0xa20] sm:$0xff] %v2009
        %v2011 = vld [vmem:[%s1359 + $0xa28] sm:$0xff]
        %2012 = vst [vmem:[%s1360 + $0xa28] sm:$0xff] %v2011
        %v2013 = vld [vmem:[%s1359 + $0xa30] sm:$0xff]
        %2014 = vst [vmem:[%s1360 + $0xa30] sm:$0xff] %v2013
        %v2015 = vld [vmem:[%s1359 + $0xa38] sm:$0xff]
        %2016 = vst [vmem:[%s1360 + $0xa38] sm:$0xff] %v2015
        %v2017 = vld [vmem:[%s1359 + $0xa40] sm:$0xff]
        %2018 = vst [vmem:[%s1360 + $0xa40] sm:$0xff] %v2017
        %v2019 = vld [vmem:[%s1359 + $0xa48] sm:$0xff]
        %2020 = vst [vmem:[%s1360 + $0xa48] sm:$0xff] %v2019
        %v2021 = vld [vmem:[%s1359 + $0xa50] sm:$0xff]
        %2022 = vst [vmem:[%s1360 + $0xa50] sm:$0xff] %v2021
        %v2023 = vld [vmem:[%s1359 + $0xa58] sm:$0xff]
        %2024 = vst [vmem:[%s1360 + $0xa58] sm:$0xff] %v2023
        %v2025 = vld [vmem:[%s1359 + $0xa60] sm:$0xff]
        %2026 = vst [vmem:[%s1360 + $0xa60] sm:$0xff] %v2025
        %v2027 = vld [vmem:[%s1359 + $0xa68] sm:$0xff]
        %2028 = vst [vmem:[%s1360 + $0xa68] sm:$0xff] %v2027
        %v2029 = vld [vmem:[%s1359 + $0xa70] sm:$0xff]
        %2030 = vst [vmem:[%s1360 + $0xa70] sm:$0xff] %v2029
        %v2031 = vld [vmem:[%s1359 + $0xa78] sm:$0xff]
        %2032 = vst [vmem:[%s1360 + $0xa78] sm:$0xff] %v2031
        %v2033 = vld [vmem:[%s1359 + $0xa80] sm:$0xff]
        %2034 = vst [vmem:[%s1360 + $0xa80] sm:$0xff] %v2033
        %v2035 = vld [vmem:[%s1359 + $0xa88] sm:$0xff]
        %2036 = vst [vmem:[%s1360 + $0xa88] sm:$0xff] %v2035
        %v2037 = vld [vmem:[%s1359 + $0xa90] sm:$0xff]
        %2038 = vst [vmem:[%s1360 + $0xa90] sm:$0xff] %v2037
        %v2039 = vld [vmem:[%s1359 + $0xa98] sm:$0xff]
        %2040 = vst [vmem:[%s1360 + $0xa98] sm:$0xff] %v2039
        %v2041 = vld [vmem:[%s1359 + $0xaa0] sm:$0xff]
        %2042 = vst [vmem:[%s1360 + $0xaa0] sm:$0xff] %v2041
        %v2043 = vld [vmem:[%s1359 + $0xaa8] sm:$0xff]
        %2044 = vst [vmem:[%s1360 + $0xaa8] sm:$0xff] %v2043
        %v2045 = vld [vmem:[%s1359 + $0xab0] sm:$0xff]
        %2046 = vst [vmem:[%s1360 + $0xab0] sm:$0xff] %v2045
        %v2047 = vld [vmem:[%s1359 + $0xab8] sm:$0xff]
        %2048 = vst [vmem:[%s1360 + $0xab8] sm:$0xff] %v2047
        %v2049 = vld [vmem:[%s1359 + $0xac0] sm:$0xff]
        %2050 = vst [vmem:[%s1360 + $0xac0] sm:$0xff] %v2049
        %v2051 = vld [vmem:[%s1359 + $0xac8] sm:$0xff]
        %2052 = vst [vmem:[%s1360 + $0xac8] sm:$0xff] %v2051
        %v2053 = vld [vmem:[%s1359 + $0xad0] sm:$0xff]
        %2054 = vst [vmem:[%s1360 + $0xad0] sm:$0xff] %v2053
        %v2055 = vld [vmem:[%s1359 + $0xad8] sm:$0xff]
        %2056 = vst [vmem:[%s1360 + $0xad8] sm:$0xff] %v2055
        %v2057 = vld [vmem:[%s1359 + $0xae0] sm:$0xff]
        %2058 = vst [vmem:[%s1360 + $0xae0] sm:$0xff] %v2057
        %v2059 = vld [vmem:[%s1359 + $0xae8] sm:$0xff]
        %2060 = vst [vmem:[%s1360 + $0xae8] sm:$0xff] %v2059
        %v2061 = vld [vmem:[%s1359 + $0xaf0] sm:$0xff]
        %2062 = vst [vmem:[%s1360 + $0xaf0] sm:$0xff] %v2061
        %v2063 = vld [vmem:[%s1359 + $0xaf8] sm:$0xff]
        %2064 = vst [vmem:[%s1360 + $0xaf8] sm:$0xff] %v2063
        %v2065 = vld [vmem:[%s1359 + $0xb00] sm:$0xff]
        %2066 = vst [vmem:[%s1360 + $0xb00] sm:$0xff] %v2065
        %v2067 = vld [vmem:[%s1359 + $0xb08] sm:$0xff]
        %2068 = vst [vmem:[%s1360 + $0xb08] sm:$0xff] %v2067
        %v2069 = vld [vmem:[%s1359 + $0xb10] sm:$0xff]
        %2070 = vst [vmem:[%s1360 + $0xb10] sm:$0xff] %v2069
        %v2071 = vld [vmem:[%s1359 + $0xb18] sm:$0xff]
        %2072 = vst [vmem:[%s1360 + $0xb18] sm:$0xff] %v2071
        %v2073 = vld [vmem:[%s1359 + $0xb20] sm:$0xff]
        %2074 = vst [vmem:[%s1360 + $0xb20] sm:$0xff] %v2073
        %v2075 = vld [vmem:[%s1359 + $0xb28] sm:$0xff]
        %2076 = vst [vmem:[%s1360 + $0xb28] sm:$0xff] %v2075
        %v2077 = vld [vmem:[%s1359 + $0xb30] sm:$0xff]
        %2078 = vst [vmem:[%s1360 + $0xb30] sm:$0xff] %v2077
        %v2079 = vld [vmem:[%s1359 + $0xb38] sm:$0xff]
        %2080 = vst [vmem:[%s1360 + $0xb38] sm:$0xff] %v2079
        %v2081 = vld [vmem:[%s1359 + $0xb40] sm:$0xff]
        %2082 = vst [vmem:[%s1360 + $0xb40] sm:$0xff] %v2081
        %v2083 = vld [vmem:[%s1359 + $0xb48] sm:$0xff]
        %2084 = vst [vmem:[%s1360 + $0xb48] sm:$0xff] %v2083
        %v2085 = vld [vmem:[%s1359 + $0xb50] sm:$0xff]
        %2086 = vst [vmem:[%s1360 + $0xb50] sm:$0xff] %v2085
        %v2087 = vld [vmem:[%s1359 + $0xb58] sm:$0xff]
        %2088 = vst [vmem:[%s1360 + $0xb58] sm:$0xff] %v2087
        %v2089 = vld [vmem:[%s1359 + $0xb60] sm:$0xff]
        %2090 = vst [vmem:[%s1360 + $0xb60] sm:$0xff] %v2089
        %v2091 = vld [vmem:[%s1359 + $0xb68] sm:$0xff]
        %2092 = vst [vmem:[%s1360 + $0xb68] sm:$0xff] %v2091
        %v2093 = vld [vmem:[%s1359 + $0xb70] sm:$0xff]
        %2094 = vst [vmem:[%s1360 + $0xb70] sm:$0xff] %v2093
        %v2095 = vld [vmem:[%s1359 + $0xb78] sm:$0xff]
        %2096 = vst [vmem:[%s1360 + $0xb78] sm:$0xff] %v2095
        %v2097 = vld [vmem:[%s1359 + $0xb80] sm:$0xff]
        %2098 = vst [vmem:[%s1360 + $0xb80] sm:$0xff] %v2097
        %v2099 = vld [vmem:[%s1359 + $0xb88] sm:$0xff]
        %2100 = vst [vmem:[%s1360 + $0xb88] sm:$0xff] %v2099
        %v2101 = vld [vmem:[%s1359 + $0xb90] sm:$0xff]
        %2102 = vst [vmem:[%s1360 + $0xb90] sm:$0xff] %v2101
        %v2103 = vld [vmem:[%s1359 + $0xb98] sm:$0xff]
        %2104 = vst [vmem:[%s1360 + $0xb98] sm:$0xff] %v2103
        %v2105 = vld [vmem:[%s1359 + $0xba0] sm:$0xff]
        %2106 = vst [vmem:[%s1360 + $0xba0] sm:$0xff] %v2105
        %v2107 = vld [vmem:[%s1359 + $0xba8] sm:$0xff]
        %2108 = vst [vmem:[%s1360 + $0xba8] sm:$0xff] %v2107
        %v2109 = vld [vmem:[%s1359 + $0xbb0] sm:$0xff]
        %2110 = vst [vmem:[%s1360 + $0xbb0] sm:$0xff] %v2109
        %v2111 = vld [vmem:[%s1359 + $0xbb8] sm:$0xff]
        %2112 = vst [vmem:[%s1360 + $0xbb8] sm:$0xff] %v2111
        %v2113 = vld [vmem:[%s1359 + $0xbc0] sm:$0xff]
        %2114 = vst [vmem:[%s1360 + $0xbc0] sm:$0xff] %v2113
        %v2115 = vld [vmem:[%s1359 + $0xbc8] sm:$0xff]
        %2116 = vst [vmem:[%s1360 + $0xbc8] sm:$0xff] %v2115
        %v2117 = vld [vmem:[%s1359 + $0xbd0] sm:$0xff]
        %2118 = vst [vmem:[%s1360 + $0xbd0] sm:$0xff] %v2117
        %v2119 = vld [vmem:[%s1359 + $0xbd8] sm:$0xff]
        %2120 = vst [vmem:[%s1360 + $0xbd8] sm:$0xff] %v2119
        %v2121 = vld [vmem:[%s1359 + $0xbe0] sm:$0xff]
        %2122 = vst [vmem:[%s1360 + $0xbe0] sm:$0xff] %v2121
        %v2123 = vld [vmem:[%s1359 + $0xbe8] sm:$0xff]
        %2124 = vst [vmem:[%s1360 + $0xbe8] sm:$0xff] %v2123
        %v2125 = vld [vmem:[%s1359 + $0xbf0] sm:$0xff]
        %2126 = vst [vmem:[%s1360 + $0xbf0] sm:$0xff] %v2125
        %v2127 = vld [vmem:[%s1359 + $0xbf8] sm:$0xff]
        %2128 = vst [vmem:[%s1360 + $0xbf8] sm:$0xff] %v2127
        %v2129 = vld [vmem:[%s1359 + $0xc00] sm:$0xff]
        %2130 = vst [vmem:[%s1360 + $0xc00] sm:$0xff] %v2129
        %v2131 = vld [vmem:[%s1359 + $0xc08] sm:$0xff]
        %2132 = vst [vmem:[%s1360 + $0xc08] sm:$0xff] %v2131
        %v2133 = vld [vmem:[%s1359 + $0xc10] sm:$0xff]
        %2134 = vst [vmem:[%s1360 + $0xc10] sm:$0xff] %v2133
        %v2135 = vld [vmem:[%s1359 + $0xc18] sm:$0xff]
        %2136 = vst [vmem:[%s1360 + $0xc18] sm:$0xff] %v2135
        %v2137 = vld [vmem:[%s1359 + $0xc20] sm:$0xff]
        %2138 = vst [vmem:[%s1360 + $0xc20] sm:$0xff] %v2137
        %v2139 = vld [vmem:[%s1359 + $0xc28] sm:$0xff]
        %2140 = vst [vmem:[%s1360 + $0xc28] sm:$0xff] %v2139
        %v2141 = vld [vmem:[%s1359 + $0xc30] sm:$0xff]
        %2142 = vst [vmem:[%s1360 + $0xc30] sm:$0xff] %v2141
        %v2143 = vld [vmem:[%s1359 + $0xc38] sm:$0xff]
        %2144 = vst [vmem:[%s1360 + $0xc38] sm:$0xff] %v2143
        %v2145 = vld [vmem:[%s1359 + $0xc40] sm:$0xff]
        %2146 = vst [vmem:[%s1360 + $0xc40] sm:$0xff] %v2145
        %v2147 = vld [vmem:[%s1359 + $0xc48] sm:$0xff]
        %2148 = vst [vmem:[%s1360 + $0xc48] sm:$0xff] %v2147
        %v2149 = vld [vmem:[%s1359 + $0xc50] sm:$0xff]
        %2150 = vst [vmem:[%s1360 + $0xc50] sm:$0xff] %v2149
        %v2151 = vld [vmem:[%s1359 + $0xc58] sm:$0xff]
        %2152 = vst [vmem:[%s1360 + $0xc58] sm:$0xff] %v2151
        %v2153 = vld [vmem:[%s1359 + $0xc60] sm:$0xff]
        %2154 = vst [vmem:[%s1360 + $0xc60] sm:$0xff] %v2153
        %v2155 = vld [vmem:[%s1359 + $0xc68] sm:$0xff]
        %2156 = vst [vmem:[%s1360 + $0xc68] sm:$0xff] %v2155
        %v2157 = vld [vmem:[%s1359 + $0xc70] sm:$0xff]
        %2158 = vst [vmem:[%s1360 + $0xc70] sm:$0xff] %v2157
        %v2159 = vld [vmem:[%s1359 + $0xc78] sm:$0xff]
        %2160 = vst [vmem:[%s1360 + $0xc78] sm:$0xff] %v2159
        %v2161 = vld [vmem:[%s1359 + $0xc80] sm:$0xff]
        %2162 = vst [vmem:[%s1360 + $0xc80] sm:$0xff] %v2161
        %v2163 = vld [vmem:[%s1359 + $0xc88] sm:$0xff]
        %2164 = vst [vmem:[%s1360 + $0xc88] sm:$0xff] %v2163
        %v2165 = vld [vmem:[%s1359 + $0xc90] sm:$0xff]
        %2166 = vst [vmem:[%s1360 + $0xc90] sm:$0xff] %v2165
        %v2167 = vld [vmem:[%s1359 + $0xc98] sm:$0xff]
        %2168 = vst [vmem:[%s1360 + $0xc98] sm:$0xff] %v2167
        %v2169 = vld [vmem:[%s1359 + $0xca0] sm:$0xff]
        %2170 = vst [vmem:[%s1360 + $0xca0] sm:$0xff] %v2169
        %v2171 = vld [vmem:[%s1359 + $0xca8] sm:$0xff]
        %2172 = vst [vmem:[%s1360 + $0xca8] sm:$0xff] %v2171
        %v2173 = vld [vmem:[%s1359 + $0xcb0] sm:$0xff]
        %2174 = vst [vmem:[%s1360 + $0xcb0] sm:$0xff] %v2173
        %v2175 = vld [vmem:[%s1359 + $0xcb8] sm:$0xff]
        %2176 = vst [vmem:[%s1360 + $0xcb8] sm:$0xff] %v2175
        %v2177 = vld [vmem:[%s1359 + $0xcc0] sm:$0xff]
        %2178 = vst [vmem:[%s1360 + $0xcc0] sm:$0xff] %v2177
        %v2179 = vld [vmem:[%s1359 + $0xcc8] sm:$0xff]
        %2180 = vst [vmem:[%s1360 + $0xcc8] sm:$0xff] %v2179
        %v2181 = vld [vmem:[%s1359 + $0xcd0] sm:$0xff]
        %2182 = vst [vmem:[%s1360 + $0xcd0] sm:$0xff] %v2181
        %v2183 = vld [vmem:[%s1359 + $0xcd8] sm:$0xff]
        %2184 = vst [vmem:[%s1360 + $0xcd8] sm:$0xff] %v2183
        %v2185 = vld [vmem:[%s1359 + $0xce0] sm:$0xff]
        %2186 = vst [vmem:[%s1360 + $0xce0] sm:$0xff] %v2185
        %v2187 = vld [vmem:[%s1359 + $0xce8] sm:$0xff]
        %2188 = vst [vmem:[%s1360 + $0xce8] sm:$0xff] %v2187
        %v2189 = vld [vmem:[%s1359 + $0xcf0] sm:$0xff]
        %2190 = vst [vmem:[%s1360 + $0xcf0] sm:$0xff] %v2189
        %v2191 = vld [vmem:[%s1359 + $0xcf8] sm:$0xff]
        %2192 = vst [vmem:[%s1360 + $0xcf8] sm:$0xff] %v2191
        %v2193 = vld [vmem:[%s1359 + $0xd00] sm:$0xff]
        %2194 = vst [vmem:[%s1360 + $0xd00] sm:$0xff] %v2193
        %v2195 = vld [vmem:[%s1359 + $0xd08] sm:$0xff]
        %2196 = vst [vmem:[%s1360 + $0xd08] sm:$0xff] %v2195
        %v2197 = vld [vmem:[%s1359 + $0xd10] sm:$0xff]
        %2198 = vst [vmem:[%s1360 + $0xd10] sm:$0xff] %v2197
        %v2199 = vld [vmem:[%s1359 + $0xd18] sm:$0xff]
        %2200 = vst [vmem:[%s1360 + $0xd18] sm:$0xff] %v2199
        %v2201 = vld [vmem:[%s1359 + $0xd20] sm:$0xff]
        %2202 = vst [vmem:[%s1360 + $0xd20] sm:$0xff] %v2201
        %v2203 = vld [vmem:[%s1359 + $0xd28] sm:$0xff]
        %2204 = vst [vmem:[%s1360 + $0xd28] sm:$0xff] %v2203
        %v2205 = vld [vmem:[%s1359 + $0xd30] sm:$0xff]
        %2206 = vst [vmem:[%s1360 + $0xd30] sm:$0xff] %v2205
        %v2207 = vld [vmem:[%s1359 + $0xd38] sm:$0xff]
        %2208 = vst [vmem:[%s1360 + $0xd38] sm:$0xff] %v2207
        %v2209 = vld [vmem:[%s1359 + $0xd40] sm:$0xff]
        %2210 = vst [vmem:[%s1360 + $0xd40] sm:$0xff] %v2209
        %v2211 = vld [vmem:[%s1359 + $0xd48] sm:$0xff]
        %2212 = vst [vmem:[%s1360 + $0xd48] sm:$0xff] %v2211
        %v2213 = vld [vmem:[%s1359 + $0xd50] sm:$0xff]
        %2214 = vst [vmem:[%s1360 + $0xd50] sm:$0xff] %v2213
        %v2215 = vld [vmem:[%s1359 + $0xd58] sm:$0xff]
        %2216 = vst [vmem:[%s1360 + $0xd58] sm:$0xff] %v2215
        %v2217 = vld [vmem:[%s1359 + $0xd60] sm:$0xff]
        %2218 = vst [vmem:[%s1360 + $0xd60] sm:$0xff] %v2217
        %v2219 = vld [vmem:[%s1359 + $0xd68] sm:$0xff]
        %2220 = vst [vmem:[%s1360 + $0xd68] sm:$0xff] %v2219
        %v2221 = vld [vmem:[%s1359 + $0xd70] sm:$0xff]
        %2222 = vst [vmem:[%s1360 + $0xd70] sm:$0xff] %v2221
        %v2223 = vld [vmem:[%s1359 + $0xd78] sm:$0xff]
        %2224 = vst [vmem:[%s1360 + $0xd78] sm:$0xff] %v2223
        %v2225 = vld [vmem:[%s1359 + $0xd80] sm:$0xff]
        %2226 = vst [vmem:[%s1360 + $0xd80] sm:$0xff] %v2225
        %v2227 = vld [vmem:[%s1359 + $0xd88] sm:$0xff]
        %2228 = vst [vmem:[%s1360 + $0xd88] sm:$0xff] %v2227
        %v2229 = vld [vmem:[%s1359 + $0xd90] sm:$0xff]
        %2230 = vst [vmem:[%s1360 + $0xd90] sm:$0xff] %v2229
        %v2231 = vld [vmem:[%s1359 + $0xd98] sm:$0xff]
        %2232 = vst [vmem:[%s1360 + $0xd98] sm:$0xff] %v2231
        %v2233 = vld [vmem:[%s1359 + $0xda0] sm:$0xff]
        %2234 = vst [vmem:[%s1360 + $0xda0] sm:$0xff] %v2233
        %v2235 = vld [vmem:[%s1359 + $0xda8] sm:$0xff]
        %2236 = vst [vmem:[%s1360 + $0xda8] sm:$0xff] %v2235
        %v2237 = vld [vmem:[%s1359 + $0xdb0] sm:$0xff]
        %2238 = vst [vmem:[%s1360 + $0xdb0] sm:$0xff] %v2237
        %v2239 = vld [vmem:[%s1359 + $0xdb8] sm:$0xff]
        %2240 = vst [vmem:[%s1360 + $0xdb8] sm:$0xff] %v2239
        %v2241 = vld [vmem:[%s1359 + $0xdc0] sm:$0xff]
        %2242 = vst [vmem:[%s1360 + $0xdc0] sm:$0xff] %v2241
        %v2243 = vld [vmem:[%s1359 + $0xdc8] sm:$0xff]
        %2244 = vst [vmem:[%s1360 + $0xdc8] sm:$0xff] %v2243
        %v2245 = vld [vmem:[%s1359 + $0xdd0] sm:$0xff]
        %2246 = vst [vmem:[%s1360 + $0xdd0] sm:$0xff] %v2245
        %v2247 = vld [vmem:[%s1359 + $0xdd8] sm:$0xff]
        %2248 = vst [vmem:[%s1360 + $0xdd8] sm:$0xff] %v2247
        %v2249 = vld [vmem:[%s1359 + $0xde0] sm:$0xff]
        %2250 = vst [vmem:[%s1360 + $0xde0] sm:$0xff] %v2249
        %v2251 = vld [vmem:[%s1359 + $0xde8] sm:$0xff]
        %2252 = vst [vmem:[%s1360 + $0xde8] sm:$0xff] %v2251
        %v2253 = vld [vmem:[%s1359 + $0xdf0] sm:$0xff]
        %2254 = vst [vmem:[%s1360 + $0xdf0] sm:$0xff] %v2253
        %v2255 = vld [vmem:[%s1359 + $0xdf8] sm:$0xff]
        %2256 = vst [vmem:[%s1360 + $0xdf8] sm:$0xff] %v2255
        %v2257 = vld [vmem:[%s1359 + $0xe00] sm:$0xff]
        %2258 = vst [vmem:[%s1360 + $0xe00] sm:$0xff] %v2257
        %v2259 = vld [vmem:[%s1359 + $0xe08] sm:$0xff]
        %2260 = vst [vmem:[%s1360 + $0xe08] sm:$0xff] %v2259
        %v2261 = vld [vmem:[%s1359 + $0xe10] sm:$0xff]
        %2262 = vst [vmem:[%s1360 + $0xe10] sm:$0xff] %v2261
        %v2263 = vld [vmem:[%s1359 + $0xe18] sm:$0xff]
        %2264 = vst [vmem:[%s1360 + $0xe18] sm:$0xff] %v2263
        %v2265 = vld [vmem:[%s1359 + $0xe20] sm:$0xff]
        %2266 = vst [vmem:[%s1360 + $0xe20] sm:$0xff] %v2265
        %v2267 = vld [vmem:[%s1359 + $0xe28] sm:$0xff]
        %2268 = vst [vmem:[%s1360 + $0xe28] sm:$0xff] %v2267
        %v2269 = vld [vmem:[%s1359 + $0xe30] sm:$0xff]
        %2270 = vst [vmem:[%s1360 + $0xe30] sm:$0xff] %v2269
        %v2271 = vld [vmem:[%s1359 + $0xe38] sm:$0xff]
        %2272 = vst [vmem:[%s1360 + $0xe38] sm:$0xff] %v2271
        %v2273 = vld [vmem:[%s1359 + $0xe40] sm:$0xff]
        %2274 = vst [vmem:[%s1360 + $0xe40] sm:$0xff] %v2273
        %v2275 = vld [vmem:[%s1359 + $0xe48] sm:$0xff]
        %2276 = vst [vmem:[%s1360 + $0xe48] sm:$0xff] %v2275
        %v2277 = vld [vmem:[%s1359 + $0xe50] sm:$0xff]
        %2278 = vst [vmem:[%s1360 + $0xe50] sm:$0xff] %v2277
        %v2279 = vld [vmem:[%s1359 + $0xe58] sm:$0xff]
        %2280 = vst [vmem:[%s1360 + $0xe58] sm:$0xff] %v2279
        %v2281 = vld [vmem:[%s1359 + $0xe60] sm:$0xff]
        %2282 = vst [vmem:[%s1360 + $0xe60] sm:$0xff] %v2281
        %v2283 = vld [vmem:[%s1359 + $0xe68] sm:$0xff]
        %2284 = vst [vmem:[%s1360 + $0xe68] sm:$0xff] %v2283
        %v2285 = vld [vmem:[%s1359 + $0xe70] sm:$0xff]
        %2286 = vst [vmem:[%s1360 + $0xe70] sm:$0xff] %v2285
        %v2287 = vld [vmem:[%s1359 + $0xe78] sm:$0xff]
        %2288 = vst [vmem:[%s1360 + $0xe78] sm:$0xff] %v2287
        %v2289 = vld [vmem:[%s1359 + $0xe80] sm:$0xff]
        %2290 = vst [vmem:[%s1360 + $0xe80] sm:$0xff] %v2289
        %v2291 = vld [vmem:[%s1359 + $0xe88] sm:$0xff]
        %2292 = vst [vmem:[%s1360 + $0xe88] sm:$0xff] %v2291
        %v2293 = vld [vmem:[%s1359 + $0xe90] sm:$0xff]
        %2294 = vst [vmem:[%s1360 + $0xe90] sm:$0xff] %v2293
        %v2295 = vld [vmem:[%s1359 + $0xe98] sm:$0xff]
        %2296 = vst [vmem:[%s1360 + $0xe98] sm:$0xff] %v2295
        %v2297 = vld [vmem:[%s1359 + $0xea0] sm:$0xff]
        %2298 = vst [vmem:[%s1360 + $0xea0] sm:$0xff] %v2297
        %v2299 = vld [vmem:[%s1359 + $0xea8] sm:$0xff]
        %2300 = vst [vmem:[%s1360 + $0xea8] sm:$0xff] %v2299
        %v2301 = vld [vmem:[%s1359 + $0xeb0] sm:$0xff]
        %2302 = vst [vmem:[%s1360 + $0xeb0] sm:$0xff] %v2301
        %v2303 = vld [vmem:[%s1359 + $0xeb8] sm:$0xff]
        %2304 = vst [vmem:[%s1360 + $0xeb8] sm:$0xff] %v2303
        %v2305 = vld [vmem:[%s1359 + $0xec0] sm:$0xff]
        %2306 = vst [vmem:[%s1360 + $0xec0] sm:$0xff] %v2305
        %v2307 = vld [vmem:[%s1359 + $0xec8] sm:$0xff]
        %2308 = vst [vmem:[%s1360 + $0xec8] sm:$0xff] %v2307
        %v2309 = vld [vmem:[%s1359 + $0xed0] sm:$0xff]
        %2310 = vst [vmem:[%s1360 + $0xed0] sm:$0xff] %v2309
        %v2311 = vld [vmem:[%s1359 + $0xed8] sm:$0xff]
        %2312 = vst [vmem:[%s1360 + $0xed8] sm:$0xff] %v2311
        %v2313 = vld [vmem:[%s1359 + $0xee0] sm:$0xff]
        %2314 = vst [vmem:[%s1360 + $0xee0] sm:$0xff] %v2313
        %v2315 = vld [vmem:[%s1359 + $0xee8] sm:$0xff]
        %2316 = vst [vmem:[%s1360 + $0xee8] sm:$0xff] %v2315
        %v2317 = vld [vmem:[%s1359 + $0xef0] sm:$0xff]
        %2318 = vst [vmem:[%s1360 + $0xef0] sm:$0xff] %v2317
        %v2319 = vld [vmem:[%s1359 + $0xef8] sm:$0xff]
        %2320 = vst [vmem:[%s1360 + $0xef8] sm:$0xff] %v2319
        %v2321 = vld [vmem:[%s1359 + $0xf00] sm:$0xff]
        %2322 = vst [vmem:[%s1360 + $0xf00] sm:$0xff] %v2321
        %v2323 = vld [vmem:[%s1359 + $0xf08] sm:$0xff]
        %2324 = vst [vmem:[%s1360 + $0xf08] sm:$0xff] %v2323
        %v2325 = vld [vmem:[%s1359 + $0xf10] sm:$0xff]
        %2326 = vst [vmem:[%s1360 + $0xf10] sm:$0xff] %v2325
        %v2327 = vld [vmem:[%s1359 + $0xf18] sm:$0xff]
        %2328 = vst [vmem:[%s1360 + $0xf18] sm:$0xff] %v2327
        %v2329 = vld [vmem:[%s1359 + $0xf20] sm:$0xff]
        %2330 = vst [vmem:[%s1360 + $0xf20] sm:$0xff] %v2329
        %v2331 = vld [vmem:[%s1359 + $0xf28] sm:$0xff]
        %2332 = vst [vmem:[%s1360 + $0xf28] sm:$0xff] %v2331
        %v2333 = vld [vmem:[%s1359 + $0xf30] sm:$0xff]
        %2334 = vst [vmem:[%s1360 + $0xf30] sm:$0xff] %v2333
        %v2335 = vld [vmem:[%s1359 + $0xf38] sm:$0xff]
        %2336 = vst [vmem:[%s1360 + $0xf38] sm:$0xff] %v2335
        %v2337 = vld [vmem:[%s1359 + $0xf40] sm:$0xff]
        %2338 = vst [vmem:[%s1360 + $0xf40] sm:$0xff] %v2337
        %v2339 = vld [vmem:[%s1359 + $0xf48] sm:$0xff]
        %2340 = vst [vmem:[%s1360 + $0xf48] sm:$0xff] %v2339
        %v2341 = vld [vmem:[%s1359 + $0xf50] sm:$0xff]
        %2342 = vst [vmem:[%s1360 + $0xf50] sm:$0xff] %v2341
        %v2343 = vld [vmem:[%s1359 + $0xf58] sm:$0xff]
        %2344 = vst [vmem:[%s1360 + $0xf58] sm:$0xff] %v2343
        %v2345 = vld [vmem:[%s1359 + $0xf60] sm:$0xff]
        %2346 = vst [vmem:[%s1360 + $0xf60] sm:$0xff] %v2345
        %v2347 = vld [vmem:[%s1359 + $0xf68] sm:$0xff]
        %2348 = vst [vmem:[%s1360 + $0xf68] sm:$0xff] %v2347
        %v2349 = vld [vmem:[%s1359 + $0xf70] sm:$0xff]
        %2350 = vst [vmem:[%s1360 + $0xf70] sm:$0xff] %v2349
        %v2351 = vld [vmem:[%s1359 + $0xf78] sm:$0xff]
        %2352 = vst [vmem:[%s1360 + $0xf78] sm:$0xff] %v2351
        %v2353 = vld [vmem:[%s1359 + $0xf80] sm:$0xff]
        %2354 = vst [vmem:[%s1360 + $0xf80] sm:$0xff] %v2353
        %v2355 = vld [vmem:[%s1359 + $0xf88] sm:$0xff]
        %2356 = vst [vmem:[%s1360 + $0xf88] sm:$0xff] %v2355
        %v2357 = vld [vmem:[%s1359 + $0xf90] sm:$0xff]
        %2358 = vst [vmem:[%s1360 + $0xf90] sm:$0xff] %v2357
        %v2359 = vld [vmem:[%s1359 + $0xf98] sm:$0xff]
        %2360 = vst [vmem:[%s1360 + $0xf98] sm:$0xff] %v2359
        %v2361 = vld [vmem:[%s1359 + $0xfa0] sm:$0xff]
        %2362 = vst [vmem:[%s1360 + $0xfa0] sm:$0xff] %v2361
        %v2363 = vld [vmem:[%s1359 + $0xfa8] sm:$0xff]
        %2364 = vst [vmem:[%s1360 + $0xfa8] sm:$0xff] %v2363
        %v2365 = vld [vmem:[%s1359 + $0xfb0] sm:$0xff]
        %2366 = vst [vmem:[%s1360 + $0xfb0] sm:$0xff] %v2365
        %v2367 = vld [vmem:[%s1359 + $0xfb8] sm:$0xff]
        %2368 = vst [vmem:[%s1360 + $0xfb8] sm:$0xff] %v2367
        %v2369 = vld [vmem:[%s1359 + $0xfc0] sm:$0xff]
        %2370 = vst [vmem:[%s1360 + $0xfc0] sm:$0xff] %v2369
        %v2371 = vld [vmem:[%s1359 + $0xfc8] sm:$0xff]
        %2372 = vst [vmem:[%s1360 + $0xfc8] sm:$0xff] %v2371
        %v2373 = vld [vmem:[%s1359 + $0xfd0] sm:$0xff]
        %2374 = vst [vmem:[%s1360 + $0xfd0] sm:$0xff] %v2373
        %v2375 = vld [vmem:[%s1359 + $0xfd8] sm:$0xff]
        %2376 = vst [vmem:[%s1360 + $0xfd8] sm:$0xff] %v2375
        %v2377 = vld [vmem:[%s1359 + $0xfe0] sm:$0xff]
        %2378 = vst [vmem:[%s1360 + $0xfe0] sm:$0xff] %v2377
        %v2379 = vld [vmem:[%s1359 + $0xfe8] sm:$0xff]
        %2380 = vst [vmem:[%s1360 + $0xfe8] sm:$0xff] %v2379
        %v2381 = vld [vmem:[%s1359 + $0xff0] sm:$0xff]
        %2382 = vst [vmem:[%s1360 + $0xff0] sm:$0xff] %v2381
        %v2383 = vld [vmem:[%s1359 + $0xff8] sm:$0xff]
        %2384 = vst [vmem:[%s1360 + $0xff8] sm:$0xff] %v2383
        %v2385 = vld [vmem:[%s1359 + $0x1000] sm:$0xff]
        %2386 = vst [vmem:[%s1360 + $0x1000] sm:$0xff] %v2385
        %v2387 = vld [vmem:[%s1359 + $0x1008] sm:$0xff]
        %2388 = vst [vmem:[%s1360 + $0x1008] sm:$0xff] %v2387
        %v2389 = vld [vmem:[%s1359 + $0x1010] sm:$0xff]
        %2390 = vst [vmem:[%s1360 + $0x1010] sm:$0xff] %v2389
        %v2391 = vld [vmem:[%s1359 + $0x1018] sm:$0xff]
        %2392 = vst [vmem:[%s1360 + $0x1018] sm:$0xff] %v2391
        %v2393 = vld [vmem:[%s1359 + $0x1020] sm:$0xff]
        %2394 = vst [vmem:[%s1360 + $0x1020] sm:$0xff] %v2393
        %v2395 = vld [vmem:[%s1359 + $0x1028] sm:$0xff]
        %2396 = vst [vmem:[%s1360 + $0x1028] sm:$0xff] %v2395
        %v2397 = vld [vmem:[%s1359 + $0x1030] sm:$0xff]
        %2398 = vst [vmem:[%s1360 + $0x1030] sm:$0xff] %v2397
        %v2399 = vld [vmem:[%s1359 + $0x1038] sm:$0xff]
        %2400 = vst [vmem:[%s1360 + $0x1038] sm:$0xff] %v2399
        %v2401 = vld [vmem:[%s1359 + $0x1040] sm:$0xff]
        %2402 = vst [vmem:[%s1360 + $0x1040] sm:$0xff] %v2401
        %v2403 = vld [vmem:[%s1359 + $0x1048] sm:$0xff]
        %2404 = vst [vmem:[%s1360 + $0x1048] sm:$0xff] %v2403
        %v2405 = vld [vmem:[%s1359 + $0x1050] sm:$0xff]
        %2406 = vst [vmem:[%s1360 + $0x1050] sm:$0xff] %v2405
        %v2407 = vld [vmem:[%s1359 + $0x1058] sm:$0xff]
        %2408 = vst [vmem:[%s1360 + $0x1058] sm:$0xff] %v2407
        %v2409 = vld [vmem:[%s1359 + $0x1060] sm:$0xff]
        %2410 = vst [vmem:[%s1360 + $0x1060] sm:$0xff] %v2409
        %v2411 = vld [vmem:[%s1359 + $0x1068] sm:$0xff]
        %2412 = vst [vmem:[%s1360 + $0x1068] sm:$0xff] %v2411
        %v2413 = vld [vmem:[%s1359 + $0x1070] sm:$0xff]
        %2414 = vst [vmem:[%s1360 + $0x1070] sm:$0xff] %v2413
        %v2415 = vld [vmem:[%s1359 + $0x1078] sm:$0xff]
        %2416 = vst [vmem:[%s1360 + $0x1078] sm:$0xff] %v2415
        %v2417 = vld [vmem:[%s1359 + $0x1080] sm:$0xff]
        %2418 = vst [vmem:[%s1360 + $0x1080] sm:$0xff] %v2417
        %v2419 = vld [vmem:[%s1359 + $0x1088] sm:$0xff]
        %2420 = vst [vmem:[%s1360 + $0x1088] sm:$0xff] %v2419
        %v2421 = vld [vmem:[%s1359 + $0x1090] sm:$0xff]
        %2422 = vst [vmem:[%s1360 + $0x1090] sm:$0xff] %v2421
        %v2423 = vld [vmem:[%s1359 + $0x1098] sm:$0xff]
        %2424 = vst [vmem:[%s1360 + $0x1098] sm:$0xff] %v2423
        %v2425 = vld [vmem:[%s1359 + $0x10a0] sm:$0xff]
        %2426 = vst [vmem:[%s1360 + $0x10a0] sm:$0xff] %v2425
        %v2427 = vld [vmem:[%s1359 + $0x10a8] sm:$0xff]
        %2428 = vst [vmem:[%s1360 + $0x10a8] sm:$0xff] %v2427
        %v2429 = vld [vmem:[%s1359 + $0x10b0] sm:$0xff]
        %2430 = vst [vmem:[%s1360 + $0x10b0] sm:$0xff] %v2429
        %v2431 = vld [vmem:[%s1359 + $0x10b8] sm:$0xff]
        %2432 = vst [vmem:[%s1360 + $0x10b8] sm:$0xff] %v2431
        %v2433 = vld [vmem:[%s1359 + $0x10c0] sm:$0xff]
        %2434 = vst [vmem:[%s1360 + $0x10c0] sm:$0xff] %v2433
        %v2435 = vld [vmem:[%s1359 + $0x10c8] sm:$0xff]
        %2436 = vst [vmem:[%s1360 + $0x10c8] sm:$0xff] %v2435
        %v2437 = vld [vmem:[%s1359 + $0x10d0] sm:$0xff]
        %2438 = vst [vmem:[%s1360 + $0x10d0] sm:$0xff] %v2437
        %v2439 = vld [vmem:[%s1359 + $0x10d8] sm:$0xff]
        %2440 = vst [vmem:[%s1360 + $0x10d8] sm:$0xff] %v2439
        %v2441 = vld [vmem:[%s1359 + $0x10e0] sm:$0xff]
        %2442 = vst [vmem:[%s1360 + $0x10e0] sm:$0xff] %v2441
        %v2443 = vld [vmem:[%s1359 + $0x10e8] sm:$0xff]
        %2444 = vst [vmem:[%s1360 + $0x10e8] sm:$0xff] %v2443
        %v2445 = vld [vmem:[%s1359 + $0x10f0] sm:$0xff]
        %2446 = vst [vmem:[%s1360 + $0x10f0] sm:$0xff] %v2445
        %v2447 = vld [vmem:[%s1359 + $0x10f8] sm:$0xff]
        %2448 = vst [vmem:[%s1360 + $0x10f8] sm:$0xff] %v2447
        %v2449 = vld [vmem:[%s1359 + $0x1100] sm:$0xff]
        %2450 = vst [vmem:[%s1360 + $0x1100] sm:$0xff] %v2449
        %v2451 = vld [vmem:[%s1359 + $0x1108] sm:$0xff]
        %2452 = vst [vmem:[%s1360 + $0x1108] sm:$0xff] %v2451
        %v2453 = vld [vmem:[%s1359 + $0x1110] sm:$0xff]
        %2454 = vst [vmem:[%s1360 + $0x1110] sm:$0xff] %v2453
        %v2455 = vld [vmem:[%s1359 + $0x1118] sm:$0xff]
        %2456 = vst [vmem:[%s1360 + $0x1118] sm:$0xff] %v2455
        %v2457 = vld [vmem:[%s1359 + $0x1120] sm:$0xff]
        %2458 = vst [vmem:[%s1360 + $0x1120] sm:$0xff] %v2457
        %v2459 = vld [vmem:[%s1359 + $0x1128] sm:$0xff]
        %2460 = vst [vmem:[%s1360 + $0x1128] sm:$0xff] %v2459
        %v2461 = vld [vmem:[%s1359 + $0x1130] sm:$0xff]
        %2462 = vst [vmem:[%s1360 + $0x1130] sm:$0xff] %v2461
        %v2463 = vld [vmem:[%s1359 + $0x1138] sm:$0xff]
        %2464 = vst [vmem:[%s1360 + $0x1138] sm:$0xff] %v2463
        %v2465 = vld [vmem:[%s1359 + $0x1140] sm:$0xff]
        %2466 = vst [vmem:[%s1360 + $0x1140] sm:$0xff] %v2465
        %v2467 = vld [vmem:[%s1359 + $0x1148] sm:$0xff]
        %2468 = vst [vmem:[%s1360 + $0x1148] sm:$0xff] %v2467
        %v2469 = vld [vmem:[%s1359 + $0x1150] sm:$0xff]
        %2470 = vst [vmem:[%s1360 + $0x1150] sm:$0xff] %v2469
        %v2471 = vld [vmem:[%s1359 + $0x1158] sm:$0xff]
        %2472 = vst [vmem:[%s1360 + $0x1158] sm:$0xff] %v2471
        %v2473 = vld [vmem:[%s1359 + $0x1160] sm:$0xff]
        %2474 = vst [vmem:[%s1360 + $0x1160] sm:$0xff] %v2473
        %v2475 = vld [vmem:[%s1359 + $0x1168] sm:$0xff]
        %2476 = vst [vmem:[%s1360 + $0x1168] sm:$0xff] %v2475
        %v2477 = vld [vmem:[%s1359 + $0x1170] sm:$0xff]
        %2478 = vst [vmem:[%s1360 + $0x1170] sm:$0xff] %v2477
        %v2479 = vld [vmem:[%s1359 + $0x1178] sm:$0xff]
        %2480 = vst [vmem:[%s1360 + $0x1178] sm:$0xff] %v2479
        %v2481 = vld [vmem:[%s1359 + $0x1180] sm:$0xff]
        %2482 = vst [vmem:[%s1360 + $0x1180] sm:$0xff] %v2481
        %v2483 = vld [vmem:[%s1359 + $0x1188] sm:$0xff]
        %2484 = vst [vmem:[%s1360 + $0x1188] sm:$0xff] %v2483
        %v2485 = vld [vmem:[%s1359 + $0x1190] sm:$0xff]
        %2486 = vst [vmem:[%s1360 + $0x1190] sm:$0xff] %v2485
        %v2487 = vld [vmem:[%s1359 + $0x1198] sm:$0xff]
        %2488 = vst [vmem:[%s1360 + $0x1198] sm:$0xff] %v2487
        %v2489 = vld [vmem:[%s1359 + $0x11a0] sm:$0xff]
        %2490 = vst [vmem:[%s1360 + $0x11a0] sm:$0xff] %v2489
        %v2491 = vld [vmem:[%s1359 + $0x11a8] sm:$0xff]
        %2492 = vst [vmem:[%s1360 + $0x11a8] sm:$0xff] %v2491
        %v2493 = vld [vmem:[%s1359 + $0x11b0] sm:$0xff]
        %2494 = vst [vmem:[%s1360 + $0x11b0] sm:$0xff] %v2493
        %v2495 = vld [vmem:[%s1359 + $0x11b8] sm:$0xff]
        %2496 = vst [vmem:[%s1360 + $0x11b8] sm:$0xff] %v2495
        %v2497 = vld [vmem:[%s1359 + $0x11c0] sm:$0xff]
        %2498 = vst [vmem:[%s1360 + $0x11c0] sm:$0xff] %v2497
        %v2499 = vld [vmem:[%s1359 + $0x11c8] sm:$0xff]
        %2500 = vst [vmem:[%s1360 + $0x11c8] sm:$0xff] %v2499
        %v2501 = vld [vmem:[%s1359 + $0x11d0] sm:$0xff]
        %2502 = vst [vmem:[%s1360 + $0x11d0] sm:$0xff] %v2501
        %v2503 = vld [vmem:[%s1359 + $0x11d8] sm:$0xff]
        %2504 = vst [vmem:[%s1360 + $0x11d8] sm:$0xff] %v2503
        %v2505 = vld [vmem:[%s1359 + $0x11e0] sm:$0xff]
        %2506 = vst [vmem:[%s1360 + $0x11e0] sm:$0xff] %v2505
        %v2507 = vld [vmem:[%s1359 + $0x11e8] sm:$0xff]
        %2508 = vst [vmem:[%s1360 + $0x11e8] sm:$0xff] %v2507
        %v2509 = vld [vmem:[%s1359 + $0x11f0] sm:$0xff]
        %2510 = vst [vmem:[%s1360 + $0x11f0] sm:$0xff] %v2509
        %v2511 = vld [vmem:[%s1359 + $0x11f8] sm:$0xff]
        %2512 = vst [vmem:[%s1360 + $0x11f8] sm:$0xff] %v2511
        %v2513 = vld [vmem:[%s1359 + $0x1200] sm:$0xff]
        %2514 = vst [vmem:[%s1360 + $0x1200] sm:$0xff] %v2513
        %v2515 = vld [vmem:[%s1359 + $0x1208] sm:$0xff]
        %2516 = vst [vmem:[%s1360 + $0x1208] sm:$0xff] %v2515
        %v2517 = vld [vmem:[%s1359 + $0x1210] sm:$0xff]
        %2518 = vst [vmem:[%s1360 + $0x1210] sm:$0xff] %v2517
        %v2519 = vld [vmem:[%s1359 + $0x1218] sm:$0xff]
        %2520 = vst [vmem:[%s1360 + $0x1218] sm:$0xff] %v2519
        %v2521 = vld [vmem:[%s1359 + $0x1220] sm:$0xff]
        %2522 = vst [vmem:[%s1360 + $0x1220] sm:$0xff] %v2521
        %v2523 = vld [vmem:[%s1359 + $0x1228] sm:$0xff]
        %2524 = vst [vmem:[%s1360 + $0x1228] sm:$0xff] %v2523
        %v2525 = vld [vmem:[%s1359 + $0x1230] sm:$0xff]
        %2526 = vst [vmem:[%s1360 + $0x1230] sm:$0xff] %v2525
        %v2527 = vld [vmem:[%s1359 + $0x1238] sm:$0xff]
        %2528 = vst [vmem:[%s1360 + $0x1238] sm:$0xff] %v2527
        %v2529 = vld [vmem:[%s1359 + $0x1240] sm:$0xff]
        %2530 = vst [vmem:[%s1360 + $0x1240] sm:$0xff] %v2529
        %v2531 = vld [vmem:[%s1359 + $0x1248] sm:$0xff]
        %2532 = vst [vmem:[%s1360 + $0x1248] sm:$0xff] %v2531
        %v2533 = vld [vmem:[%s1359 + $0x1250] sm:$0xff]
        %2534 = vst [vmem:[%s1360 + $0x1250] sm:$0xff] %v2533
        %v2535 = vld [vmem:[%s1359 + $0x1258] sm:$0xff]
        %2536 = vst [vmem:[%s1360 + $0x1258] sm:$0xff] %v2535
        %v2537 = vld [vmem:[%s1359 + $0x1260] sm:$0xff]
        %2538 = vst [vmem:[%s1360 + $0x1260] sm:$0xff] %v2537
        %v2539 = vld [vmem:[%s1359 + $0x1268] sm:$0xff]
        %2540 = vst [vmem:[%s1360 + $0x1268] sm:$0xff] %v2539
        %v2541 = vld [vmem:[%s1359 + $0x1270] sm:$0xff]
        %2542 = vst [vmem:[%s1360 + $0x1270] sm:$0xff] %v2541
        %v2543 = vld [vmem:[%s1359 + $0x1278] sm:$0xff]
        %2544 = vst [vmem:[%s1360 + $0x1278] sm:$0xff] %v2543
        %v2545 = vld [vmem:[%s1359 + $0x1280] sm:$0xff]
        %2546 = vst [vmem:[%s1360 + $0x1280] sm:$0xff] %v2545
        %v2547 = vld [vmem:[%s1359 + $0x1288] sm:$0xff]
        %2548 = vst [vmem:[%s1360 + $0x1288] sm:$0xff] %v2547
        %v2549 = vld [vmem:[%s1359 + $0x1290] sm:$0xff]
        %2550 = vst [vmem:[%s1360 + $0x1290] sm:$0xff] %v2549
        %v2551 = vld [vmem:[%s1359 + $0x1298] sm:$0xff]
        %2552 = vst [vmem:[%s1360 + $0x1298] sm:$0xff] %v2551
        %v2553 = vld [vmem:[%s1359 + $0x12a0] sm:$0xff]
        %2554 = vst [vmem:[%s1360 + $0x12a0] sm:$0xff] %v2553
        %v2555 = vld [vmem:[%s1359 + $0x12a8] sm:$0xff]
        %2556 = vst [vmem:[%s1360 + $0x12a8] sm:$0xff] %v2555
        %v2557 = vld [vmem:[%s1359 + $0x12b0] sm:$0xff]
        %2558 = vst [vmem:[%s1360 + $0x12b0] sm:$0xff] %v2557
        %v2559 = vld [vmem:[%s1359 + $0x12b8] sm:$0xff]
        %2560 = vst [vmem:[%s1360 + $0x12b8] sm:$0xff] %v2559
        %v2561 = vld [vmem:[%s1359 + $0x12c0] sm:$0xff]
        %2562 = vst [vmem:[%s1360 + $0x12c0] sm:$0xff] %v2561
        %v2563 = vld [vmem:[%s1359 + $0x12c8] sm:$0xff]
        %2564 = vst [vmem:[%s1360 + $0x12c8] sm:$0xff] %v2563
        %v2565 = vld [vmem:[%s1359 + $0x12d0] sm:$0xff]
        %2566 = vst [vmem:[%s1360 + $0x12d0] sm:$0xff] %v2565
        %v2567 = vld [vmem:[%s1359 + $0x12d8] sm:$0xff]
        %2568 = vst [vmem:[%s1360 + $0x12d8] sm:$0xff] %v2567
        %v2569 = vld [vmem:[%s1359 + $0x12e0] sm:$0xff]
        %2570 = vst [vmem:[%s1360 + $0x12e0] sm:$0xff] %v2569
        %v2571 = vld [vmem:[%s1359 + $0x12e8] sm:$0xff]
        %2572 = vst [vmem:[%s1360 + $0x12e8] sm:$0xff] %v2571
        %v2573 = vld [vmem:[%s1359 + $0x12f0] sm:$0xff]
        %2574 = vst [vmem:[%s1360 + $0x12f0] sm:$0xff] %v2573
        %v2575 = vld [vmem:[%s1359 + $0x12f8] sm:$0xff]
        %2576 = vst [vmem:[%s1360 + $0x12f8] sm:$0xff] %v2575
        %v2577 = vld [vmem:[%s1359 + $0x1300] sm:$0xff]
        %2578 = vst [vmem:[%s1360 + $0x1300] sm:$0xff] %v2577
        %v2579 = vld [vmem:[%s1359 + $0x1308] sm:$0xff]
        %2580 = vst [vmem:[%s1360 + $0x1308] sm:$0xff] %v2579
        %v2581 = vld [vmem:[%s1359 + $0x1310] sm:$0xff]
        %2582 = vst [vmem:[%s1360 + $0x1310] sm:$0xff] %v2581
        %v2583 = vld [vmem:[%s1359 + $0x1318] sm:$0xff]
        %2584 = vst [vmem:[%s1360 + $0x1318] sm:$0xff] %v2583
        %v2585 = vld [vmem:[%s1359 + $0x1320] sm:$0xff]
        %2586 = vst [vmem:[%s1360 + $0x1320] sm:$0xff] %v2585
        %v2587 = vld [vmem:[%s1359 + $0x1328] sm:$0xff]
        %2588 = vst [vmem:[%s1360 + $0x1328] sm:$0xff] %v2587
        %v2589 = vld [vmem:[%s1359 + $0x1330] sm:$0xff]
        %2590 = vst [vmem:[%s1360 + $0x1330] sm:$0xff] %v2589
        %v2591 = vld [vmem:[%s1359 + $0x1338] sm:$0xff]
        %2592 = vst [vmem:[%s1360 + $0x1338] sm:$0xff] %v2591
        %v2593 = vld [vmem:[%s1359 + $0x1340] sm:$0xff]
        %2594 = vst [vmem:[%s1360 + $0x1340] sm:$0xff] %v2593
        %v2595 = vld [vmem:[%s1359 + $0x1348] sm:$0xff]
        %2596 = vst [vmem:[%s1360 + $0x1348] sm:$0xff] %v2595
        %v2597 = vld [vmem:[%s1359 + $0x1350] sm:$0xff]
        %2598 = vst [vmem:[%s1360 + $0x1350] sm:$0xff] %v2597
        %v2599 = vld [vmem:[%s1359 + $0x1358] sm:$0xff]
        %2600 = vst [vmem:[%s1360 + $0x1358] sm:$0xff] %v2599
        %v2601 = vld [vmem:[%s1359 + $0x1360] sm:$0xff]
        %2602 = vst [vmem:[%s1360 + $0x1360] sm:$0xff] %v2601
        %v2603 = vld [vmem:[%s1359 + $0x1368] sm:$0xff]
        %2604 = vst [vmem:[%s1360 + $0x1368] sm:$0xff] %v2603
        %v2605 = vld [vmem:[%s1359 + $0x1370] sm:$0xff]
        %2606 = vst [vmem:[%s1360 + $0x1370] sm:$0xff] %v2605
        %v2607 = vld [vmem:[%s1359 + $0x1378] sm:$0xff]
        %2608 = vst [vmem:[%s1360 + $0x1378] sm:$0xff] %v2607
        %v2609 = vld [vmem:[%s1359 + $0x1380] sm:$0xff]
        %2610 = vst [vmem:[%s1360 + $0x1380] sm:$0xff] %v2609
        %v2611 = vld [vmem:[%s1359 + $0x1388] sm:$0xff]
        %2612 = vst [vmem:[%s1360 + $0x1388] sm:$0xff] %v2611
        %v2613 = vld [vmem:[%s1359 + $0x1390] sm:$0xff]
        %2614 = vst [vmem:[%s1360 + $0x1390] sm:$0xff] %v2613
        %v2615 = vld [vmem:[%s1359 + $0x1398] sm:$0xff]
        %2616 = vst [vmem:[%s1360 + $0x1398] sm:$0xff] %v2615
        %v2617 = vld [vmem:[%s1359 + $0x13a0] sm:$0xff]
        %2618 = vst [vmem:[%s1360 + $0x13a0] sm:$0xff] %v2617
        %v2619 = vld [vmem:[%s1359 + $0x13a8] sm:$0xff]
        %2620 = vst [vmem:[%s1360 + $0x13a8] sm:$0xff] %v2619
        %v2621 = vld [vmem:[%s1359 + $0x13b0] sm:$0xff]
        %2622 = vst [vmem:[%s1360 + $0x13b0] sm:$0xff] %v2621
        %v2623 = vld [vmem:[%s1359 + $0x13b8] sm:$0xff]
        %2624 = vst [vmem:[%s1360 + $0x13b8] sm:$0xff] %v2623
        %v2625 = vld [vmem:[%s1359 + $0x13c0] sm:$0xff]
        %2626 = vst [vmem:[%s1360 + $0x13c0] sm:$0xff] %v2625
        %v2627 = vld [vmem:[%s1359 + $0x13c8] sm:$0xff]
        %2628 = vst [vmem:[%s1360 + $0x13c8] sm:$0xff] %v2627
        %v2629 = vld [vmem:[%s1359 + $0x13d0] sm:$0xff]
        %2630 = vst [vmem:[%s1360 + $0x13d0] sm:$0xff] %v2629
        %v2631 = vld [vmem:[%s1359 + $0x13d8] sm:$0xff]
        %2632 = vst [vmem:[%s1360 + $0x13d8] sm:$0xff] %v2631
        %v2633 = vld [vmem:[%s1359 + $0x13e0] sm:$0xff]
        %2634 = vst [vmem:[%s1360 + $0x13e0] sm:$0xff] %v2633
        %v2635 = vld [vmem:[%s1359 + $0x13e8] sm:$0xff]
        %2636 = vst [vmem:[%s1360 + $0x13e8] sm:$0xff] %v2635
        %v2637 = vld [vmem:[%s1359 + $0x13f0] sm:$0xff]
        %2638 = vst [vmem:[%s1360 + $0x13f0] sm:$0xff] %v2637
        %v2639 = vld [vmem:[%s1359 + $0x13f8] sm:$0xff]
        %2640 = vst [vmem:[%s1360 + $0x13f8] sm:$0xff] %v2639
      $region59: #{_step_impl.1} parent=53 // loop_footer
        %s1358 = sadd.s32 1, %s1354
      $region60: #{_step_impl.1} parent=53 // loop_footer_branch
        %1353 = sbr.rel target = $region56
      $region61: #{_step_impl.1} parent=53 // loop_exit
        _
    $region54: #{_step_impl.1} parent=38 // pred_fallthru
      _
    %p2641 = pneg %p1349
    // Predicated region
    $region62: #{_step_impl.1} parent=38 // pred_check
      _
    $region63: #{_step_impl.1} parent=38 // pred_check_branch
      %2643 = sbr.rel (%p1349) target = $region65
    $region64: #{_step_impl.1} parent=38 // pred_region
      %s2644 = sand.u32 5120, 7
    $region65: #{_step_impl.1} parent=38 // pred_fallthru
      _
  $region39: #{_step_impl.1} parent=0 // pred_fallthru
    _
  // Predicated region
  $region40: #{_step_impl.1} parent=0 // pred_check
    %p1334 = pneg %p1330
  $region41: #{_step_impl.1} parent=0 // pred_check_branch
    %1336 = sbr.rel (%p1334) target = $region43
  $region42: #{_step_impl.1} parent=0 // pred_region
    %s1337 = sshllo.u32 0, 5120
    loop: start=0, step=1, limit=1
    $region44: #{_step_impl.1} parent=42 // loop_pre_header
      _
    $region45: #{_step_impl.1} parent=42 // loop_header
      %s1339 = sphi 0, %s1343
      %p1340 = scmp.ge.s32.totalorder %s1339, 1
      %s1344 = sphi %s1326, %s1326
      %s1345 = sphi %s1327, %s1327
    $region46: #{_step_impl.1} parent=42 // loop_header_branch
      %1342 = sbr.rel (%p1340) target = $region50
    $region47: #{_step_impl.1} parent=42 // loop_body
      %v1346 = vld [vmem:[%s1344] sm:%s1337]
      %1347 = vst [vmem:[%s1345] sm:%s1337] %v1346
    $region48: #{_step_impl.1} parent=42 // loop_footer
      %s1343 = sadd.s32 1, %s1339
    $region49: #{_step_impl.1} parent=42 // loop_footer_branch
      %1338 = sbr.rel target = $region45
    $region50: #{_step_impl.1} parent=42 // loop_exit
      _
  $region43: #{_step_impl.1} parent=0 // pred_fallthru
    _
  // Predicated region
  $region66: #{_step_impl.1} parent=0 // pred_check
    _
  $region67: #{_step_impl.1} parent=0 // pred_check_branch
    %2647 = sbr.rel (0) target = $region69
  $region68: #{_step_impl.1} parent=0 // pred_region
    %2648 = vsyncadd %s1328, 81920
  $region69: #{_step_impl.1} parent=0 // pred_fallthru
    _
  %s2649 = smul.u32 8, 40
  %s2650 = smul.u32 %s2649, 16
  %s2651 = sshll.u32 %s2650, 4
  %2652 = dma.done [#allocation2], %s2651
  %s2653 = sshll.u32 %s2650, 4
  %2654 = dma.done %s1328, %s2653
  %2655 = vsyncmov [#allocation2]
  %s2656 = vpop.sfrf %2655
  %p2657 = scmp.eq.s32.totalorder %s2656, 0
  %p2658 = pneg %p2657
  %2660 = shalt.err (%p2658)
  %s2661 = scalar_lea.sflag [#allocation2], 1
  %2662 = vsyncmov %s2661
  %s2663 = vpop.sfrf %2662
  %p2664 = scmp.eq.s32.totalorder %s2663, 0
  %p2665 = pneg %p2664
  %2667 = shalt.err (%p2665)

</llo_original>
